<compile_context>
chip_gen: v7x
topology: tpu7x:2x2x1
jax: 0.10.0
libtpu: 0.0.40
codegen_flags: <defaults>
</compile_context>

<pallas_src>
import math
import functools

import numpy as np
import jax
import jax.numpy as jnp
from jax.experimental import pallas as pl
from jax.experimental.pallas import tpu as pltpu


def _layer_norm(y, w, b):
    """LayerNorm with independent mean / E[y^2] reductions (shorter dep chain)."""
    mu = jnp.mean(y, axis=-1, keepdims=True)
    ms = jnp.mean(y * y, axis=-1, keepdims=True)
    var = ms - mu * mu
    return (y - mu) * jax.lax.rsqrt(var + 1e-5) * w + b


def _encoder_layer(z, wqkv, wo, w1, w2, vec_d, b1, maskf, negbias, *, nhead):
    """One post-norm nn.TransformerEncoderLayer (ReLU FFN, dropout=identity).

    z       : (R, D) f32 activations, R = B*S, b-major row order.
    wqkv    : (D, 3D) bf16 fused q|k|v projection (pre-transposed: x @ W)
    wo      : (D, D)  bf16 out projection (pre-transposed)
    w1, w2  : (D, FF), (FF, D) bf16 feed-forward (pre-transposed)
    vec_d   : (9, D) f32 rows = [bq, bk, bv, bo, ln1_w, ln1_b, b2, ln2_w, ln2_b]
    b1      : (1, FF) f32
    maskf   : (R, R) f32 0/1 attention mask (1 = may attend)
    negbias : (R, R) f32 additive bias: 0 on-block, -1e30 off-block
    """
    R, D = z.shape
    H = nhead
    dh = D // H
    scale = 1.0 / math.sqrt(dh)

    # Fused QKV projection over ALL rows at once (bf16 operands, f32 accum).
    qkv = jnp.dot(z.astype(jnp.bfloat16), wqkv,
                  preferred_element_type=jnp.float32)                  # (R, 3D)
    q = ((qkv[:, 0:D] + vec_d[0:1, :]) * scale).astype(jnp.bfloat16)
    k = (qkv[:, D:2 * D] + vec_d[1:2, :]).astype(jnp.bfloat16)
    v = (qkv[:, 2 * D:3 * D] + vec_d[2:3, :]).astype(jnp.bfloat16)

    # Masked block-diagonal attention: one (R, R) score matrix per head.
    dn_nt = (((1,), (1,)), ((), ()))                 # contract last dims: q.k^T
    heads = []
    for h in range(H):                               # static head unroll (H=4)
        sl = slice(h * dh, (h + 1) * dh)
        qh, kh, vh = q[:, sl], k[:, sl], v[:, sl]    # hoisted lane slices
        sc = jax.lax.dot_general(qh, kh, dn_nt,
                                 preferred_element_type=jnp.float32)   # (R, R)
        sc = sc + negbias
        sc = sc - jnp.max(sc, axis=-1, keepdims=True)
        p = jnp.exp(sc) * maskf
        p = p * pl.reciprocal(jnp.sum(p, axis=-1, keepdims=True), approx=True)
        heads.append(jnp.dot(p.astype(jnp.bfloat16), vh,
                             preferred_element_type=jnp.float32))      # (R, dh)
    attn = jnp.concatenate(heads, axis=-1)                             # (R, D)
    attn = jnp.dot(attn.astype(jnp.bfloat16), wo,
                   preferred_element_type=jnp.float32) + vec_d[3:4, :]

    # Residual + LayerNorm 1 (post-norm).
    y = _layer_norm(z + attn, vec_d[4:5, :], vec_d[5:6, :])

    # Feed-forward (ReLU) + residual + LayerNorm 2.
    h1 = jnp.dot(y.astype(jnp.bfloat16), w1,
                 preferred_element_type=jnp.float32) + b1
    h1 = jnp.maximum(h1, 0.0)
    ff = jnp.dot(h1.astype(jnp.bfloat16), w2,
                 preferred_element_type=jnp.float32) + vec_d[6:7, :]
    return _layer_norm(y + ff, vec_d[7:8, :], vec_d[8:9, :])


def common_transformer_kernel(x_ref, masks_ref, wqkv_ref, wo_ref, w1_ref,
                              w2_ref, vecd_ref, b1_ref, o_ref, *,
                              nhead, num_layers):
    """Full CommonTransformer.forward on one (B*S, D) b-major activation slab."""
    z = x_ref[...].astype(jnp.float32)               # (R, D)

    def run_stack(zz, maskf):
        negbias = (maskf - 1.0) * 1e30               # 0 on-block, -1e30 off
        for l in range(num_layers):                  # static layer unroll
            zz = _encoder_layer(zz, wqkv_ref[l], wo_ref[l], w1_ref[l],
                                w2_ref[l], vecd_ref[l], b1_ref[l],
                                maskf, negbias, nhead=nhead)
        return zz

    # permute(1,0,2) + transformer == attention restricted to rows with the
    # same batch index (contiguous S-row blocks) -> mask 0.
    z = run_stack(z, masks_ref[0])
    # permute(1,0,2) + transformer (shared weights) == attention restricted to
    # rows with the same sequence position (stride-S row sets) -> mask 1.
    z = run_stack(z, masks_ref[1])

    o_ref[...] = z.astype(o_ref.dtype)


def _make_masks(batch, seq):
    """(2, R, R) f32 masks: [0] same-batch blocks, [1] same-seq-position rows."""
    idx = np.arange(batch * seq)
    same_b = (idx[:, None] // seq) == (idx[None, :] // seq)
    same_s = (idx[:, None] % seq) == (idx[None, :] % seq)
    return jnp.asarray(np.stack([same_b, same_s]).astype(np.float32))


def common_transformer_forward(x, params, nhead):
    """x: (B, S, D) -> (B, S, D), matching CommonTransformer.forward."""
    B, S, D = x.shape
    L, _, FF = params["w1"].shape
    R = B * S

    kernel = functools.partial(common_transformer_kernel, nhead=nhead,
                               num_layers=L)
    vmem = lambda: pl.BlockSpec(memory_space=pltpu.MemorySpace.VMEM)

    out2d = pl.pallas_call(
        kernel,
        out_shape=jax.ShapeDtypeStruct((R, D), x.dtype),
        in_specs=[vmem() for _ in range(8)],         # gridless, whole arrays
        out_specs=vmem(),
    )(x.reshape(R, D), _make_masks(B, S), params["wqkv"], params["wo"],
      params["w1"], params["w2"], params["vec_d"], params["b1"])

    return out2d.reshape(B, S, D)


def init_params(key, L, D, FF):
    """Synthetic, deterministic weights in the packed layout the kernel expects."""
    std = 0.05
    ks = jax.random.split(key, 4)
    f32, bf16 = jnp.float32, jnp.bfloat16
    vec_d = jnp.zeros((L, 9, D), f32)
    vec_d = vec_d.at[:, 4, :].set(1.0)    # ln1 weight
    vec_d = vec_d.at[:, 7, :].set(1.0)    # ln2 weight
    return {
        "wqkv": (jax.random.normal(ks[0], (L, D, 3 * D), f32) * std).astype(bf16),
        "wo":   (jax.random.normal(ks[1], (L, D, D), f32) * std).astype(bf16),
        "w1":   (jax.random.normal(ks[2], (L, D, FF), f32) * std).astype(bf16),
        "w2":   (jax.random.normal(ks[3], (L, FF, D), f32) * std).astype(bf16),
        "vec_d": vec_d,                    # bq,bk,bv,bo,ln1w,ln1b,b2,ln2w,ln2b
        "b1":   jnp.zeros((L, 1, FF), f32),
    }


if __name__ == "__main__":
    # CommonTransformer(feature_dim_size=32, nhead=4, ff_hidden_size=64,
    #                   num_self_att_layers=2, num_nodes=8, dropout=...)
    # applied to x of shape (batch=2, num_nodes=8, feature_dim=32).
    B, S, D, H, FF, L = 2, 8, 32, 4, 64, 2

    key = jax.random.PRNGKey(0)
    kx, kp = jax.random.split(key)
    x = jax.random.normal(kx, (B, S, D), jnp.float32)
    params = init_params(kp, L, D, FF)

    fwd = jax.jit(functools.partial(common_transformer_forward, nhead=H))
    out = jax.block_until_ready(fwd(x, params))

    assert out.shape == (B, S, D)
    assert bool(jnp.all(jnp.isfinite(out)))
    # TODO(synk): dropout layers are identity here (inference semantics only).
    print("KERNEL_OK")
</pallas_src>

<mosaic_0001>
module attributes {stable_mosaic.version = 11 : i64} {
  func.func @common_transformer_kernel(%arg0: memref<16x32xf32, #tpu.memory_space<vmem>>, %arg1: memref<2x16x16xf32, #tpu.memory_space<vmem>>, %arg2: memref<2x32x96xbf16, #tpu.memory_space<vmem>>, %arg3: memref<2x32x32xbf16, #tpu.memory_space<vmem>>, %arg4: memref<2x32x64xbf16, #tpu.memory_space<vmem>>, %arg5: memref<2x64x32xbf16, #tpu.memory_space<vmem>>, %arg6: memref<2x9x32xf32, #tpu.memory_space<vmem>>, %arg7: memref<2x1x64xf32, #tpu.memory_space<vmem>>, %arg8: memref<16x32xf32, #tpu.memory_space<vmem>>) attributes {dimension_semantics = [], scalar_prefetch = 0 : i64, scratch_operands = 0 : i64, tpu.core_type = #tpu.core_type<tc>} {
    %c0 = arith.constant 0 : index
    %c0_0 = arith.constant 0 : index
    %0 = vector.load %arg0[%c0, %c0_0] : memref<16x32xf32, #tpu.memory_space<vmem>>, vector<16x32xf32>
    %c0_1 = arith.constant 0 : index
    %c0_2 = arith.constant 0 : index
    %c0_3 = arith.constant 0 : index
    %1 = vector.load %arg1[%c0_1, %c0_2, %c0_3] : memref<2x16x16xf32, #tpu.memory_space<vmem>>, vector<1x16x16xf32>
    %2 = vector.shape_cast %1 : vector<1x16x16xf32> to vector<16x16xf32>
    %cst = arith.constant 1.000000e+00 : f32
    %3 = vector.broadcast %cst : f32 to vector<16x16xf32>
    %4 = arith.subf %2, %3 : vector<16x16xf32>
    %cst_4 = arith.constant 1.000000e+30 : f32
    %5 = vector.broadcast %cst_4 : f32 to vector<16x16xf32>
    %6 = arith.mulf %4, %5 : vector<16x16xf32>
    %c0_5 = arith.constant 0 : index
    %c0_6 = arith.constant 0 : index
    %c0_7 = arith.constant 0 : index
    %7 = vector.load %arg2[%c0_5, %c0_6, %c0_7] : memref<2x32x96xbf16, #tpu.memory_space<vmem>>, vector<1x32x96xbf16>
    %8 = vector.shape_cast %7 : vector<1x32x96xbf16> to vector<32x96xbf16>
    %c0_8 = arith.constant 0 : index
    %c0_9 = arith.constant 0 : index
    %c0_10 = arith.constant 0 : index
    %9 = vector.load %arg3[%c0_8, %c0_9, %c0_10] : memref<2x32x32xbf16, #tpu.memory_space<vmem>>, vector<1x32x32xbf16>
    %10 = vector.shape_cast %9 : vector<1x32x32xbf16> to vector<32x32xbf16>
    %c0_11 = arith.constant 0 : index
    %c0_12 = arith.constant 0 : index
    %c0_13 = arith.constant 0 : index
    %11 = vector.load %arg4[%c0_11, %c0_12, %c0_13] : memref<2x32x64xbf16, #tpu.memory_space<vmem>>, vector<1x32x64xbf16>
    %12 = vector.shape_cast %11 : vector<1x32x64xbf16> to vector<32x64xbf16>
    %c0_14 = arith.constant 0 : index
    %c0_15 = arith.constant 0 : index
    %c0_16 = arith.constant 0 : index
    %13 = vector.load %arg5[%c0_14, %c0_15, %c0_16] : memref<2x64x32xbf16, #tpu.memory_space<vmem>>, vector<1x64x32xbf16>
    %14 = vector.shape_cast %13 : vector<1x64x32xbf16> to vector<64x32xbf16>
    %c0_17 = arith.constant 0 : index
    %c0_18 = arith.constant 0 : index
    %c0_19 = arith.constant 0 : index
    %15 = vector.load %arg6[%c0_17, %c0_18, %c0_19] : memref<2x9x32xf32, #tpu.memory_space<vmem>>, vector<1x9x32xf32>
    %16 = vector.shape_cast %15 : vector<1x9x32xf32> to vector<9x32xf32>
    %c0_20 = arith.constant 0 : index
    %c0_21 = arith.constant 0 : index
    %c0_22 = arith.constant 0 : index
    %17 = vector.load %arg7[%c0_20, %c0_21, %c0_22] : memref<2x1x64xf32, #tpu.memory_space<vmem>>, vector<1x1x64xf32>
    %18 = vector.shape_cast %17 : vector<1x1x64xf32> to vector<1x64xf32>
    %19 = arith.truncf %0 : vector<16x32xf32> to vector<16x32xbf16>
    %cst_23 = arith.constant dense<0.000000e+00> : vector<16x96xf32>
    %20 = tpu.matmul %19, %8, %cst_23 {dimension_numbers = #tpu.dot_dimension_numbers<[1], [0], [0], [1], [0, 0, 1, 1], [], []>} : vector<16x32xbf16>, vector<32x96xbf16>, vector<16x96xf32> -> vector<16x96xf32>
    %21 = vector.extract_strided_slice %20 {offsets = [0, 0], sizes = [16, 32], strides = [1, 1]} : vector<16x96xf32> to vector<16x32xf32>
    %22 = vector.extract_strided_slice %16 {offsets = [0, 0], sizes = [1, 32], strides = [1, 1]} : vector<9x32xf32> to vector<1x32xf32>
    %23 = vector.broadcast %22 : vector<1x32xf32> to vector<16x32xf32>
    %24 = arith.addf %21, %23 : vector<16x32xf32>
    %cst_24 = arith.constant 0.353553385 : f32
    %25 = vector.broadcast %cst_24 : f32 to vector<16x32xf32>
    %26 = arith.mulf %24, %25 : vector<16x32xf32>
    %27 = arith.truncf %26 : vector<16x32xf32> to vector<16x32xbf16>
    %28 = vector.extract_strided_slice %20 {offsets = [0, 32], sizes = [16, 32], strides = [1, 1]} : vector<16x96xf32> to vector<16x32xf32>
    %29 = vector.extract_strided_slice %16 {offsets = [1, 0], sizes = [1, 32], strides = [1, 1]} : vector<9x32xf32> to vector<1x32xf32>
    %30 = vector.broadcast %29 : vector<1x32xf32> to vector<16x32xf32>
    %31 = arith.addf %28, %30 : vector<16x32xf32>
    %32 = arith.truncf %31 : vector<16x32xf32> to vector<16x32xbf16>
    %33 = vector.extract_strided_slice %20 {offsets = [0, 64], sizes = [16, 32], strides = [1, 1]} : vector<16x96xf32> to vector<16x32xf32>
    %34 = vector.extract_strided_slice %16 {offsets = [2, 0], sizes = [1, 32], strides = [1, 1]} : vector<9x32xf32> to vector<1x32xf32>
    %35 = vector.broadcast %34 : vector<1x32xf32> to vector<16x32xf32>
    %36 = arith.addf %33, %35 : vector<16x32xf32>
    %37 = arith.truncf %36 : vector<16x32xf32> to vector<16x32xbf16>
    %38 = vector.extract_strided_slice %27 {offsets = [0, 0], sizes = [16, 8], strides = [1, 1]} : vector<16x32xbf16> to vector<16x8xbf16>
    %39 = vector.extract_strided_slice %32 {offsets = [0, 0], sizes = [16, 8], strides = [1, 1]} : vector<16x32xbf16> to vector<16x8xbf16>
    %40 = vector.extract_strided_slice %37 {offsets = [0, 0], sizes = [16, 8], strides = [1, 1]} : vector<16x32xbf16> to vector<16x8xbf16>
    %cst_25 = arith.constant dense<0.000000e+00> : vector<16x16xf32>
    %41 = tpu.matmul %38, %39, %cst_25 {dimension_numbers = #tpu.dot_dimension_numbers<[1], [1], [0], [0], [0, 0, 1, 0], [], []>} : vector<16x8xbf16>, vector<16x8xbf16>, vector<16x16xf32> -> vector<16x16xf32>
    %42 = arith.addf %41, %6 : vector<16x16xf32>
    %cst_26 = arith.constant dense<0xFF800000> : vector<16xf32>
    %43 = vector.multi_reduction <maximumf>, %42, %cst_26 [1] : vector<16x16xf32> to vector<16xf32>
    %44 = vector.shape_cast %43 : vector<16xf32> to vector<16x1xf32>
    %45 = vector.broadcast %44 : vector<16x1xf32> to vector<16x16xf32>
    %46 = arith.subf %42, %45 : vector<16x16xf32>
    %47 = math.exp %46 : vector<16x16xf32>
    %48 = arith.mulf %47, %2 : vector<16x16xf32>
    %cst_27 = arith.constant dense<0.000000e+00> : vector<16xf32>
    %49 = vector.multi_reduction <add>, %48, %cst_27 [1] : vector<16x16xf32> to vector<16xf32>
    %50 = vector.shape_cast %49 : vector<16xf32> to vector<16x1xf32>
    %51 = tpu.reciprocal %50 {approx = true} : vector<16x1xf32> -> vector<16x1xf32>
    %52 = vector.broadcast %51 : vector<16x1xf32> to vector<16x16xf32>
    %53 = arith.mulf %48, %52 : vector<16x16xf32>
    %54 = arith.truncf %53 : vector<16x16xf32> to vector<16x16xbf16>
    %cst_28 = arith.constant dense<0.000000e+00> : vector<16x8xf32>
    %55 = tpu.matmul %54, %40, %cst_28 {dimension_numbers = #tpu.dot_dimension_numbers<[1], [0], [0], [1], [0, 0, 1, 1], [], []>} : vector<16x16xbf16>, vector<16x8xbf16>, vector<16x8xf32> -> vector<16x8xf32>
    %56 = vector.extract_strided_slice %27 {offsets = [0, 8], sizes = [16, 8], strides = [1, 1]} : vector<16x32xbf16> to vector<16x8xbf16>
    %57 = vector.extract_strided_slice %32 {offsets = [0, 8], sizes = [16, 8], strides = [1, 1]} : vector<16x32xbf16> to vector<16x8xbf16>
    %58 = vector.extract_strided_slice %37 {offsets = [0, 8], sizes = [16, 8], strides = [1, 1]} : vector<16x32xbf16> to vector<16x8xbf16>
    %cst_29 = arith.constant dense<0.000000e+00> : vector<16x16xf32>
    %59 = tpu.matmul %56, %57, %cst_29 {dimension_numbers = #tpu.dot_dimension_numbers<[1], [1], [0], [0], [0, 0, 1, 0], [], []>} : vector<16x8xbf16>, vector<16x8xbf16>, vector<16x16xf32> -> vector<16x16xf32>
    %60 = arith.addf %59, %6 : vector<16x16xf32>
    %cst_30 = arith.constant dense<0xFF800000> : vector<16xf32>
    %61 = vector.multi_reduction <maximumf>, %60, %cst_30 [1] : vector<16x16xf32> to vector<16xf32>
    %62 = vector.shape_cast %61 : vector<16xf32> to vector<16x1xf32>
    %63 = vector.broadcast %62 : vector<16x1xf32> to vector<16x16xf32>
    %64 = arith.subf %60, %63 : vector<16x16xf32>
    %65 = math.exp %64 : vector<16x16xf32>
    %66 = arith.mulf %65, %2 : vector<16x16xf32>
    %cst_31 = arith.constant dense<0.000000e+00> : vector<16xf32>
    %67 = vector.multi_reduction <add>, %66, %cst_31 [1] : vector<16x16xf32> to vector<16xf32>
    %68 = vector.shape_cast %67 : vector<16xf32> to vector<16x1xf32>
    %69 = tpu.reciprocal %68 {approx = true} : vector<16x1xf32> -> vector<16x1xf32>
    %70 = vector.broadcast %69 : vector<16x1xf32> to vector<16x16xf32>
    %71 = arith.mulf %66, %70 : vector<16x16xf32>
    %72 = arith.truncf %71 : vector<16x16xf32> to vector<16x16xbf16>
    %cst_32 = arith.constant dense<0.000000e+00> : vector<16x8xf32>
    %73 = tpu.matmul %72, %58, %cst_32 {dimension_numbers = #tpu.dot_dimension_numbers<[1], [0], [0], [1], [0, 0, 1, 1], [], []>} : vector<16x16xbf16>, vector<16x8xbf16>, vector<16x8xf32> -> vector<16x8xf32>
    %74 = vector.extract_strided_slice %27 {offsets = [0, 16], sizes = [16, 8], strides = [1, 1]} : vector<16x32xbf16> to vector<16x8xbf16>
    %75 = vector.extract_strided_slice %32 {offsets = [0, 16], sizes = [16, 8], strides = [1, 1]} : vector<16x32xbf16> to vector<16x8xbf16>
    %76 = vector.extract_strided_slice %37 {offsets = [0, 16], sizes = [16, 8], strides = [1, 1]} : vector<16x32xbf16> to vector<16x8xbf16>
    %cst_33 = arith.constant dense<0.000000e+00> : vector<16x16xf32>
    %77 = tpu.matmul %74, %75, %cst_33 {dimension_numbers = #tpu.dot_dimension_numbers<[1], [1], [0], [0], [0, 0, 1, 0], [], []>} : vector<16x8xbf16>, vector<16x8xbf16>, vector<16x16xf32> -> vector<16x16xf32>
    %78 = arith.addf %77, %6 : vector<16x16xf32>
    %cst_34 = arith.constant dense<0xFF800000> : vector<16xf32>
    %79 = vector.multi_reduction <maximumf>, %78, %cst_34 [1] : vector<16x16xf32> to vector<16xf32>
    %80 = vector.shape_cast %79 : vector<16xf32> to vector<16x1xf32>
    %81 = vector.broadcast %80 : vector<16x1xf32> to vector<16x16xf32>
    %82 = arith.subf %78, %81 : vector<16x16xf32>
    %83 = math.exp %82 : vector<16x16xf32>
    %84 = arith.mulf %83, %2 : vector<16x16xf32>
    %cst_35 = arith.constant dense<0.000000e+00> : vector<16xf32>
    %85 = vector.multi_reduction <add>, %84, %cst_35 [1] : vector<16x16xf32> to vector<16xf32>
    %86 = vector.shape_cast %85 : vector<16xf32> to vector<16x1xf32>
    %87 = tpu.reciprocal %86 {approx = true} : vector<16x1xf32> -> vector<16x1xf32>
    %88 = vector.broadcast %87 : vector<16x1xf32> to vector<16x16xf32>
    %89 = arith.mulf %84, %88 : vector<16x16xf32>
    %90 = arith.truncf %89 : vector<16x16xf32> to vector<16x16xbf16>
    %cst_36 = arith.constant dense<0.000000e+00> : vector<16x8xf32>
    %91 = tpu.matmul %90, %76, %cst_36 {dimension_numbers = #tpu.dot_dimension_numbers<[1], [0], [0], [1], [0, 0, 1, 1], [], []>} : vector<16x16xbf16>, vector<16x8xbf16>, vector<16x8xf32> -> vector<16x8xf32>
    %92 = vector.extract_strided_slice %27 {offsets = [0, 24], sizes = [16, 8], strides = [1, 1]} : vector<16x32xbf16> to vector<16x8xbf16>
    %93 = vector.extract_strided_slice %32 {offsets = [0, 24], sizes = [16, 8], strides = [1, 1]} : vector<16x32xbf16> to vector<16x8xbf16>
    %94 = vector.extract_strided_slice %37 {offsets = [0, 24], sizes = [16, 8], strides = [1, 1]} : vector<16x32xbf16> to vector<16x8xbf16>
    %cst_37 = arith.constant dense<0.000000e+00> : vector<16x16xf32>
    %95 = tpu.matmul %92, %93, %cst_37 {dimension_numbers = #tpu.dot_dimension_numbers<[1], [1], [0], [0], [0, 0, 1, 0], [], []>} : vector<16x8xbf16>, vector<16x8xbf16>, vector<16x16xf32> -> vector<16x16xf32>
    %96 = arith.addf %95, %6 : vector<16x16xf32>
    %cst_38 = arith.constant dense<0xFF800000> : vector<16xf32>
    %97 = vector.multi_reduction <maximumf>, %96, %cst_38 [1] : vector<16x16xf32> to vector<16xf32>
    %98 = vector.shape_cast %97 : vector<16xf32> to vector<16x1xf32>
    %99 = vector.broadcast %98 : vector<16x1xf32> to vector<16x16xf32>
    %100 = arith.subf %96, %99 : vector<16x16xf32>
    %101 = math.exp %100 : vector<16x16xf32>
    %102 = arith.mulf %101, %2 : vector<16x16xf32>
    %cst_39 = arith.constant dense<0.000000e+00> : vector<16xf32>
    %103 = vector.multi_reduction <add>, %102, %cst_39 [1] : vector<16x16xf32> to vector<16xf32>
    %104 = vector.shape_cast %103 : vector<16xf32> to vector<16x1xf32>
    %105 = tpu.reciprocal %104 {approx = true} : vector<16x1xf32> -> vector<16x1xf32>
    %106 = vector.broadcast %105 : vector<16x1xf32> to vector<16x16xf32>
    %107 = arith.mulf %102, %106 : vector<16x16xf32>
    %108 = arith.truncf %107 : vector<16x16xf32> to vector<16x16xbf16>
    %cst_40 = arith.constant dense<0.000000e+00> : vector<16x8xf32>
    %109 = tpu.matmul %108, %94, %cst_40 {dimension_numbers = #tpu.dot_dimension_numbers<[1], [0], [0], [1], [0, 0, 1, 1], [], []>} : vector<16x16xbf16>, vector<16x8xbf16>, vector<16x8xf32> -> vector<16x8xf32>
    %110 = tpu.concatenate %55, %73, %91, %109 in 1 : vector<16x8xf32>, vector<16x8xf32>, vector<16x8xf32>, vector<16x8xf32> -> vector<16x32xf32>
    %111 = arith.truncf %110 : vector<16x32xf32> to vector<16x32xbf16>
    %cst_41 = arith.constant dense<0.000000e+00> : vector<16x32xf32>
    %112 = tpu.matmul %111, %10, %cst_41 {dimension_numbers = #tpu.dot_dimension_numbers<[1], [0], [0], [1], [0, 0, 1, 1], [], []>} : vector<16x32xbf16>, vector<32x32xbf16>, vector<16x32xf32> -> vector<16x32xf32>
    %113 = vector.extract_strided_slice %16 {offsets = [3, 0], sizes = [1, 32], strides = [1, 1]} : vector<9x32xf32> to vector<1x32xf32>
    %114 = vector.broadcast %113 : vector<1x32xf32> to vector<16x32xf32>
    %115 = arith.addf %112, %114 : vector<16x32xf32>
    %116 = arith.addf %0, %115 : vector<16x32xf32>
    %117 = vector.extract_strided_slice %16 {offsets = [4, 0], sizes = [1, 32], strides = [1, 1]} : vector<9x32xf32> to vector<1x32xf32>
    %118 = vector.extract_strided_slice %16 {offsets = [5, 0], sizes = [1, 32], strides = [1, 1]} : vector<9x32xf32> to vector<1x32xf32>
    %cst_42 = arith.constant dense<0.000000e+00> : vector<16xf32>
    %119 = vector.multi_reduction <add>, %116, %cst_42 [1] : vector<16x32xf32> to vector<16xf32>
    %120 = vector.shape_cast %119 : vector<16xf32> to vector<16x1xf32>
    %cst_43 = arith.constant 3.200000e+01 : f32
    %121 = vector.broadcast %cst_43 : f32 to vector<16x1xf32>
    %122 = arith.divf %120, %121 : vector<16x1xf32>
    %123 = arith.mulf %116, %116 : vector<16x32xf32>
    %cst_44 = arith.constant dense<0.000000e+00> : vector<16xf32>
    %124 = vector.multi_reduction <add>, %123, %cst_44 [1] : vector<16x32xf32> to vector<16xf32>
    %125 = vector.shape_cast %124 : vector<16xf32> to vector<16x1xf32>
    %cst_45 = arith.constant 3.200000e+01 : f32
    %126 = vector.broadcast %cst_45 : f32 to vector<16x1xf32>
    %127 = arith.divf %125, %126 : vector<16x1xf32>
    %128 = arith.mulf %122, %122 : vector<16x1xf32>
    %129 = arith.subf %127, %128 : vector<16x1xf32>
    %130 = vector.broadcast %122 : vector<16x1xf32> to vector<16x32xf32>
    %131 = arith.subf %116, %130 : vector<16x32xf32>
    %cst_46 = arith.constant 9.99999974E-6 : f32
    %132 = vector.broadcast %cst_46 : f32 to vector<16x1xf32>
    %133 = arith.addf %129, %132 : vector<16x1xf32>
    %134 = math.rsqrt %133 : vector<16x1xf32>
    %135 = vector.broadcast %134 : vector<16x1xf32> to vector<16x32xf32>
    %136 = arith.mulf %131, %135 : vector<16x32xf32>
    %137 = vector.broadcast %117 : vector<1x32xf32> to vector<16x32xf32>
    %138 = arith.mulf %136, %137 : vector<16x32xf32>
    %139 = vector.broadcast %118 : vector<1x32xf32> to vector<16x32xf32>
    %140 = arith.addf %138, %139 : vector<16x32xf32>
    %141 = arith.truncf %140 : vector<16x32xf32> to vector<16x32xbf16>
    %cst_47 = arith.constant dense<0.000000e+00> : vector<16x64xf32>
    %142 = tpu.matmul %141, %12, %cst_47 {dimension_numbers = #tpu.dot_dimension_numbers<[1], [0], [0], [1], [0, 0, 1, 1], [], []>} : vector<16x32xbf16>, vector<32x64xbf16>, vector<16x64xf32> -> vector<16x64xf32>
    %143 = vector.broadcast %18 : vector<1x64xf32> to vector<16x64xf32>
    %144 = arith.addf %142, %143 : vector<16x64xf32>
    %cst_48 = arith.constant 0.000000e+00 : f32
    %145 = vector.broadcast %cst_48 : f32 to vector<16x64xf32>
    %146 = arith.maximumf %144, %145 : vector<16x64xf32>
    %147 = arith.truncf %146 : vector<16x64xf32> to vector<16x64xbf16>
    %cst_49 = arith.constant dense<0.000000e+00> : vector<16x32xf32>
    %148 = tpu.matmul %147, %14, %cst_49 {dimension_numbers = #tpu.dot_dimension_numbers<[1], [0], [0], [1], [0, 0, 1, 1], [], []>} : vector<16x64xbf16>, vector<64x32xbf16>, vector<16x32xf32> -> vector<16x32xf32>
    %149 = vector.extract_strided_slice %16 {offsets = [6, 0], sizes = [1, 32], strides = [1, 1]} : vector<9x32xf32> to vector<1x32xf32>
    %150 = vector.broadcast %149 : vector<1x32xf32> to vector<16x32xf32>
    %151 = arith.addf %148, %150 : vector<16x32xf32>
    %152 = arith.addf %140, %151 : vector<16x32xf32>
    %153 = vector.extract_strided_slice %16 {offsets = [7, 0], sizes = [1, 32], strides = [1, 1]} : vector<9x32xf32> to vector<1x32xf32>
    %154 = vector.extract_strided_slice %16 {offsets = [8, 0], sizes = [1, 32], strides = [1, 1]} : vector<9x32xf32> to vector<1x32xf32>
    %cst_50 = arith.constant dense<0.000000e+00> : vector<16xf32>
    %155 = vector.multi_reduction <add>, %152, %cst_50 [1] : vector<16x32xf32> to vector<16xf32>
    %156 = vector.shape_cast %155 : vector<16xf32> to vector<16x1xf32>
    %cst_51 = arith.constant 3.200000e+01 : f32
    %157 = vector.broadcast %cst_51 : f32 to vector<16x1xf32>
    %158 = arith.divf %156, %157 : vector<16x1xf32>
    %159 = arith.mulf %152, %152 : vector<16x32xf32>
    %cst_52 = arith.constant dense<0.000000e+00> : vector<16xf32>
    %160 = vector.multi_reduction <add>, %159, %cst_52 [1] : vector<16x32xf32> to vector<16xf32>
    %161 = vector.shape_cast %160 : vector<16xf32> to vector<16x1xf32>
    %cst_53 = arith.constant 3.200000e+01 : f32
    %162 = vector.broadcast %cst_53 : f32 to vector<16x1xf32>
    %163 = arith.divf %161, %162 : vector<16x1xf32>
    %164 = arith.mulf %158, %158 : vector<16x1xf32>
    %165 = arith.subf %163, %164 : vector<16x1xf32>
    %166 = vector.broadcast %158 : vector<16x1xf32> to vector<16x32xf32>
    %167 = arith.subf %152, %166 : vector<16x32xf32>
    %cst_54 = arith.constant 9.99999974E-6 : f32
    %168 = vector.broadcast %cst_54 : f32 to vector<16x1xf32>
    %169 = arith.addf %165, %168 : vector<16x1xf32>
    %170 = math.rsqrt %169 : vector<16x1xf32>
    %171 = vector.broadcast %170 : vector<16x1xf32> to vector<16x32xf32>
    %172 = arith.mulf %167, %171 : vector<16x32xf32>
    %173 = vector.broadcast %153 : vector<1x32xf32> to vector<16x32xf32>
    %174 = arith.mulf %172, %173 : vector<16x32xf32>
    %175 = vector.broadcast %154 : vector<1x32xf32> to vector<16x32xf32>
    %176 = arith.addf %174, %175 : vector<16x32xf32>
    %c1 = arith.constant 1 : index
    %c0_55 = arith.constant 0 : index
    %c0_56 = arith.constant 0 : index
    %177 = vector.load %arg2[%c1, %c0_55, %c0_56] : memref<2x32x96xbf16, #tpu.memory_space<vmem>>, vector<1x32x96xbf16>
    %178 = vector.shape_cast %177 : vector<1x32x96xbf16> to vector<32x96xbf16>
    %c1_57 = arith.constant 1 : index
    %c0_58 = arith.constant 0 : index
    %c0_59 = arith.constant 0 : index
    %179 = vector.load %arg3[%c1_57, %c0_58, %c0_59] : memref<2x32x32xbf16, #tpu.memory_space<vmem>>, vector<1x32x32xbf16>
    %180 = vector.shape_cast %179 : vector<1x32x32xbf16> to vector<32x32xbf16>
    %c1_60 = arith.constant 1 : index
    %c0_61 = arith.constant 0 : index
    %c0_62 = arith.constant 0 : index
    %181 = vector.load %arg4[%c1_60, %c0_61, %c0_62] : memref<2x32x64xbf16, #tpu.memory_space<vmem>>, vector<1x32x64xbf16>
    %182 = vector.shape_cast %181 : vector<1x32x64xbf16> to vector<32x64xbf16>
    %c1_63 = arith.constant 1 : index
    %c0_64 = arith.constant 0 : index
    %c0_65 = arith.constant 0 : index
    %183 = vector.load %arg5[%c1_63, %c0_64, %c0_65] : memref<2x64x32xbf16, #tpu.memory_space<vmem>>, vector<1x64x32xbf16>
    %184 = vector.shape_cast %183 : vector<1x64x32xbf16> to vector<64x32xbf16>
    %c1_66 = arith.constant 1 : index
    %c0_67 = arith.constant 0 : index
    %c0_68 = arith.constant 0 : index
    %185 = vector.load %arg6[%c1_66, %c0_67, %c0_68] : memref<2x9x32xf32, #tpu.memory_space<vmem>>, vector<1x9x32xf32>
    %186 = vector.shape_cast %185 : vector<1x9x32xf32> to vector<9x32xf32>
    %c1_69 = arith.constant 1 : index
    %c0_70 = arith.constant 0 : index
    %c0_71 = arith.constant 0 : index
    %187 = vector.load %arg7[%c1_69, %c0_70, %c0_71] : memref<2x1x64xf32, #tpu.memory_space<vmem>>, vector<1x1x64xf32>
    %188 = vector.shape_cast %187 : vector<1x1x64xf32> to vector<1x64xf32>
    %189 = arith.truncf %176 : vector<16x32xf32> to vector<16x32xbf16>
    %cst_72 = arith.constant dense<0.000000e+00> : vector<16x96xf32>
    %190 = tpu.matmul %189, %178, %cst_72 {dimension_numbers = #tpu.dot_dimension_numbers<[1], [0], [0], [1], [0, 0, 1, 1], [], []>} : vector<16x32xbf16>, vector<32x96xbf16>, vector<16x96xf32> -> vector<16x96xf32>
    %191 = vector.extract_strided_slice %190 {offsets = [0, 0], sizes = [16, 32], strides = [1, 1]} : vector<16x96xf32> to vector<16x32xf32>
    %192 = vector.extract_strided_slice %186 {offsets = [0, 0], sizes = [1, 32], strides = [1, 1]} : vector<9x32xf32> to vector<1x32xf32>
    %193 = vector.broadcast %192 : vector<1x32xf32> to vector<16x32xf32>
    %194 = arith.addf %191, %193 : vector<16x32xf32>
    %cst_73 = arith.constant 0.353553385 : f32
    %195 = vector.broadcast %cst_73 : f32 to vector<16x32xf32>
    %196 = arith.mulf %194, %195 : vector<16x32xf32>
    %197 = arith.truncf %196 : vector<16x32xf32> to vector<16x32xbf16>
    %198 = vector.extract_strided_slice %190 {offsets = [0, 32], sizes = [16, 32], strides = [1, 1]} : vector<16x96xf32> to vector<16x32xf32>
    %199 = vector.extract_strided_slice %186 {offsets = [1, 0], sizes = [1, 32], strides = [1, 1]} : vector<9x32xf32> to vector<1x32xf32>
    %200 = vector.broadcast %199 : vector<1x32xf32> to vector<16x32xf32>
    %201 = arith.addf %198, %200 : vector<16x32xf32>
    %202 = arith.truncf %201 : vector<16x32xf32> to vector<16x32xbf16>
    %203 = vector.extract_strided_slice %190 {offsets = [0, 64], sizes = [16, 32], strides = [1, 1]} : vector<16x96xf32> to vector<16x32xf32>
    %204 = vector.extract_strided_slice %186 {offsets = [2, 0], sizes = [1, 32], strides = [1, 1]} : vector<9x32xf32> to vector<1x32xf32>
    %205 = vector.broadcast %204 : vector<1x32xf32> to vector<16x32xf32>
    %206 = arith.addf %203, %205 : vector<16x32xf32>
    %207 = arith.truncf %206 : vector<16x32xf32> to vector<16x32xbf16>
    %208 = vector.extract_strided_slice %197 {offsets = [0, 0], sizes = [16, 8], strides = [1, 1]} : vector<16x32xbf16> to vector<16x8xbf16>
    %209 = vector.extract_strided_slice %202 {offsets = [0, 0], sizes = [16, 8], strides = [1, 1]} : vector<16x32xbf16> to vector<16x8xbf16>
    %210 = vector.extract_strided_slice %207 {offsets = [0, 0], sizes = [16, 8], strides = [1, 1]} : vector<16x32xbf16> to vector<16x8xbf16>
    %cst_74 = arith.constant dense<0.000000e+00> : vector<16x16xf32>
    %211 = tpu.matmul %208, %209, %cst_74 {dimension_numbers = #tpu.dot_dimension_numbers<[1], [1], [0], [0], [0, 0, 1, 0], [], []>} : vector<16x8xbf16>, vector<16x8xbf16>, vector<16x16xf32> -> vector<16x16xf32>
    %212 = arith.addf %211, %6 : vector<16x16xf32>
    %cst_75 = arith.constant dense<0xFF800000> : vector<16xf32>
    %213 = vector.multi_reduction <maximumf>, %212, %cst_75 [1] : vector<16x16xf32> to vector<16xf32>
    %214 = vector.shape_cast %213 : vector<16xf32> to vector<16x1xf32>
    %215 = vector.broadcast %214 : vector<16x1xf32> to vector<16x16xf32>
    %216 = arith.subf %212, %215 : vector<16x16xf32>
    %217 = math.exp %216 : vector<16x16xf32>
    %218 = arith.mulf %217, %2 : vector<16x16xf32>
    %cst_76 = arith.constant dense<0.000000e+00> : vector<16xf32>
    %219 = vector.multi_reduction <add>, %218, %cst_76 [1] : vector<16x16xf32> to vector<16xf32>
    %220 = vector.shape_cast %219 : vector<16xf32> to vector<16x1xf32>
    %221 = tpu.reciprocal %220 {approx = true} : vector<16x1xf32> -> vector<16x1xf32>
    %222 = vector.broadcast %221 : vector<16x1xf32> to vector<16x16xf32>
    %223 = arith.mulf %218, %222 : vector<16x16xf32>
    %224 = arith.truncf %223 : vector<16x16xf32> to vector<16x16xbf16>
    %cst_77 = arith.constant dense<0.000000e+00> : vector<16x8xf32>
    %225 = tpu.matmul %224, %210, %cst_77 {dimension_numbers = #tpu.dot_dimension_numbers<[1], [0], [0], [1], [0, 0, 1, 1], [], []>} : vector<16x16xbf16>, vector<16x8xbf16>, vector<16x8xf32> -> vector<16x8xf32>
    %226 = vector.extract_strided_slice %197 {offsets = [0, 8], sizes = [16, 8], strides = [1, 1]} : vector<16x32xbf16> to vector<16x8xbf16>
    %227 = vector.extract_strided_slice %202 {offsets = [0, 8], sizes = [16, 8], strides = [1, 1]} : vector<16x32xbf16> to vector<16x8xbf16>
    %228 = vector.extract_strided_slice %207 {offsets = [0, 8], sizes = [16, 8], strides = [1, 1]} : vector<16x32xbf16> to vector<16x8xbf16>
    %cst_78 = arith.constant dense<0.000000e+00> : vector<16x16xf32>
    %229 = tpu.matmul %226, %227, %cst_78 {dimension_numbers = #tpu.dot_dimension_numbers<[1], [1], [0], [0], [0, 0, 1, 0], [], []>} : vector<16x8xbf16>, vector<16x8xbf16>, vector<16x16xf32> -> vector<16x16xf32>
    %230 = arith.addf %229, %6 : vector<16x16xf32>
    %cst_79 = arith.constant dense<0xFF800000> : vector<16xf32>
    %231 = vector.multi_reduction <maximumf>, %230, %cst_79 [1] : vector<16x16xf32> to vector<16xf32>
    %232 = vector.shape_cast %231 : vector<16xf32> to vector<16x1xf32>
    %233 = vector.broadcast %232 : vector<16x1xf32> to vector<16x16xf32>
    %234 = arith.subf %230, %233 : vector<16x16xf32>
    %235 = math.exp %234 : vector<16x16xf32>
    %236 = arith.mulf %235, %2 : vector<16x16xf32>
    %cst_80 = arith.constant dense<0.000000e+00> : vector<16xf32>
    %237 = vector.multi_reduction <add>, %236, %cst_80 [1] : vector<16x16xf32> to vector<16xf32>
    %238 = vector.shape_cast %237 : vector<16xf32> to vector<16x1xf32>
    %239 = tpu.reciprocal %238 {approx = true} : vector<16x1xf32> -> vector<16x1xf32>
    %240 = vector.broadcast %239 : vector<16x1xf32> to vector<16x16xf32>
    %241 = arith.mulf %236, %240 : vector<16x16xf32>
    %242 = arith.truncf %241 : vector<16x16xf32> to vector<16x16xbf16>
    %cst_81 = arith.constant dense<0.000000e+00> : vector<16x8xf32>
    %243 = tpu.matmul %242, %228, %cst_81 {dimension_numbers = #tpu.dot_dimension_numbers<[1], [0], [0], [1], [0, 0, 1, 1], [], []>} : vector<16x16xbf16>, vector<16x8xbf16>, vector<16x8xf32> -> vector<16x8xf32>
    %244 = vector.extract_strided_slice %197 {offsets = [0, 16], sizes = [16, 8], strides = [1, 1]} : vector<16x32xbf16> to vector<16x8xbf16>
    %245 = vector.extract_strided_slice %202 {offsets = [0, 16], sizes = [16, 8], strides = [1, 1]} : vector<16x32xbf16> to vector<16x8xbf16>
    %246 = vector.extract_strided_slice %207 {offsets = [0, 16], sizes = [16, 8], strides = [1, 1]} : vector<16x32xbf16> to vector<16x8xbf16>
    %cst_82 = arith.constant dense<0.000000e+00> : vector<16x16xf32>
    %247 = tpu.matmul %244, %245, %cst_82 {dimension_numbers = #tpu.dot_dimension_numbers<[1], [1], [0], [0], [0, 0, 1, 0], [], []>} : vector<16x8xbf16>, vector<16x8xbf16>, vector<16x16xf32> -> vector<16x16xf32>
    %248 = arith.addf %247, %6 : vector<16x16xf32>
    %cst_83 = arith.constant dense<0xFF800000> : vector<16xf32>
    %249 = vector.multi_reduction <maximumf>, %248, %cst_83 [1] : vector<16x16xf32> to vector<16xf32>
    %250 = vector.shape_cast %249 : vector<16xf32> to vector<16x1xf32>
    %251 = vector.broadcast %250 : vector<16x1xf32> to vector<16x16xf32>
    %252 = arith.subf %248, %251 : vector<16x16xf32>
    %253 = math.exp %252 : vector<16x16xf32>
    %254 = arith.mulf %253, %2 : vector<16x16xf32>
    %cst_84 = arith.constant dense<0.000000e+00> : vector<16xf32>
    %255 = vector.multi_reduction <add>, %254, %cst_84 [1] : vector<16x16xf32> to vector<16xf32>
    %256 = vector.shape_cast %255 : vector<16xf32> to vector<16x1xf32>
    %257 = tpu.reciprocal %256 {approx = true} : vector<16x1xf32> -> vector<16x1xf32>
    %258 = vector.broadcast %257 : vector<16x1xf32> to vector<16x16xf32>
    %259 = arith.mulf %254, %258 : vector<16x16xf32>
    %260 = arith.truncf %259 : vector<16x16xf32> to vector<16x16xbf16>
    %cst_85 = arith.constant dense<0.000000e+00> : vector<16x8xf32>
    %261 = tpu.matmul %260, %246, %cst_85 {dimension_numbers = #tpu.dot_dimension_numbers<[1], [0], [0], [1], [0, 0, 1, 1], [], []>} : vector<16x16xbf16>, vector<16x8xbf16>, vector<16x8xf32> -> vector<16x8xf32>
    %262 = vector.extract_strided_slice %197 {offsets = [0, 24], sizes = [16, 8], strides = [1, 1]} : vector<16x32xbf16> to vector<16x8xbf16>
    %263 = vector.extract_strided_slice %202 {offsets = [0, 24], sizes = [16, 8], strides = [1, 1]} : vector<16x32xbf16> to vector<16x8xbf16>
    %264 = vector.extract_strided_slice %207 {offsets = [0, 24], sizes = [16, 8], strides = [1, 1]} : vector<16x32xbf16> to vector<16x8xbf16>
    %cst_86 = arith.constant dense<0.000000e+00> : vector<16x16xf32>
    %265 = tpu.matmul %262, %263, %cst_86 {dimension_numbers = #tpu.dot_dimension_numbers<[1], [1], [0], [0], [0, 0, 1, 0], [], []>} : vector<16x8xbf16>, vector<16x8xbf16>, vector<16x16xf32> -> vector<16x16xf32>
    %266 = arith.addf %265, %6 : vector<16x16xf32>
    %cst_87 = arith.constant dense<0xFF800000> : vector<16xf32>
    %267 = vector.multi_reduction <maximumf>, %266, %cst_87 [1] : vector<16x16xf32> to vector<16xf32>
    %268 = vector.shape_cast %267 : vector<16xf32> to vector<16x1xf32>
    %269 = vector.broadcast %268 : vector<16x1xf32> to vector<16x16xf32>
    %270 = arith.subf %266, %269 : vector<16x16xf32>
    %271 = math.exp %270 : vector<16x16xf32>
    %272 = arith.mulf %271, %2 : vector<16x16xf32>
    %cst_88 = arith.constant dense<0.000000e+00> : vector<16xf32>
    %273 = vector.multi_reduction <add>, %272, %cst_88 [1] : vector<16x16xf32> to vector<16xf32>
    %274 = vector.shape_cast %273 : vector<16xf32> to vector<16x1xf32>
    %275 = tpu.reciprocal %274 {approx = true} : vector<16x1xf32> -> vector<16x1xf32>
    %276 = vector.broadcast %275 : vector<16x1xf32> to vector<16x16xf32>
    %277 = arith.mulf %272, %276 : vector<16x16xf32>
    %278 = arith.truncf %277 : vector<16x16xf32> to vector<16x16xbf16>
    %cst_89 = arith.constant dense<0.000000e+00> : vector<16x8xf32>
    %279 = tpu.matmul %278, %264, %cst_89 {dimension_numbers = #tpu.dot_dimension_numbers<[1], [0], [0], [1], [0, 0, 1, 1], [], []>} : vector<16x16xbf16>, vector<16x8xbf16>, vector<16x8xf32> -> vector<16x8xf32>
    %280 = tpu.concatenate %225, %243, %261, %279 in 1 : vector<16x8xf32>, vector<16x8xf32>, vector<16x8xf32>, vector<16x8xf32> -> vector<16x32xf32>
    %281 = arith.truncf %280 : vector<16x32xf32> to vector<16x32xbf16>
    %cst_90 = arith.constant dense<0.000000e+00> : vector<16x32xf32>
    %282 = tpu.matmul %281, %180, %cst_90 {dimension_numbers = #tpu.dot_dimension_numbers<[1], [0], [0], [1], [0, 0, 1, 1], [], []>} : vector<16x32xbf16>, vector<32x32xbf16>, vector<16x32xf32> -> vector<16x32xf32>
    %283 = vector.extract_strided_slice %186 {offsets = [3, 0], sizes = [1, 32], strides = [1, 1]} : vector<9x32xf32> to vector<1x32xf32>
    %284 = vector.broadcast %283 : vector<1x32xf32> to vector<16x32xf32>
    %285 = arith.addf %282, %284 : vector<16x32xf32>
    %286 = arith.addf %176, %285 : vector<16x32xf32>
    %287 = vector.extract_strided_slice %186 {offsets = [4, 0], sizes = [1, 32], strides = [1, 1]} : vector<9x32xf32> to vector<1x32xf32>
    %288 = vector.extract_strided_slice %186 {offsets = [5, 0], sizes = [1, 32], strides = [1, 1]} : vector<9x32xf32> to vector<1x32xf32>
    %cst_91 = arith.constant dense<0.000000e+00> : vector<16xf32>
    %289 = vector.multi_reduction <add>, %286, %cst_91 [1] : vector<16x32xf32> to vector<16xf32>
    %290 = vector.shape_cast %289 : vector<16xf32> to vector<16x1xf32>
    %cst_92 = arith.constant 3.200000e+01 : f32
    %291 = vector.broadcast %cst_92 : f32 to vector<16x1xf32>
    %292 = arith.divf %290, %291 : vector<16x1xf32>
    %293 = arith.mulf %286, %286 : vector<16x32xf32>
    %cst_93 = arith.constant dense<0.000000e+00> : vector<16xf32>
    %294 = vector.multi_reduction <add>, %293, %cst_93 [1] : vector<16x32xf32> to vector<16xf32>
    %295 = vector.shape_cast %294 : vector<16xf32> to vector<16x1xf32>
    %cst_94 = arith.constant 3.200000e+01 : f32
    %296 = vector.broadcast %cst_94 : f32 to vector<16x1xf32>
    %297 = arith.divf %295, %296 : vector<16x1xf32>
    %298 = arith.mulf %292, %292 : vector<16x1xf32>
    %299 = arith.subf %297, %298 : vector<16x1xf32>
    %300 = vector.broadcast %292 : vector<16x1xf32> to vector<16x32xf32>
    %301 = arith.subf %286, %300 : vector<16x32xf32>
    %cst_95 = arith.constant 9.99999974E-6 : f32
    %302 = vector.broadcast %cst_95 : f32 to vector<16x1xf32>
    %303 = arith.addf %299, %302 : vector<16x1xf32>
    %304 = math.rsqrt %303 : vector<16x1xf32>
    %305 = vector.broadcast %304 : vector<16x1xf32> to vector<16x32xf32>
    %306 = arith.mulf %301, %305 : vector<16x32xf32>
    %307 = vector.broadcast %287 : vector<1x32xf32> to vector<16x32xf32>
    %308 = arith.mulf %306, %307 : vector<16x32xf32>
    %309 = vector.broadcast %288 : vector<1x32xf32> to vector<16x32xf32>
    %310 = arith.addf %308, %309 : vector<16x32xf32>
    %311 = arith.truncf %310 : vector<16x32xf32> to vector<16x32xbf16>
    %cst_96 = arith.constant dense<0.000000e+00> : vector<16x64xf32>
    %312 = tpu.matmul %311, %182, %cst_96 {dimension_numbers = #tpu.dot_dimension_numbers<[1], [0], [0], [1], [0, 0, 1, 1], [], []>} : vector<16x32xbf16>, vector<32x64xbf16>, vector<16x64xf32> -> vector<16x64xf32>
    %313 = vector.broadcast %188 : vector<1x64xf32> to vector<16x64xf32>
    %314 = arith.addf %312, %313 : vector<16x64xf32>
    %cst_97 = arith.constant 0.000000e+00 : f32
    %315 = vector.broadcast %cst_97 : f32 to vector<16x64xf32>
    %316 = arith.maximumf %314, %315 : vector<16x64xf32>
    %317 = arith.truncf %316 : vector<16x64xf32> to vector<16x64xbf16>
    %cst_98 = arith.constant dense<0.000000e+00> : vector<16x32xf32>
    %318 = tpu.matmul %317, %184, %cst_98 {dimension_numbers = #tpu.dot_dimension_numbers<[1], [0], [0], [1], [0, 0, 1, 1], [], []>} : vector<16x64xbf16>, vector<64x32xbf16>, vector<16x32xf32> -> vector<16x32xf32>
    %319 = vector.extract_strided_slice %186 {offsets = [6, 0], sizes = [1, 32], strides = [1, 1]} : vector<9x32xf32> to vector<1x32xf32>
    %320 = vector.broadcast %319 : vector<1x32xf32> to vector<16x32xf32>
    %321 = arith.addf %318, %320 : vector<16x32xf32>
    %322 = arith.addf %310, %321 : vector<16x32xf32>
    %323 = vector.extract_strided_slice %186 {offsets = [7, 0], sizes = [1, 32], strides = [1, 1]} : vector<9x32xf32> to vector<1x32xf32>
    %324 = vector.extract_strided_slice %186 {offsets = [8, 0], sizes = [1, 32], strides = [1, 1]} : vector<9x32xf32> to vector<1x32xf32>
    %cst_99 = arith.constant dense<0.000000e+00> : vector<16xf32>
    %325 = vector.multi_reduction <add>, %322, %cst_99 [1] : vector<16x32xf32> to vector<16xf32>
    %326 = vector.shape_cast %325 : vector<16xf32> to vector<16x1xf32>
    %cst_100 = arith.constant 3.200000e+01 : f32
    %327 = vector.broadcast %cst_100 : f32 to vector<16x1xf32>
    %328 = arith.divf %326, %327 : vector<16x1xf32>
    %329 = arith.mulf %322, %322 : vector<16x32xf32>
    %cst_101 = arith.constant dense<0.000000e+00> : vector<16xf32>
    %330 = vector.multi_reduction <add>, %329, %cst_101 [1] : vector<16x32xf32> to vector<16xf32>
    %331 = vector.shape_cast %330 : vector<16xf32> to vector<16x1xf32>
    %cst_102 = arith.constant 3.200000e+01 : f32
    %332 = vector.broadcast %cst_102 : f32 to vector<16x1xf32>
    %333 = arith.divf %331, %332 : vector<16x1xf32>
    %334 = arith.mulf %328, %328 : vector<16x1xf32>
    %335 = arith.subf %333, %334 : vector<16x1xf32>
    %336 = vector.broadcast %328 : vector<16x1xf32> to vector<16x32xf32>
    %337 = arith.subf %322, %336 : vector<16x32xf32>
    %cst_103 = arith.constant 9.99999974E-6 : f32
    %338 = vector.broadcast %cst_103 : f32 to vector<16x1xf32>
    %339 = arith.addf %335, %338 : vector<16x1xf32>
    %340 = math.rsqrt %339 : vector<16x1xf32>
    %341 = vector.broadcast %340 : vector<16x1xf32> to vector<16x32xf32>
    %342 = arith.mulf %337, %341 : vector<16x32xf32>
    %343 = vector.broadcast %323 : vector<1x32xf32> to vector<16x32xf32>
    %344 = arith.mulf %342, %343 : vector<16x32xf32>
    %345 = vector.broadcast %324 : vector<1x32xf32> to vector<16x32xf32>
    %346 = arith.addf %344, %345 : vector<16x32xf32>
    %c1_104 = arith.constant 1 : index
    %c0_105 = arith.constant 0 : index
    %c0_106 = arith.constant 0 : index
    %347 = vector.load %arg1[%c1_104, %c0_105, %c0_106] : memref<2x16x16xf32, #tpu.memory_space<vmem>>, vector<1x16x16xf32>
    %348 = vector.shape_cast %347 : vector<1x16x16xf32> to vector<16x16xf32>
    %cst_107 = arith.constant 1.000000e+00 : f32
    %349 = vector.broadcast %cst_107 : f32 to vector<16x16xf32>
    %350 = arith.subf %348, %349 : vector<16x16xf32>
    %cst_108 = arith.constant 1.000000e+30 : f32
    %351 = vector.broadcast %cst_108 : f32 to vector<16x16xf32>
    %352 = arith.mulf %350, %351 : vector<16x16xf32>
    %c0_109 = arith.constant 0 : index
    %c0_110 = arith.constant 0 : index
    %c0_111 = arith.constant 0 : index
    %353 = vector.load %arg2[%c0_109, %c0_110, %c0_111] : memref<2x32x96xbf16, #tpu.memory_space<vmem>>, vector<1x32x96xbf16>
    %354 = vector.shape_cast %353 : vector<1x32x96xbf16> to vector<32x96xbf16>
    %c0_112 = arith.constant 0 : index
    %c0_113 = arith.constant 0 : index
    %c0_114 = arith.constant 0 : index
    %355 = vector.load %arg3[%c0_112, %c0_113, %c0_114] : memref<2x32x32xbf16, #tpu.memory_space<vmem>>, vector<1x32x32xbf16>
    %356 = vector.shape_cast %355 : vector<1x32x32xbf16> to vector<32x32xbf16>
    %c0_115 = arith.constant 0 : index
    %c0_116 = arith.constant 0 : index
    %c0_117 = arith.constant 0 : index
    %357 = vector.load %arg4[%c0_115, %c0_116, %c0_117] : memref<2x32x64xbf16, #tpu.memory_space<vmem>>, vector<1x32x64xbf16>
    %358 = vector.shape_cast %357 : vector<1x32x64xbf16> to vector<32x64xbf16>
    %c0_118 = arith.constant 0 : index
    %c0_119 = arith.constant 0 : index
    %c0_120 = arith.constant 0 : index
    %359 = vector.load %arg5[%c0_118, %c0_119, %c0_120] : memref<2x64x32xbf16, #tpu.memory_space<vmem>>, vector<1x64x32xbf16>
    %360 = vector.shape_cast %359 : vector<1x64x32xbf16> to vector<64x32xbf16>
    %c0_121 = arith.constant 0 : index
    %c0_122 = arith.constant 0 : index
    %c0_123 = arith.constant 0 : index
    %361 = vector.load %arg6[%c0_121, %c0_122, %c0_123] : memref<2x9x32xf32, #tpu.memory_space<vmem>>, vector<1x9x32xf32>
    %362 = vector.shape_cast %361 : vector<1x9x32xf32> to vector<9x32xf32>
    %c0_124 = arith.constant 0 : index
    %c0_125 = arith.constant 0 : index
    %c0_126 = arith.constant 0 : index
    %363 = vector.load %arg7[%c0_124, %c0_125, %c0_126] : memref<2x1x64xf32, #tpu.memory_space<vmem>>, vector<1x1x64xf32>
    %364 = vector.shape_cast %363 : vector<1x1x64xf32> to vector<1x64xf32>
    %365 = arith.truncf %346 : vector<16x32xf32> to vector<16x32xbf16>
    %cst_127 = arith.constant dense<0.000000e+00> : vector<16x96xf32>
    %366 = tpu.matmul %365, %354, %cst_127 {dimension_numbers = #tpu.dot_dimension_numbers<[1], [0], [0], [1], [0, 0, 1, 1], [], []>} : vector<16x32xbf16>, vector<32x96xbf16>, vector<16x96xf32> -> vector<16x96xf32>
    %367 = vector.extract_strided_slice %366 {offsets = [0, 0], sizes = [16, 32], strides = [1, 1]} : vector<16x96xf32> to vector<16x32xf32>
    %368 = vector.extract_strided_slice %362 {offsets = [0, 0], sizes = [1, 32], strides = [1, 1]} : vector<9x32xf32> to vector<1x32xf32>
    %369 = vector.broadcast %368 : vector<1x32xf32> to vector<16x32xf32>
    %370 = arith.addf %367, %369 : vector<16x32xf32>
    %cst_128 = arith.constant 0.353553385 : f32
    %371 = vector.broadcast %cst_128 : f32 to vector<16x32xf32>
    %372 = arith.mulf %370, %371 : vector<16x32xf32>
    %373 = arith.truncf %372 : vector<16x32xf32> to vector<16x32xbf16>
    %374 = vector.extract_strided_slice %366 {offsets = [0, 32], sizes = [16, 32], strides = [1, 1]} : vector<16x96xf32> to vector<16x32xf32>
    %375 = vector.extract_strided_slice %362 {offsets = [1, 0], sizes = [1, 32], strides = [1, 1]} : vector<9x32xf32> to vector<1x32xf32>
    %376 = vector.broadcast %375 : vector<1x32xf32> to vector<16x32xf32>
    %377 = arith.addf %374, %376 : vector<16x32xf32>
    %378 = arith.truncf %377 : vector<16x32xf32> to vector<16x32xbf16>
    %379 = vector.extract_strided_slice %366 {offsets = [0, 64], sizes = [16, 32], strides = [1, 1]} : vector<16x96xf32> to vector<16x32xf32>
    %380 = vector.extract_strided_slice %362 {offsets = [2, 0], sizes = [1, 32], strides = [1, 1]} : vector<9x32xf32> to vector<1x32xf32>
    %381 = vector.broadcast %380 : vector<1x32xf32> to vector<16x32xf32>
    %382 = arith.addf %379, %381 : vector<16x32xf32>
    %383 = arith.truncf %382 : vector<16x32xf32> to vector<16x32xbf16>
    %384 = vector.extract_strided_slice %373 {offsets = [0, 0], sizes = [16, 8], strides = [1, 1]} : vector<16x32xbf16> to vector<16x8xbf16>
    %385 = vector.extract_strided_slice %378 {offsets = [0, 0], sizes = [16, 8], strides = [1, 1]} : vector<16x32xbf16> to vector<16x8xbf16>
    %386 = vector.extract_strided_slice %383 {offsets = [0, 0], sizes = [16, 8], strides = [1, 1]} : vector<16x32xbf16> to vector<16x8xbf16>
    %cst_129 = arith.constant dense<0.000000e+00> : vector<16x16xf32>
    %387 = tpu.matmul %384, %385, %cst_129 {dimension_numbers = #tpu.dot_dimension_numbers<[1], [1], [0], [0], [0, 0, 1, 0], [], []>} : vector<16x8xbf16>, vector<16x8xbf16>, vector<16x16xf32> -> vector<16x16xf32>
    %388 = arith.addf %387, %352 : vector<16x16xf32>
    %cst_130 = arith.constant dense<0xFF800000> : vector<16xf32>
    %389 = vector.multi_reduction <maximumf>, %388, %cst_130 [1] : vector<16x16xf32> to vector<16xf32>
    %390 = vector.shape_cast %389 : vector<16xf32> to vector<16x1xf32>
    %391 = vector.broadcast %390 : vector<16x1xf32> to vector<16x16xf32>
    %392 = arith.subf %388, %391 : vector<16x16xf32>
    %393 = math.exp %392 : vector<16x16xf32>
    %394 = arith.mulf %393, %348 : vector<16x16xf32>
    %cst_131 = arith.constant dense<0.000000e+00> : vector<16xf32>
    %395 = vector.multi_reduction <add>, %394, %cst_131 [1] : vector<16x16xf32> to vector<16xf32>
    %396 = vector.shape_cast %395 : vector<16xf32> to vector<16x1xf32>
    %397 = tpu.reciprocal %396 {approx = true} : vector<16x1xf32> -> vector<16x1xf32>
    %398 = vector.broadcast %397 : vector<16x1xf32> to vector<16x16xf32>
    %399 = arith.mulf %394, %398 : vector<16x16xf32>
    %400 = arith.truncf %399 : vector<16x16xf32> to vector<16x16xbf16>
    %cst_132 = arith.constant dense<0.000000e+00> : vector<16x8xf32>
    %401 = tpu.matmul %400, %386, %cst_132 {dimension_numbers = #tpu.dot_dimension_numbers<[1], [0], [0], [1], [0, 0, 1, 1], [], []>} : vector<16x16xbf16>, vector<16x8xbf16>, vector<16x8xf32> -> vector<16x8xf32>
    %402 = vector.extract_strided_slice %373 {offsets = [0, 8], sizes = [16, 8], strides = [1, 1]} : vector<16x32xbf16> to vector<16x8xbf16>
    %403 = vector.extract_strided_slice %378 {offsets = [0, 8], sizes = [16, 8], strides = [1, 1]} : vector<16x32xbf16> to vector<16x8xbf16>
    %404 = vector.extract_strided_slice %383 {offsets = [0, 8], sizes = [16, 8], strides = [1, 1]} : vector<16x32xbf16> to vector<16x8xbf16>
    %cst_133 = arith.constant dense<0.000000e+00> : vector<16x16xf32>
    %405 = tpu.matmul %402, %403, %cst_133 {dimension_numbers = #tpu.dot_dimension_numbers<[1], [1], [0], [0], [0, 0, 1, 0], [], []>} : vector<16x8xbf16>, vector<16x8xbf16>, vector<16x16xf32> -> vector<16x16xf32>
    %406 = arith.addf %405, %352 : vector<16x16xf32>
    %cst_134 = arith.constant dense<0xFF800000> : vector<16xf32>
    %407 = vector.multi_reduction <maximumf>, %406, %cst_134 [1] : vector<16x16xf32> to vector<16xf32>
    %408 = vector.shape_cast %407 : vector<16xf32> to vector<16x1xf32>
    %409 = vector.broadcast %408 : vector<16x1xf32> to vector<16x16xf32>
    %410 = arith.subf %406, %409 : vector<16x16xf32>
    %411 = math.exp %410 : vector<16x16xf32>
    %412 = arith.mulf %411, %348 : vector<16x16xf32>
    %cst_135 = arith.constant dense<0.000000e+00> : vector<16xf32>
    %413 = vector.multi_reduction <add>, %412, %cst_135 [1] : vector<16x16xf32> to vector<16xf32>
    %414 = vector.shape_cast %413 : vector<16xf32> to vector<16x1xf32>
    %415 = tpu.reciprocal %414 {approx = true} : vector<16x1xf32> -> vector<16x1xf32>
    %416 = vector.broadcast %415 : vector<16x1xf32> to vector<16x16xf32>
    %417 = arith.mulf %412, %416 : vector<16x16xf32>
    %418 = arith.truncf %417 : vector<16x16xf32> to vector<16x16xbf16>
    %cst_136 = arith.constant dense<0.000000e+00> : vector<16x8xf32>
    %419 = tpu.matmul %418, %404, %cst_136 {dimension_numbers = #tpu.dot_dimension_numbers<[1], [0], [0], [1], [0, 0, 1, 1], [], []>} : vector<16x16xbf16>, vector<16x8xbf16>, vector<16x8xf32> -> vector<16x8xf32>
    %420 = vector.extract_strided_slice %373 {offsets = [0, 16], sizes = [16, 8], strides = [1, 1]} : vector<16x32xbf16> to vector<16x8xbf16>
    %421 = vector.extract_strided_slice %378 {offsets = [0, 16], sizes = [16, 8], strides = [1, 1]} : vector<16x32xbf16> to vector<16x8xbf16>
    %422 = vector.extract_strided_slice %383 {offsets = [0, 16], sizes = [16, 8], strides = [1, 1]} : vector<16x32xbf16> to vector<16x8xbf16>
    %cst_137 = arith.constant dense<0.000000e+00> : vector<16x16xf32>
    %423 = tpu.matmul %420, %421, %cst_137 {dimension_numbers = #tpu.dot_dimension_numbers<[1], [1], [0], [0], [0, 0, 1, 0], [], []>} : vector<16x8xbf16>, vector<16x8xbf16>, vector<16x16xf32> -> vector<16x16xf32>
    %424 = arith.addf %423, %352 : vector<16x16xf32>
    %cst_138 = arith.constant dense<0xFF800000> : vector<16xf32>
    %425 = vector.multi_reduction <maximumf>, %424, %cst_138 [1] : vector<16x16xf32> to vector<16xf32>
    %426 = vector.shape_cast %425 : vector<16xf32> to vector<16x1xf32>
    %427 = vector.broadcast %426 : vector<16x1xf32> to vector<16x16xf32>
    %428 = arith.subf %424, %427 : vector<16x16xf32>
    %429 = math.exp %428 : vector<16x16xf32>
    %430 = arith.mulf %429, %348 : vector<16x16xf32>
    %cst_139 = arith.constant dense<0.000000e+00> : vector<16xf32>
    %431 = vector.multi_reduction <add>, %430, %cst_139 [1] : vector<16x16xf32> to vector<16xf32>
    %432 = vector.shape_cast %431 : vector<16xf32> to vector<16x1xf32>
    %433 = tpu.reciprocal %432 {approx = true} : vector<16x1xf32> -> vector<16x1xf32>
    %434 = vector.broadcast %433 : vector<16x1xf32> to vector<16x16xf32>
    %435 = arith.mulf %430, %434 : vector<16x16xf32>
    %436 = arith.truncf %435 : vector<16x16xf32> to vector<16x16xbf16>
    %cst_140 = arith.constant dense<0.000000e+00> : vector<16x8xf32>
    %437 = tpu.matmul %436, %422, %cst_140 {dimension_numbers = #tpu.dot_dimension_numbers<[1], [0], [0], [1], [0, 0, 1, 1], [], []>} : vector<16x16xbf16>, vector<16x8xbf16>, vector<16x8xf32> -> vector<16x8xf32>
    %438 = vector.extract_strided_slice %373 {offsets = [0, 24], sizes = [16, 8], strides = [1, 1]} : vector<16x32xbf16> to vector<16x8xbf16>
    %439 = vector.extract_strided_slice %378 {offsets = [0, 24], sizes = [16, 8], strides = [1, 1]} : vector<16x32xbf16> to vector<16x8xbf16>
    %440 = vector.extract_strided_slice %383 {offsets = [0, 24], sizes = [16, 8], strides = [1, 1]} : vector<16x32xbf16> to vector<16x8xbf16>
    %cst_141 = arith.constant dense<0.000000e+00> : vector<16x16xf32>
    %441 = tpu.matmul %438, %439, %cst_141 {dimension_numbers = #tpu.dot_dimension_numbers<[1], [1], [0], [0], [0, 0, 1, 0], [], []>} : vector<16x8xbf16>, vector<16x8xbf16>, vector<16x16xf32> -> vector<16x16xf32>
    %442 = arith.addf %441, %352 : vector<16x16xf32>
    %cst_142 = arith.constant dense<0xFF800000> : vector<16xf32>
    %443 = vector.multi_reduction <maximumf>, %442, %cst_142 [1] : vector<16x16xf32> to vector<16xf32>
    %444 = vector.shape_cast %443 : vector<16xf32> to vector<16x1xf32>
    %445 = vector.broadcast %444 : vector<16x1xf32> to vector<16x16xf32>
    %446 = arith.subf %442, %445 : vector<16x16xf32>
    %447 = math.exp %446 : vector<16x16xf32>
    %448 = arith.mulf %447, %348 : vector<16x16xf32>
    %cst_143 = arith.constant dense<0.000000e+00> : vector<16xf32>
    %449 = vector.multi_reduction <add>, %448, %cst_143 [1] : vector<16x16xf32> to vector<16xf32>
    %450 = vector.shape_cast %449 : vector<16xf32> to vector<16x1xf32>
    %451 = tpu.reciprocal %450 {approx = true} : vector<16x1xf32> -> vector<16x1xf32>
    %452 = vector.broadcast %451 : vector<16x1xf32> to vector<16x16xf32>
    %453 = arith.mulf %448, %452 : vector<16x16xf32>
    %454 = arith.truncf %453 : vector<16x16xf32> to vector<16x16xbf16>
    %cst_144 = arith.constant dense<0.000000e+00> : vector<16x8xf32>
    %455 = tpu.matmul %454, %440, %cst_144 {dimension_numbers = #tpu.dot_dimension_numbers<[1], [0], [0], [1], [0, 0, 1, 1], [], []>} : vector<16x16xbf16>, vector<16x8xbf16>, vector<16x8xf32> -> vector<16x8xf32>
    %456 = tpu.concatenate %401, %419, %437, %455 in 1 : vector<16x8xf32>, vector<16x8xf32>, vector<16x8xf32>, vector<16x8xf32> -> vector<16x32xf32>
    %457 = arith.truncf %456 : vector<16x32xf32> to vector<16x32xbf16>
    %cst_145 = arith.constant dense<0.000000e+00> : vector<16x32xf32>
    %458 = tpu.matmul %457, %356, %cst_145 {dimension_numbers = #tpu.dot_dimension_numbers<[1], [0], [0], [1], [0, 0, 1, 1], [], []>} : vector<16x32xbf16>, vector<32x32xbf16>, vector<16x32xf32> -> vector<16x32xf32>
    %459 = vector.extract_strided_slice %362 {offsets = [3, 0], sizes = [1, 32], strides = [1, 1]} : vector<9x32xf32> to vector<1x32xf32>
    %460 = vector.broadcast %459 : vector<1x32xf32> to vector<16x32xf32>
    %461 = arith.addf %458, %460 : vector<16x32xf32>
    %462 = arith.addf %346, %461 : vector<16x32xf32>
    %463 = vector.extract_strided_slice %362 {offsets = [4, 0], sizes = [1, 32], strides = [1, 1]} : vector<9x32xf32> to vector<1x32xf32>
    %464 = vector.extract_strided_slice %362 {offsets = [5, 0], sizes = [1, 32], strides = [1, 1]} : vector<9x32xf32> to vector<1x32xf32>
    %cst_146 = arith.constant dense<0.000000e+00> : vector<16xf32>
    %465 = vector.multi_reduction <add>, %462, %cst_146 [1] : vector<16x32xf32> to vector<16xf32>
    %466 = vector.shape_cast %465 : vector<16xf32> to vector<16x1xf32>
    %cst_147 = arith.constant 3.200000e+01 : f32
    %467 = vector.broadcast %cst_147 : f32 to vector<16x1xf32>
    %468 = arith.divf %466, %467 : vector<16x1xf32>
    %469 = arith.mulf %462, %462 : vector<16x32xf32>
    %cst_148 = arith.constant dense<0.000000e+00> : vector<16xf32>
    %470 = vector.multi_reduction <add>, %469, %cst_148 [1] : vector<16x32xf32> to vector<16xf32>
    %471 = vector.shape_cast %470 : vector<16xf32> to vector<16x1xf32>
    %cst_149 = arith.constant 3.200000e+01 : f32
    %472 = vector.broadcast %cst_149 : f32 to vector<16x1xf32>
    %473 = arith.divf %471, %472 : vector<16x1xf32>
    %474 = arith.mulf %468, %468 : vector<16x1xf32>
    %475 = arith.subf %473, %474 : vector<16x1xf32>
    %476 = vector.broadcast %468 : vector<16x1xf32> to vector<16x32xf32>
    %477 = arith.subf %462, %476 : vector<16x32xf32>
    %cst_150 = arith.constant 9.99999974E-6 : f32
    %478 = vector.broadcast %cst_150 : f32 to vector<16x1xf32>
    %479 = arith.addf %475, %478 : vector<16x1xf32>
    %480 = math.rsqrt %479 : vector<16x1xf32>
    %481 = vector.broadcast %480 : vector<16x1xf32> to vector<16x32xf32>
    %482 = arith.mulf %477, %481 : vector<16x32xf32>
    %483 = vector.broadcast %463 : vector<1x32xf32> to vector<16x32xf32>
    %484 = arith.mulf %482, %483 : vector<16x32xf32>
    %485 = vector.broadcast %464 : vector<1x32xf32> to vector<16x32xf32>
    %486 = arith.addf %484, %485 : vector<16x32xf32>
    %487 = arith.truncf %486 : vector<16x32xf32> to vector<16x32xbf16>
    %cst_151 = arith.constant dense<0.000000e+00> : vector<16x64xf32>
    %488 = tpu.matmul %487, %358, %cst_151 {dimension_numbers = #tpu.dot_dimension_numbers<[1], [0], [0], [1], [0, 0, 1, 1], [], []>} : vector<16x32xbf16>, vector<32x64xbf16>, vector<16x64xf32> -> vector<16x64xf32>
    %489 = vector.broadcast %364 : vector<1x64xf32> to vector<16x64xf32>
    %490 = arith.addf %488, %489 : vector<16x64xf32>
    %cst_152 = arith.constant 0.000000e+00 : f32
    %491 = vector.broadcast %cst_152 : f32 to vector<16x64xf32>
    %492 = arith.maximumf %490, %491 : vector<16x64xf32>
    %493 = arith.truncf %492 : vector<16x64xf32> to vector<16x64xbf16>
    %cst_153 = arith.constant dense<0.000000e+00> : vector<16x32xf32>
    %494 = tpu.matmul %493, %360, %cst_153 {dimension_numbers = #tpu.dot_dimension_numbers<[1], [0], [0], [1], [0, 0, 1, 1], [], []>} : vector<16x64xbf16>, vector<64x32xbf16>, vector<16x32xf32> -> vector<16x32xf32>
    %495 = vector.extract_strided_slice %362 {offsets = [6, 0], sizes = [1, 32], strides = [1, 1]} : vector<9x32xf32> to vector<1x32xf32>
    %496 = vector.broadcast %495 : vector<1x32xf32> to vector<16x32xf32>
    %497 = arith.addf %494, %496 : vector<16x32xf32>
    %498 = arith.addf %486, %497 : vector<16x32xf32>
    %499 = vector.extract_strided_slice %362 {offsets = [7, 0], sizes = [1, 32], strides = [1, 1]} : vector<9x32xf32> to vector<1x32xf32>
    %500 = vector.extract_strided_slice %362 {offsets = [8, 0], sizes = [1, 32], strides = [1, 1]} : vector<9x32xf32> to vector<1x32xf32>
    %cst_154 = arith.constant dense<0.000000e+00> : vector<16xf32>
    %501 = vector.multi_reduction <add>, %498, %cst_154 [1] : vector<16x32xf32> to vector<16xf32>
    %502 = vector.shape_cast %501 : vector<16xf32> to vector<16x1xf32>
    %cst_155 = arith.constant 3.200000e+01 : f32
    %503 = vector.broadcast %cst_155 : f32 to vector<16x1xf32>
    %504 = arith.divf %502, %503 : vector<16x1xf32>
    %505 = arith.mulf %498, %498 : vector<16x32xf32>
    %cst_156 = arith.constant dense<0.000000e+00> : vector<16xf32>
    %506 = vector.multi_reduction <add>, %505, %cst_156 [1] : vector<16x32xf32> to vector<16xf32>
    %507 = vector.shape_cast %506 : vector<16xf32> to vector<16x1xf32>
    %cst_157 = arith.constant 3.200000e+01 : f32
    %508 = vector.broadcast %cst_157 : f32 to vector<16x1xf32>
    %509 = arith.divf %507, %508 : vector<16x1xf32>
    %510 = arith.mulf %504, %504 : vector<16x1xf32>
    %511 = arith.subf %509, %510 : vector<16x1xf32>
    %512 = vector.broadcast %504 : vector<16x1xf32> to vector<16x32xf32>
    %513 = arith.subf %498, %512 : vector<16x32xf32>
    %cst_158 = arith.constant 9.99999974E-6 : f32
    %514 = vector.broadcast %cst_158 : f32 to vector<16x1xf32>
    %515 = arith.addf %511, %514 : vector<16x1xf32>
    %516 = math.rsqrt %515 : vector<16x1xf32>
    %517 = vector.broadcast %516 : vector<16x1xf32> to vector<16x32xf32>
    %518 = arith.mulf %513, %517 : vector<16x32xf32>
    %519 = vector.broadcast %499 : vector<1x32xf32> to vector<16x32xf32>
    %520 = arith.mulf %518, %519 : vector<16x32xf32>
    %521 = vector.broadcast %500 : vector<1x32xf32> to vector<16x32xf32>
    %522 = arith.addf %520, %521 : vector<16x32xf32>
    %c1_159 = arith.constant 1 : index
    %c0_160 = arith.constant 0 : index
    %c0_161 = arith.constant 0 : index
    %523 = vector.load %arg2[%c1_159, %c0_160, %c0_161] : memref<2x32x96xbf16, #tpu.memory_space<vmem>>, vector<1x32x96xbf16>
    %524 = vector.shape_cast %523 : vector<1x32x96xbf16> to vector<32x96xbf16>
    %c1_162 = arith.constant 1 : index
    %c0_163 = arith.constant 0 : index
    %c0_164 = arith.constant 0 : index
    %525 = vector.load %arg3[%c1_162, %c0_163, %c0_164] : memref<2x32x32xbf16, #tpu.memory_space<vmem>>, vector<1x32x32xbf16>
    %526 = vector.shape_cast %525 : vector<1x32x32xbf16> to vector<32x32xbf16>
    %c1_165 = arith.constant 1 : index
    %c0_166 = arith.constant 0 : index
    %c0_167 = arith.constant 0 : index
    %527 = vector.load %arg4[%c1_165, %c0_166, %c0_167] : memref<2x32x64xbf16, #tpu.memory_space<vmem>>, vector<1x32x64xbf16>
    %528 = vector.shape_cast %527 : vector<1x32x64xbf16> to vector<32x64xbf16>
    %c1_168 = arith.constant 1 : index
    %c0_169 = arith.constant 0 : index
    %c0_170 = arith.constant 0 : index
    %529 = vector.load %arg5[%c1_168, %c0_169, %c0_170] : memref<2x64x32xbf16, #tpu.memory_space<vmem>>, vector<1x64x32xbf16>
    %530 = vector.shape_cast %529 : vector<1x64x32xbf16> to vector<64x32xbf16>
    %c1_171 = arith.constant 1 : index
    %c0_172 = arith.constant 0 : index
    %c0_173 = arith.constant 0 : index
    %531 = vector.load %arg6[%c1_171, %c0_172, %c0_173] : memref<2x9x32xf32, #tpu.memory_space<vmem>>, vector<1x9x32xf32>
    %532 = vector.shape_cast %531 : vector<1x9x32xf32> to vector<9x32xf32>
    %c1_174 = arith.constant 1 : index
    %c0_175 = arith.constant 0 : index
    %c0_176 = arith.constant 0 : index
    %533 = vector.load %arg7[%c1_174, %c0_175, %c0_176] : memref<2x1x64xf32, #tpu.memory_space<vmem>>, vector<1x1x64xf32>
    %534 = vector.shape_cast %533 : vector<1x1x64xf32> to vector<1x64xf32>
    %535 = arith.truncf %522 : vector<16x32xf32> to vector<16x32xbf16>
    %cst_177 = arith.constant dense<0.000000e+00> : vector<16x96xf32>
    %536 = tpu.matmul %535, %524, %cst_177 {dimension_numbers = #tpu.dot_dimension_numbers<[1], [0], [0], [1], [0, 0, 1, 1], [], []>} : vector<16x32xbf16>, vector<32x96xbf16>, vector<16x96xf32> -> vector<16x96xf32>
    %537 = vector.extract_strided_slice %536 {offsets = [0, 0], sizes = [16, 32], strides = [1, 1]} : vector<16x96xf32> to vector<16x32xf32>
    %538 = vector.extract_strided_slice %532 {offsets = [0, 0], sizes = [1, 32], strides = [1, 1]} : vector<9x32xf32> to vector<1x32xf32>
    %539 = vector.broadcast %538 : vector<1x32xf32> to vector<16x32xf32>
    %540 = arith.addf %537, %539 : vector<16x32xf32>
    %cst_178 = arith.constant 0.353553385 : f32
    %541 = vector.broadcast %cst_178 : f32 to vector<16x32xf32>
    %542 = arith.mulf %540, %541 : vector<16x32xf32>
    %543 = arith.truncf %542 : vector<16x32xf32> to vector<16x32xbf16>
    %544 = vector.extract_strided_slice %536 {offsets = [0, 32], sizes = [16, 32], strides = [1, 1]} : vector<16x96xf32> to vector<16x32xf32>
    %545 = vector.extract_strided_slice %532 {offsets = [1, 0], sizes = [1, 32], strides = [1, 1]} : vector<9x32xf32> to vector<1x32xf32>
    %546 = vector.broadcast %545 : vector<1x32xf32> to vector<16x32xf32>
    %547 = arith.addf %544, %546 : vector<16x32xf32>
    %548 = arith.truncf %547 : vector<16x32xf32> to vector<16x32xbf16>
    %549 = vector.extract_strided_slice %536 {offsets = [0, 64], sizes = [16, 32], strides = [1, 1]} : vector<16x96xf32> to vector<16x32xf32>
    %550 = vector.extract_strided_slice %532 {offsets = [2, 0], sizes = [1, 32], strides = [1, 1]} : vector<9x32xf32> to vector<1x32xf32>
    %551 = vector.broadcast %550 : vector<1x32xf32> to vector<16x32xf32>
    %552 = arith.addf %549, %551 : vector<16x32xf32>
    %553 = arith.truncf %552 : vector<16x32xf32> to vector<16x32xbf16>
    %554 = vector.extract_strided_slice %543 {offsets = [0, 0], sizes = [16, 8], strides = [1, 1]} : vector<16x32xbf16> to vector<16x8xbf16>
    %555 = vector.extract_strided_slice %548 {offsets = [0, 0], sizes = [16, 8], strides = [1, 1]} : vector<16x32xbf16> to vector<16x8xbf16>
    %556 = vector.extract_strided_slice %553 {offsets = [0, 0], sizes = [16, 8], strides = [1, 1]} : vector<16x32xbf16> to vector<16x8xbf16>
    %cst_179 = arith.constant dense<0.000000e+00> : vector<16x16xf32>
    %557 = tpu.matmul %554, %555, %cst_179 {dimension_numbers = #tpu.dot_dimension_numbers<[1], [1], [0], [0], [0, 0, 1, 0], [], []>} : vector<16x8xbf16>, vector<16x8xbf16>, vector<16x16xf32> -> vector<16x16xf32>
    %558 = arith.addf %557, %352 : vector<16x16xf32>
    %cst_180 = arith.constant dense<0xFF800000> : vector<16xf32>
    %559 = vector.multi_reduction <maximumf>, %558, %cst_180 [1] : vector<16x16xf32> to vector<16xf32>
    %560 = vector.shape_cast %559 : vector<16xf32> to vector<16x1xf32>
    %561 = vector.broadcast %560 : vector<16x1xf32> to vector<16x16xf32>
    %562 = arith.subf %558, %561 : vector<16x16xf32>
    %563 = math.exp %562 : vector<16x16xf32>
    %564 = arith.mulf %563, %348 : vector<16x16xf32>
    %cst_181 = arith.constant dense<0.000000e+00> : vector<16xf32>
    %565 = vector.multi_reduction <add>, %564, %cst_181 [1] : vector<16x16xf32> to vector<16xf32>
    %566 = vector.shape_cast %565 : vector<16xf32> to vector<16x1xf32>
    %567 = tpu.reciprocal %566 {approx = true} : vector<16x1xf32> -> vector<16x1xf32>
    %568 = vector.broadcast %567 : vector<16x1xf32> to vector<16x16xf32>
    %569 = arith.mulf %564, %568 : vector<16x16xf32>
    %570 = arith.truncf %569 : vector<16x16xf32> to vector<16x16xbf16>
    %cst_182 = arith.constant dense<0.000000e+00> : vector<16x8xf32>
    %571 = tpu.matmul %570, %556, %cst_182 {dimension_numbers = #tpu.dot_dimension_numbers<[1], [0], [0], [1], [0, 0, 1, 1], [], []>} : vector<16x16xbf16>, vector<16x8xbf16>, vector<16x8xf32> -> vector<16x8xf32>
    %572 = vector.extract_strided_slice %543 {offsets = [0, 8], sizes = [16, 8], strides = [1, 1]} : vector<16x32xbf16> to vector<16x8xbf16>
    %573 = vector.extract_strided_slice %548 {offsets = [0, 8], sizes = [16, 8], strides = [1, 1]} : vector<16x32xbf16> to vector<16x8xbf16>
    %574 = vector.extract_strided_slice %553 {offsets = [0, 8], sizes = [16, 8], strides = [1, 1]} : vector<16x32xbf16> to vector<16x8xbf16>
    %cst_183 = arith.constant dense<0.000000e+00> : vector<16x16xf32>
    %575 = tpu.matmul %572, %573, %cst_183 {dimension_numbers = #tpu.dot_dimension_numbers<[1], [1], [0], [0], [0, 0, 1, 0], [], []>} : vector<16x8xbf16>, vector<16x8xbf16>, vector<16x16xf32> -> vector<16x16xf32>
    %576 = arith.addf %575, %352 : vector<16x16xf32>
    %cst_184 = arith.constant dense<0xFF800000> : vector<16xf32>
    %577 = vector.multi_reduction <maximumf>, %576, %cst_184 [1] : vector<16x16xf32> to vector<16xf32>
    %578 = vector.shape_cast %577 : vector<16xf32> to vector<16x1xf32>
    %579 = vector.broadcast %578 : vector<16x1xf32> to vector<16x16xf32>
    %580 = arith.subf %576, %579 : vector<16x16xf32>
    %581 = math.exp %580 : vector<16x16xf32>
    %582 = arith.mulf %581, %348 : vector<16x16xf32>
    %cst_185 = arith.constant dense<0.000000e+00> : vector<16xf32>
    %583 = vector.multi_reduction <add>, %582, %cst_185 [1] : vector<16x16xf32> to vector<16xf32>
    %584 = vector.shape_cast %583 : vector<16xf32> to vector<16x1xf32>
    %585 = tpu.reciprocal %584 {approx = true} : vector<16x1xf32> -> vector<16x1xf32>
    %586 = vector.broadcast %585 : vector<16x1xf32> to vector<16x16xf32>
    %587 = arith.mulf %582, %586 : vector<16x16xf32>
    %588 = arith.truncf %587 : vector<16x16xf32> to vector<16x16xbf16>
    %cst_186 = arith.constant dense<0.000000e+00> : vector<16x8xf32>
    %589 = tpu.matmul %588, %574, %cst_186 {dimension_numbers = #tpu.dot_dimension_numbers<[1], [0], [0], [1], [0, 0, 1, 1], [], []>} : vector<16x16xbf16>, vector<16x8xbf16>, vector<16x8xf32> -> vector<16x8xf32>
    %590 = vector.extract_strided_slice %543 {offsets = [0, 16], sizes = [16, 8], strides = [1, 1]} : vector<16x32xbf16> to vector<16x8xbf16>
    %591 = vector.extract_strided_slice %548 {offsets = [0, 16], sizes = [16, 8], strides = [1, 1]} : vector<16x32xbf16> to vector<16x8xbf16>
    %592 = vector.extract_strided_slice %553 {offsets = [0, 16], sizes = [16, 8], strides = [1, 1]} : vector<16x32xbf16> to vector<16x8xbf16>
    %cst_187 = arith.constant dense<0.000000e+00> : vector<16x16xf32>
    %593 = tpu.matmul %590, %591, %cst_187 {dimension_numbers = #tpu.dot_dimension_numbers<[1], [1], [0], [0], [0, 0, 1, 0], [], []>} : vector<16x8xbf16>, vector<16x8xbf16>, vector<16x16xf32> -> vector<16x16xf32>
    %594 = arith.addf %593, %352 : vector<16x16xf32>
    %cst_188 = arith.constant dense<0xFF800000> : vector<16xf32>
    %595 = vector.multi_reduction <maximumf>, %594, %cst_188 [1] : vector<16x16xf32> to vector<16xf32>
    %596 = vector.shape_cast %595 : vector<16xf32> to vector<16x1xf32>
    %597 = vector.broadcast %596 : vector<16x1xf32> to vector<16x16xf32>
    %598 = arith.subf %594, %597 : vector<16x16xf32>
    %599 = math.exp %598 : vector<16x16xf32>
    %600 = arith.mulf %599, %348 : vector<16x16xf32>
    %cst_189 = arith.constant dense<0.000000e+00> : vector<16xf32>
    %601 = vector.multi_reduction <add>, %600, %cst_189 [1] : vector<16x16xf32> to vector<16xf32>
    %602 = vector.shape_cast %601 : vector<16xf32> to vector<16x1xf32>
    %603 = tpu.reciprocal %602 {approx = true} : vector<16x1xf32> -> vector<16x1xf32>
    %604 = vector.broadcast %603 : vector<16x1xf32> to vector<16x16xf32>
    %605 = arith.mulf %600, %604 : vector<16x16xf32>
    %606 = arith.truncf %605 : vector<16x16xf32> to vector<16x16xbf16>
    %cst_190 = arith.constant dense<0.000000e+00> : vector<16x8xf32>
    %607 = tpu.matmul %606, %592, %cst_190 {dimension_numbers = #tpu.dot_dimension_numbers<[1], [0], [0], [1], [0, 0, 1, 1], [], []>} : vector<16x16xbf16>, vector<16x8xbf16>, vector<16x8xf32> -> vector<16x8xf32>
    %608 = vector.extract_strided_slice %543 {offsets = [0, 24], sizes = [16, 8], strides = [1, 1]} : vector<16x32xbf16> to vector<16x8xbf16>
    %609 = vector.extract_strided_slice %548 {offsets = [0, 24], sizes = [16, 8], strides = [1, 1]} : vector<16x32xbf16> to vector<16x8xbf16>
    %610 = vector.extract_strided_slice %553 {offsets = [0, 24], sizes = [16, 8], strides = [1, 1]} : vector<16x32xbf16> to vector<16x8xbf16>
    %cst_191 = arith.constant dense<0.000000e+00> : vector<16x16xf32>
    %611 = tpu.matmul %608, %609, %cst_191 {dimension_numbers = #tpu.dot_dimension_numbers<[1], [1], [0], [0], [0, 0, 1, 0], [], []>} : vector<16x8xbf16>, vector<16x8xbf16>, vector<16x16xf32> -> vector<16x16xf32>
    %612 = arith.addf %611, %352 : vector<16x16xf32>
    %cst_192 = arith.constant dense<0xFF800000> : vector<16xf32>
    %613 = vector.multi_reduction <maximumf>, %612, %cst_192 [1] : vector<16x16xf32> to vector<16xf32>
    %614 = vector.shape_cast %613 : vector<16xf32> to vector<16x1xf32>
    %615 = vector.broadcast %614 : vector<16x1xf32> to vector<16x16xf32>
    %616 = arith.subf %612, %615 : vector<16x16xf32>
    %617 = math.exp %616 : vector<16x16xf32>
    %618 = arith.mulf %617, %348 : vector<16x16xf32>
    %cst_193 = arith.constant dense<0.000000e+00> : vector<16xf32>
    %619 = vector.multi_reduction <add>, %618, %cst_193 [1] : vector<16x16xf32> to vector<16xf32>
    %620 = vector.shape_cast %619 : vector<16xf32> to vector<16x1xf32>
    %621 = tpu.reciprocal %620 {approx = true} : vector<16x1xf32> -> vector<16x1xf32>
    %622 = vector.broadcast %621 : vector<16x1xf32> to vector<16x16xf32>
    %623 = arith.mulf %618, %622 : vector<16x16xf32>
    %624 = arith.truncf %623 : vector<16x16xf32> to vector<16x16xbf16>
    %cst_194 = arith.constant dense<0.000000e+00> : vector<16x8xf32>
    %625 = tpu.matmul %624, %610, %cst_194 {dimension_numbers = #tpu.dot_dimension_numbers<[1], [0], [0], [1], [0, 0, 1, 1], [], []>} : vector<16x16xbf16>, vector<16x8xbf16>, vector<16x8xf32> -> vector<16x8xf32>
    %626 = tpu.concatenate %571, %589, %607, %625 in 1 : vector<16x8xf32>, vector<16x8xf32>, vector<16x8xf32>, vector<16x8xf32> -> vector<16x32xf32>
    %627 = arith.truncf %626 : vector<16x32xf32> to vector<16x32xbf16>
    %cst_195 = arith.constant dense<0.000000e+00> : vector<16x32xf32>
    %628 = tpu.matmul %627, %526, %cst_195 {dimension_numbers = #tpu.dot_dimension_numbers<[1], [0], [0], [1], [0, 0, 1, 1], [], []>} : vector<16x32xbf16>, vector<32x32xbf16>, vector<16x32xf32> -> vector<16x32xf32>
    %629 = vector.extract_strided_slice %532 {offsets = [3, 0], sizes = [1, 32], strides = [1, 1]} : vector<9x32xf32> to vector<1x32xf32>
    %630 = vector.broadcast %629 : vector<1x32xf32> to vector<16x32xf32>
    %631 = arith.addf %628, %630 : vector<16x32xf32>
    %632 = arith.addf %522, %631 : vector<16x32xf32>
    %633 = vector.extract_strided_slice %532 {offsets = [4, 0], sizes = [1, 32], strides = [1, 1]} : vector<9x32xf32> to vector<1x32xf32>
    %634 = vector.extract_strided_slice %532 {offsets = [5, 0], sizes = [1, 32], strides = [1, 1]} : vector<9x32xf32> to vector<1x32xf32>
    %cst_196 = arith.constant dense<0.000000e+00> : vector<16xf32>
    %635 = vector.multi_reduction <add>, %632, %cst_196 [1] : vector<16x32xf32> to vector<16xf32>
    %636 = vector.shape_cast %635 : vector<16xf32> to vector<16x1xf32>
    %cst_197 = arith.constant 3.200000e+01 : f32
    %637 = vector.broadcast %cst_197 : f32 to vector<16x1xf32>
    %638 = arith.divf %636, %637 : vector<16x1xf32>
    %639 = arith.mulf %632, %632 : vector<16x32xf32>
    %cst_198 = arith.constant dense<0.000000e+00> : vector<16xf32>
    %640 = vector.multi_reduction <add>, %639, %cst_198 [1] : vector<16x32xf32> to vector<16xf32>
    %641 = vector.shape_cast %640 : vector<16xf32> to vector<16x1xf32>
    %cst_199 = arith.constant 3.200000e+01 : f32
    %642 = vector.broadcast %cst_199 : f32 to vector<16x1xf32>
    %643 = arith.divf %641, %642 : vector<16x1xf32>
    %644 = arith.mulf %638, %638 : vector<16x1xf32>
    %645 = arith.subf %643, %644 : vector<16x1xf32>
    %646 = vector.broadcast %638 : vector<16x1xf32> to vector<16x32xf32>
    %647 = arith.subf %632, %646 : vector<16x32xf32>
    %cst_200 = arith.constant 9.99999974E-6 : f32
    %648 = vector.broadcast %cst_200 : f32 to vector<16x1xf32>
    %649 = arith.addf %645, %648 : vector<16x1xf32>
    %650 = math.rsqrt %649 : vector<16x1xf32>
    %651 = vector.broadcast %650 : vector<16x1xf32> to vector<16x32xf32>
    %652 = arith.mulf %647, %651 : vector<16x32xf32>
    %653 = vector.broadcast %633 : vector<1x32xf32> to vector<16x32xf32>
    %654 = arith.mulf %652, %653 : vector<16x32xf32>
    %655 = vector.broadcast %634 : vector<1x32xf32> to vector<16x32xf32>
    %656 = arith.addf %654, %655 : vector<16x32xf32>
    %657 = arith.truncf %656 : vector<16x32xf32> to vector<16x32xbf16>
    %cst_201 = arith.constant dense<0.000000e+00> : vector<16x64xf32>
    %658 = tpu.matmul %657, %528, %cst_201 {dimension_numbers = #tpu.dot_dimension_numbers<[1], [0], [0], [1], [0, 0, 1, 1], [], []>} : vector<16x32xbf16>, vector<32x64xbf16>, vector<16x64xf32> -> vector<16x64xf32>
    %659 = vector.broadcast %534 : vector<1x64xf32> to vector<16x64xf32>
    %660 = arith.addf %658, %659 : vector<16x64xf32>
    %cst_202 = arith.constant 0.000000e+00 : f32
    %661 = vector.broadcast %cst_202 : f32 to vector<16x64xf32>
    %662 = arith.maximumf %660, %661 : vector<16x64xf32>
    %663 = arith.truncf %662 : vector<16x64xf32> to vector<16x64xbf16>
    %cst_203 = arith.constant dense<0.000000e+00> : vector<16x32xf32>
    %664 = tpu.matmul %663, %530, %cst_203 {dimension_numbers = #tpu.dot_dimension_numbers<[1], [0], [0], [1], [0, 0, 1, 1], [], []>} : vector<16x64xbf16>, vector<64x32xbf16>, vector<16x32xf32> -> vector<16x32xf32>
    %665 = vector.extract_strided_slice %532 {offsets = [6, 0], sizes = [1, 32], strides = [1, 1]} : vector<9x32xf32> to vector<1x32xf32>
    %666 = vector.broadcast %665 : vector<1x32xf32> to vector<16x32xf32>
    %667 = arith.addf %664, %666 : vector<16x32xf32>
    %668 = arith.addf %656, %667 : vector<16x32xf32>
    %669 = vector.extract_strided_slice %532 {offsets = [7, 0], sizes = [1, 32], strides = [1, 1]} : vector<9x32xf32> to vector<1x32xf32>
    %670 = vector.extract_strided_slice %532 {offsets = [8, 0], sizes = [1, 32], strides = [1, 1]} : vector<9x32xf32> to vector<1x32xf32>
    %cst_204 = arith.constant dense<0.000000e+00> : vector<16xf32>
    %671 = vector.multi_reduction <add>, %668, %cst_204 [1] : vector<16x32xf32> to vector<16xf32>
    %672 = vector.shape_cast %671 : vector<16xf32> to vector<16x1xf32>
    %cst_205 = arith.constant 3.200000e+01 : f32
    %673 = vector.broadcast %cst_205 : f32 to vector<16x1xf32>
    %674 = arith.divf %672, %673 : vector<16x1xf32>
    %675 = arith.mulf %668, %668 : vector<16x32xf32>
    %cst_206 = arith.constant dense<0.000000e+00> : vector<16xf32>
    %676 = vector.multi_reduction <add>, %675, %cst_206 [1] : vector<16x32xf32> to vector<16xf32>
    %677 = vector.shape_cast %676 : vector<16xf32> to vector<16x1xf32>
    %cst_207 = arith.constant 3.200000e+01 : f32
    %678 = vector.broadcast %cst_207 : f32 to vector<16x1xf32>
    %679 = arith.divf %677, %678 : vector<16x1xf32>
    %680 = arith.mulf %674, %674 : vector<16x1xf32>
    %681 = arith.subf %679, %680 : vector<16x1xf32>
    %682 = vector.broadcast %674 : vector<16x1xf32> to vector<16x32xf32>
    %683 = arith.subf %668, %682 : vector<16x32xf32>
    %cst_208 = arith.constant 9.99999974E-6 : f32
    %684 = vector.broadcast %cst_208 : f32 to vector<16x1xf32>
    %685 = arith.addf %681, %684 : vector<16x1xf32>
    %686 = math.rsqrt %685 : vector<16x1xf32>
    %687 = vector.broadcast %686 : vector<16x1xf32> to vector<16x32xf32>
    %688 = arith.mulf %683, %687 : vector<16x32xf32>
    %689 = vector.broadcast %669 : vector<1x32xf32> to vector<16x32xf32>
    %690 = arith.mulf %688, %689 : vector<16x32xf32>
    %691 = vector.broadcast %670 : vector<1x32xf32> to vector<16x32xf32>
    %692 = arith.addf %690, %691 : vector<16x32xf32>
    %c0_209 = arith.constant 0 : index
    %c0_210 = arith.constant 0 : index
    %693 = vector.load %arg8[%c0_209, %c0_210] : memref<16x32xf32, #tpu.memory_space<vmem>>, vector<16x32xf32>
    tpu.vector_store %arg8[%c0_209, %c0_210], %692 {strides = array<i32>} : memref<16x32xf32, #tpu.memory_space<vmem>>, vector<16x32xf32>,
    return
  }
}

</mosaic_0001>

<llo_original>
// kernel: common_transformer_forward.1
$region0: #{common_transformer_forward.1}
  #allocation0 [shape = 'u32[]', space=smem, size = 0x4, offset = 0x4, fixed_abs, tag = 'smem constant byte address 0x4 - core index']
  #allocation1 [shape = 'u32[144,128]{1,0:T(1,128)}', space=vmem, size = 0x12000, scoped, tag = 'internal scratch']
  %s0 = inlined_call_operand.hbm [shape: f32[16,32], index: 0, kind: input, shape index: {}]
  %s1 = inlined_call_operand.vmem [shape: f32[2,16,16], index: 1, kind: input, shape index: {}]
  %s2 = inlined_call_operand.vmem [shape: bf16[2,32,96], index: 2, kind: input, shape index: {}]
  %s3 = inlined_call_operand.vmem [shape: bf16[2,32,32], index: 3, kind: input, shape index: {}]
  %s4 = inlined_call_operand.vmem [shape: bf16[2,32,64], index: 4, kind: input, shape index: {}]
  %s5 = inlined_call_operand.vmem [shape: bf16[2,64,32], index: 5, kind: input, shape index: {}]
  %s6 = inlined_call_operand.vmem [shape: f32[2,9,32], index: 6, kind: input, shape index: {}]
  %s7 = inlined_call_operand.hbm [shape: f32[2,1,64], index: 7, kind: input, shape index: {}]
  %s8 = inlined_call_operand.hbm [shape: f32[16,32], index: 8, kind: output, shape index: {}]
  %s9 = sld [smem:[#allocation0]]
  $region50: #{common_transformer_forward.1} parent=0
    _
  %s11 = ssub.s32 1, %s9
  %s12 = scalar_select 0, %s11, %s9
  $region1: #{common_transformer_forward.1} parent=0
    #allocation2 [shape = 'u8[8192]{0}', space=vmem, size = 0x2000, scoped, tag = 'input window, operand 0, single buffered']
    #allocation3 [shape = 's32[1]{0}', space=sflag, size = 0x4, scoped, tag = 'scoped memory for common_transformer_forward.1']
    #allocation4 [shape = 's32[1]{0}', space=sflag, size = 0x4, scoped, tag = 'scoped memory for common_transformer_forward.1']
    #allocation5 [shape = 'u8[1024]{0}', space=vmem, size = 0x400, scoped, tag = 'input window, operand 7, single buffered']
    #allocation6 [shape = 's32[1]{0}', space=sflag, size = 0x4, scoped, tag = 'scoped memory for common_transformer_forward.1']
    #allocation7 [shape = 'u8[8192]{0}', space=vmem, size = 0x2000, scoped, tag = 'output window, operand 0, single buffered']
    %13 = vsyncpa [#allocation3], 0
    %14 = vsyncpa [#allocation6], 0
    %15 = vsyncpa [#allocation4], 0
    // Predicated region
    $region2: #{common_transformer_forward.1} parent=1 // pred_check
      _
    $region3: #{common_transformer_forward.1} parent=1 // pred_check_branch
      %17 = sbr.rel (0) target = $region5
    $region4: #{common_transformer_forward.1} parent=1 // pred_region
      %s19 = ssub.s32 256, 256
      %20 = vsyncadd [#allocation3], %s19
      %s21 = sshll.u32 [#allocation2], 4
      %s22 = int_to_ptr.vmem [resolvable:$true] %s21
      %27 = dma.hbm_to_vmem [thread:$0]  %s0, 256, %s22, [#allocation3], 128, 128, 8
    $region5: #{common_transformer_forward.1} parent=1 // pred_fallthru
      _
    // Predicated region
    $region6: #{common_transformer_forward.1} parent=1 // pred_check
      _
    $region7: #{common_transformer_forward.1} parent=1 // pred_check_branch
      %29 = sbr.rel (0) target = $region9
    $region8: #{common_transformer_forward.1} parent=1 // pred_region
      _
    $region9: #{common_transformer_forward.1} parent=1 // pred_fallthru
      _
    // Predicated region
    $region10: #{common_transformer_forward.1} parent=1 // pred_check
      _
    $region11: #{common_transformer_forward.1} parent=1 // pred_check_branch
      %31 = sbr.rel (0) target = $region13
    $region12: #{common_transformer_forward.1} parent=1 // pred_region
      _
    $region13: #{common_transformer_forward.1} parent=1 // pred_fallthru
      _
    // Predicated region
    $region14: #{common_transformer_forward.1} parent=1 // pred_check
      _
    $region15: #{common_transformer_forward.1} parent=1 // pred_check_branch
      %33 = sbr.rel (0) target = $region17
    $region16: #{common_transformer_forward.1} parent=1 // pred_region
      _
    $region17: #{common_transformer_forward.1} parent=1 // pred_fallthru
      _
    // Predicated region
    $region18: #{common_transformer_forward.1} parent=1 // pred_check
      _
    $region19: #{common_transformer_forward.1} parent=1 // pred_check_branch
      %35 = sbr.rel (0) target = $region21
    $region20: #{common_transformer_forward.1} parent=1 // pred_region
      _
    $region21: #{common_transformer_forward.1} parent=1 // pred_fallthru
      _
    // Predicated region
    $region22: #{common_transformer_forward.1} parent=1 // pred_check
      _
    $region23: #{common_transformer_forward.1} parent=1 // pred_check_branch
      %37 = sbr.rel (0) target = $region25
    $region24: #{common_transformer_forward.1} parent=1 // pred_region
      _
    $region25: #{common_transformer_forward.1} parent=1 // pred_fallthru
      _
    // Predicated region
    $region26: #{common_transformer_forward.1} parent=1 // pred_check
      _
    $region27: #{common_transformer_forward.1} parent=1 // pred_check_branch
      %39 = sbr.rel (0) target = $region29
    $region28: #{common_transformer_forward.1} parent=1 // pred_region
      _
    $region29: #{common_transformer_forward.1} parent=1 // pred_fallthru
      _
    // Predicated region
    $region30: #{common_transformer_forward.1} parent=1 // pred_check
      _
    $region31: #{common_transformer_forward.1} parent=1 // pred_check_branch
      %41 = sbr.rel (0) target = $region33
    $region32: #{common_transformer_forward.1} parent=1 // pred_region
      %s43 = ssub.s32 32, 32
      %44 = vsyncadd [#allocation6], %s43
      %s45 = sshll.u32 [#allocation5], 4
      %s46 = int_to_ptr.vmem [resolvable:$true] %s45
      %51 = dma.hbm_to_vmem [thread:$0]  %s7, 32, %s46, [#allocation6], 16, 16, 1
    $region33: #{common_transformer_forward.1} parent=1 // pred_fallthru
      _
    // Predicated region
    $region34: #{common_transformer_forward.1} parent=1 // pred_check
      _
    $region35: #{common_transformer_forward.1} parent=1 // pred_check_branch
      %53 = sbr.rel (0) target = $region37
    $region36: #{common_transformer_forward.1} parent=1 // pred_region
      %54 = dma.done [#allocation3], 256
    $region37: #{common_transformer_forward.1} parent=1 // pred_fallthru
      _
    // Predicated region
    $region38: #{common_transformer_forward.1} parent=1 // pred_check
      _
    $region39: #{common_transformer_forward.1} parent=1 // pred_check_branch
      %56 = sbr.rel (0) target = $region41
    $region40: #{common_transformer_forward.1} parent=1 // pred_region
      %57 = dma.done [#allocation6], 32
    $region41: #{common_transformer_forward.1} parent=1 // pred_fallthru
      _
    %v59 = vld [vmem:[#allocation2] sm:$0xff]
    %v60 = vld [vmem:[#allocation2 + $0x8] sm:$0xff]
    %v61 = vld [vmem:[%s1] sm:$0xff]
    %v62 = vld [vmem:[%s1 + $0x8] sm:$0xff]
    %v63 = vsub.f32 %v61, 1.0
    %v64 = vsub.f32 %v62, 1.0
    %v65 = vmul.f32 %v63, 1e+30
    %v66 = vmul.f32 %v64, 1e+30
    %v67 = vld [vmem:[%s2] sm:$0xf]
    %v68 = vld [vmem:[%s2 + $0x4] sm:$0xf]
    %v69 = vld [vmem:[%s2 + $0x8] sm:$0xf]
    %v70 = vld [vmem:[%s2 + $0xc] sm:$0xf]
    %v71 = vld [vmem:[%s3] sm:$0xf]
    %v72 = vld [vmem:[%s3 + $0x4] sm:$0xf]
    %v73 = vld [vmem:[%s3 + $0x8] sm:$0xf]
    %v74 = vld [vmem:[%s3 + $0xc] sm:$0xf]
    %v75 = vld [vmem:[%s4] sm:$0xf]
    %v76 = vld [vmem:[%s4 + $0x4] sm:$0xf]
    %v77 = vld [vmem:[%s4 + $0x8] sm:$0xf]
    %v78 = vld [vmem:[%s4 + $0xc] sm:$0xf]
    %v79 = vld [vmem:[%s5] sm:$0xf]
    %v80 = vld [vmem:[%s5 + $0x4] sm:$0xf]
    %v81 = vld [vmem:[%s5 + $0x8] sm:$0xf]
    %v82 = vld [vmem:[%s5 + $0xc] sm:$0xf]
    %v83 = vld [vmem:[%s5 + $0x10] sm:$0xf]
    %v84 = vld [vmem:[%s5 + $0x14] sm:$0xf]
    %v85 = vld [vmem:[%s5 + $0x18] sm:$0xf]
    %v86 = vld [vmem:[%s5 + $0x1c] sm:$0xf]
    %v87 = vld [vmem:[%s6] sm:$0xff]
    %v88 = vld [vmem:[%s6 + $0x8] sm:$0x1]
    %v89 = vld [vmem:[#allocation5] sm:$0x1]
    %v90 = vpack.c.bf16 %v60, %v59
    %v95 = vunpack.c.l.b16 %v67
    %v96 = vunpack.c.l.b16 %v68
    %v97 = vunpack.c.l.b16 %v69
    %v98 = vunpack.c.l.b16 %v70
    %v99 = vpack.c.b16 %v96, %v95
    %v100 = vpack.c.b16 %v98, %v97
    %vm103 = vcmask 261120
    %v105 = vsel %vm103, %v90, 0
    %107 = vmatprep.subr.bf16.mxu0 0
    %108 = vmatpush1.bf16.msra.mxu0 %v99
    %109 = vmatprep.subr.bf16.mxu0 0
    %110 = vmatpush1.bf16.msra.mxu0 %v100
    %111 = vmatprep.subr.bf16.mxu0 0
    %112 = vmatpush1.bf16.msra.mxu0 0
    %113 = vmatprep.subr.bf16.mxu0 0
    %114 = vmatpush1.bf16.msra.mxu0 0
    %115 = vmatprep.subr.bf16.mxu0 0
    %116 = vmatpush1.bf16.msra.mxu0 0
    %117 = vmatprep.subr.bf16.mxu0 0
    %118 = vmatpush1.bf16.msra.mxu0 0
    %119 = vmatprep.subr.bf16.mxu0 0
    %120 = vmatpush1.bf16.msra.mxu0 0
    %121 = vmatprep.subr.bf16.mxu0 0
    %122 = vmatpush1.bf16.msra.mxu0 0
    %123 = vmatprep.subr.bf16.mxu0 0
    %124 = vmatpush1.bf16.msra.mxu0 0
    %125 = vmatprep.subr.bf16.mxu0 0
    %126 = vmatpush1.bf16.msra.mxu0 0
    %127 = vmatprep.subr.bf16.mxu0 0
    %128 = vmatpush1.bf16.msra.mxu0 0
    %129 = vmatprep.subr.bf16.mxu0 0
    %130 = vmatpush1.bf16.msra.mxu0 0
    %131 = vmatprep.subr.bf16.mxu0 0
    %132 = vmatpush1.bf16.msra.mxu0 0
    %133 = vmatprep.subr.bf16.mxu0 0
    %134 = vmatpush1.bf16.msra.mxu0 0
    %135 = vmatprep.subr.bf16.mxu0 0
    %136 = vmatpush1.bf16.msra.mxu0 0
    %137 = vmatprep.subr.bf16.mxu0 0
    %138 = vmatpush1.bf16.msra.mxu0 0
    %139 = vmatprep.mubr.bf16.mxu0 0
    %140 = vmatmul.mubr.bf16.gmra.mrb[0].mxu0 %v105
    %v141 = vpop.f32.mrb[0].mxu0
    %v142 = vadd.f32 0.0, %v141
    %v143 = vpop.f32.mrb[0].mxu0
    %v144 = vpop.f32.mrb[0].mxu0
    %v145 = vadd.f32 0.0, %v144
    %v146 = vpop.f32.mrb[0].mxu0
    %147 = vdwg.mxu0
    %v148 = vlaneseq
    %v149 = vshrl.u32 %v148, 7
    %v150 = vsub.s32 0, %v149
    %v151 = vrot.slane %v87, %v150
    %v152 = vadd.f32 %v142, %v151
    %v153 = vadd.f32 %v145, %v151
    %v154 = vmul.f32 %v152, 0.35355338
    %v155 = vmul.f32 %v153, 0.35355338
    %v156 = vpack.c.bf16 %v155, %v154
    %v157 = vlaneseq
    %v158 = vshrl.u32 %v157, 7
    %v159 = vsub.s32 1, %v158
    %v160 = vrot.slane %v87, %v159
    %162 = vrot.lane.b32.xlu0 %v160, 32
    %v163 = vpop.permute.xlu0 %162
    %v165 = vadd.f32 %v142, %v163
    %v166 = vadd.f32 %v145, %v163
    %v167 = vpack.c.bf16 %v166, %v165
    %v168 = vlaneseq
    %v169 = vshrl.u32 %v168, 7
    %v170 = vsub.s32 2, %v169
    %v171 = vrot.slane %v87, %v170
    %173 = vrot.lane.b32.xlu0 %v171, 64
    %v174 = vpop.permute.xlu0 %173
    %v176 = vadd.f32 %v142, %v174
    %v177 = vadd.f32 %v145, %v174
    %v178 = vpack.c.bf16 %v177, %v176
    %180 = vrot.lane.b32.xlu0 %v167, 96
    %v181 = vpop.permute.xlu0 %180
    %vm182 = vcmask 64512
    %v184 = vsel %vm182, %v156, 0
    %v187 = vsel %vm182, %v181, 0
    %189 = vmatprep.subr.bf16.mxu0 0
    %190 = vmatpush1.bf16.xpose.msra.mxu0 %v187
    %191 = vmatprep.subr.bf16.mxu0 0
    %192 = vmatpush1.bf16.xpose.msra.mxu0 0
    %193 = vmatprep.subr.bf16.mxu0 0
    %194 = vmatpush1.bf16.xpose.msra.mxu0 0
    %195 = vmatprep.subr.bf16.mxu0 0
    %196 = vmatpush1.bf16.xpose.msra.mxu0 0
    %197 = vmatprep.subr.bf16.mxu0 0
    %198 = vmatpush1.bf16.xpose.msra.mxu0 0
    %199 = vmatprep.subr.bf16.mxu0 0
    %200 = vmatpush1.bf16.xpose.msra.mxu0 0
    %201 = vmatprep.subr.bf16.mxu0 0
    %202 = vmatpush1.bf16.xpose.msra.mxu0 0
    %203 = vmatprep.subr.bf16.mxu0 0
    %204 = vmatpush1.bf16.xpose.msra.mxu0 0
    %205 = vmatprep.subr.bf16.mxu0 0
    %206 = vmatpush1.bf16.xpose.msra.mxu0 0
    %207 = vmatprep.subr.bf16.mxu0 0
    %208 = vmatpush1.bf16.xpose.msra.mxu0 0
    %209 = vmatprep.subr.bf16.mxu0 0
    %210 = vmatpush1.bf16.xpose.msra.mxu0 0
    %211 = vmatprep.subr.bf16.mxu0 0
    %212 = vmatpush1.bf16.xpose.msra.mxu0 0
    %213 = vmatprep.subr.bf16.mxu0 0
    %214 = vmatpush1.bf16.xpose.msra.mxu0 0
    %215 = vmatprep.subr.bf16.mxu0 0
    %216 = vmatpush1.bf16.xpose.msra.mxu0 0
    %217 = vmatprep.subr.bf16.mxu0 0
    %218 = vmatpush1.bf16.xpose.msra.mxu0 0
    %219 = vmatprep.subr.bf16.mxu0 0
    %220 = vmatpush1.bf16.xpose.msra.mxu0 0
    %221 = vmatprep.mubr.bf16.mxu0 0
    %222 = vmatmul.mubr.bf16.gmra.mrb[0].mxu0 %v184
    %v223 = vpop.f32.mrb[0].mxu0
    %v224 = vadd.f32 %v65, %v223
    %v225 = vpop.f32.mrb[0].mxu0
    %v226 = vpop.f32.mrb[0].mxu0
    %v227 = vadd.f32 %v66, %v226
    %v228 = vpop.f32.mrb[0].mxu0
    %229 = vdwg.mxu0
    %vm230 = vcmask 130048
    %v231 = vsel %vm230, %v224, -inf
    %232 = vmax.xlane.f32.xlu0 %v231
    %v233 = vpop.xlane.xlu0 %232
    %v234 = vsel %vm230, %v227, -inf
    %235 = vmax.xlane.f32.xlu0 %v234
    %v236 = vpop.xlane.xlu0 %235
    %v237 = vsub.f32 %v224, %v233
    %v238 = vsub.f32 %v227, %v236
    %v239 = vmul.f32 %v237, 1.442695
    %v240 = vpow.pop %v239
    %v241 = vmul.f32 %v238, 1.442695
    %v242 = vpow.pop %v241
    %v243 = vmul.f32 %v240, %v61
    %v244 = vmul.f32 %v242, %v62
    %v245 = vsel %vm230, %v243, 0.0
    %246 = vadd.xlane.f32.xlu0 %v245
    %v247 = vpop.xlane.xlu0 %246
    %v248 = vsel %vm230, %v244, 0.0
    %249 = vadd.xlane.f32.xlu0 %v248
    %v250 = vpop.xlane.xlu0 %249
    %v251 = vrcp.pop %v247
    %v252 = vrcp.pop %v250
    %v253 = vmul.f32 %v243, %v251
    %v254 = vmul.f32 %v244, %v252
    %v255 = vpack.c.bf16 %v254, %v253
    %257 = vrot.lane.b32.xlu0 %v178, 64
    %v258 = vpop.permute.xlu0 %257
    %v261 = vsel %vm230, %v255, 0
    %263 = vmatprep.subr.bf16.mxu0 0
    %264 = vmatpush1.bf16.msra.mxu0 %v258
    %265 = vmatprep.subr.bf16.mxu0 0
    %266 = vmatpush1.bf16.msra.mxu0 0
    %267 = vmatprep.subr.bf16.mxu0 0
    %268 = vmatpush1.bf16.msra.mxu0 0
    %269 = vmatprep.subr.bf16.mxu0 0
    %270 = vmatpush1.bf16.msra.mxu0 0
    %271 = vmatprep.subr.bf16.mxu0 0
    %272 = vmatpush1.bf16.msra.mxu0 0
    %273 = vmatprep.subr.bf16.mxu0 0
    %274 = vmatpush1.bf16.msra.mxu0 0
    %275 = vmatprep.subr.bf16.mxu0 0
    %276 = vmatpush1.bf16.msra.mxu0 0
    %277 = vmatprep.subr.bf16.mxu0 0
    %278 = vmatpush1.bf16.msra.mxu0 0
    %279 = vmatprep.subr.bf16.mxu0 0
    %280 = vmatpush1.bf16.msra.mxu0 0
    %281 = vmatprep.subr.bf16.mxu0 0
    %282 = vmatpush1.bf16.msra.mxu0 0
    %283 = vmatprep.subr.bf16.mxu0 0
    %284 = vmatpush1.bf16.msra.mxu0 0
    %285 = vmatprep.subr.bf16.mxu0 0
    %286 = vmatpush1.bf16.msra.mxu0 0
    %287 = vmatprep.subr.bf16.mxu0 0
    %288 = vmatpush1.bf16.msra.mxu0 0
    %289 = vmatprep.subr.bf16.mxu0 0
    %290 = vmatpush1.bf16.msra.mxu0 0
    %291 = vmatprep.subr.bf16.mxu0 0
    %292 = vmatpush1.bf16.msra.mxu0 0
    %293 = vmatprep.subr.bf16.mxu0 0
    %294 = vmatpush1.bf16.msra.mxu0 0
    %295 = vmatprep.mubr.bf16.mxu0 0
    %296 = vmatmul.mubr.bf16.gmra.mrb[0].mxu0 %v261
    %v297 = vpop.f32.mrb[0].mxu0
    %v298 = vadd.f32 0.0, %v297
    %v299 = vpop.f32.mrb[0].mxu0
    %v300 = vpop.f32.mrb[0].mxu0
    %v301 = vadd.f32 0.0, %v300
    %v302 = vpop.f32.mrb[0].mxu0
    %303 = vdwg.mxu0
    %305 = vrot.lane.b32.xlu0 %v156, 120
    %v306 = vpop.permute.xlu0 %305
    %307 = vrot.lane.b32.xlu0 %v167, 88
    %v308 = vpop.permute.xlu0 %307
    %v310 = vsel %vm182, %v306, 0
    %v313 = vsel %vm182, %v308, 0
    %315 = vmatprep.subr.bf16.mxu0 0
    %316 = vmatpush1.bf16.xpose.msra.mxu0 %v313
    %317 = vmatprep.subr.bf16.mxu0 0
    %318 = vmatpush1.bf16.xpose.msra.mxu0 0
    %319 = vmatprep.subr.bf16.mxu0 0
    %320 = vmatpush1.bf16.xpose.msra.mxu0 0
    %321 = vmatprep.subr.bf16.mxu0 0
    %322 = vmatpush1.bf16.xpose.msra.mxu0 0
    %323 = vmatprep.subr.bf16.mxu0 0
    %324 = vmatpush1.bf16.xpose.msra.mxu0 0
    %325 = vmatprep.subr.bf16.mxu0 0
    %326 = vmatpush1.bf16.xpose.msra.mxu0 0
    %327 = vmatprep.subr.bf16.mxu0 0
    %328 = vmatpush1.bf16.xpose.msra.mxu0 0
    %329 = vmatprep.subr.bf16.mxu0 0
    %330 = vmatpush1.bf16.xpose.msra.mxu0 0
    %331 = vmatprep.subr.bf16.mxu0 0
    %332 = vmatpush1.bf16.xpose.msra.mxu0 0
    %333 = vmatprep.subr.bf16.mxu0 0
    %334 = vmatpush1.bf16.xpose.msra.mxu0 0
    %335 = vmatprep.subr.bf16.mxu0 0
    %336 = vmatpush1.bf16.xpose.msra.mxu0 0
    %337 = vmatprep.subr.bf16.mxu0 0
    %338 = vmatpush1.bf16.xpose.msra.mxu0 0
    %339 = vmatprep.subr.bf16.mxu0 0
    %340 = vmatpush1.bf16.xpose.msra.mxu0 0
    %341 = vmatprep.subr.bf16.mxu0 0
    %342 = vmatpush1.bf16.xpose.msra.mxu0 0
    %343 = vmatprep.subr.bf16.mxu0 0
    %344 = vmatpush1.bf16.xpose.msra.mxu0 0
    %345 = vmatprep.subr.bf16.mxu0 0
    %346 = vmatpush1.bf16.xpose.msra.mxu0 0
    %347 = vmatprep.mubr.bf16.mxu0 0
    %348 = vmatmul.mubr.bf16.gmra.mrb[0].mxu0 %v310
    %v349 = vpop.f32.mrb[0].mxu0
    %v350 = vadd.f32 %v65, %v349
    %v351 = vpop.f32.mrb[0].mxu0
    %v352 = vpop.f32.mrb[0].mxu0
    %v353 = vadd.f32 %v66, %v352
    %v354 = vpop.f32.mrb[0].mxu0
    %355 = vdwg.mxu0
    %v356 = vsel %vm230, %v350, -inf
    %357 = vmax.xlane.f32.xlu0 %v356
    %v358 = vpop.xlane.xlu0 %357
    %v359 = vsel %vm230, %v353, -inf
    %360 = vmax.xlane.f32.xlu0 %v359
    %v361 = vpop.xlane.xlu0 %360
    %v362 = vsub.f32 %v350, %v358
    %v363 = vsub.f32 %v353, %v361
    %v364 = vmul.f32 %v362, 1.442695
    %v365 = vpow.pop %v364
    %v366 = vmul.f32 %v363, 1.442695
    %v367 = vpow.pop %v366
    %v368 = vmul.f32 %v365, %v61
    %v369 = vmul.f32 %v367, %v62
    %v370 = vsel %vm230, %v368, 0.0
    %371 = vadd.xlane.f32.xlu0 %v370
    %v372 = vpop.xlane.xlu0 %371
    %v373 = vsel %vm230, %v369, 0.0
    %374 = vadd.xlane.f32.xlu0 %v373
    %v375 = vpop.xlane.xlu0 %374
    %v376 = vrcp.pop %v372
    %v377 = vrcp.pop %v375
    %v378 = vmul.f32 %v368, %v376
    %v379 = vmul.f32 %v369, %v377
    %v380 = vpack.c.bf16 %v379, %v378
    %381 = vrot.lane.b32.xlu0 %v178, 56
    %v382 = vpop.permute.xlu0 %381
    %v385 = vsel %vm230, %v380, 0
    %387 = vmatprep.subr.bf16.mxu0 0
    %388 = vmatpush1.bf16.msra.mxu0 %v382
    %389 = vmatprep.subr.bf16.mxu0 0
    %390 = vmatpush1.bf16.msra.mxu0 0
    %391 = vmatprep.subr.bf16.mxu0 0
    %392 = vmatpush1.bf16.msra.mxu0 0
    %393 = vmatprep.subr.bf16.mxu0 0
    %394 = vmatpush1.bf16.msra.mxu0 0
    %395 = vmatprep.subr.bf16.mxu0 0
    %396 = vmatpush1.bf16.msra.mxu0 0
    %397 = vmatprep.subr.bf16.mxu0 0
    %398 = vmatpush1.bf16.msra.mxu0 0
    %399 = vmatprep.subr.bf16.mxu0 0
    %400 = vmatpush1.bf16.msra.mxu0 0
    %401 = vmatprep.subr.bf16.mxu0 0
    %402 = vmatpush1.bf16.msra.mxu0 0
    %403 = vmatprep.subr.bf16.mxu0 0
    %404 = vmatpush1.bf16.msra.mxu0 0
    %405 = vmatprep.subr.bf16.mxu0 0
    %406 = vmatpush1.bf16.msra.mxu0 0
    %407 = vmatprep.subr.bf16.mxu0 0
    %408 = vmatpush1.bf16.msra.mxu0 0
    %409 = vmatprep.subr.bf16.mxu0 0
    %410 = vmatpush1.bf16.msra.mxu0 0
    %411 = vmatprep.subr.bf16.mxu0 0
    %412 = vmatpush1.bf16.msra.mxu0 0
    %413 = vmatprep.subr.bf16.mxu0 0
    %414 = vmatpush1.bf16.msra.mxu0 0
    %415 = vmatprep.subr.bf16.mxu0 0
    %416 = vmatpush1.bf16.msra.mxu0 0
    %417 = vmatprep.subr.bf16.mxu0 0
    %418 = vmatpush1.bf16.msra.mxu0 0
    %419 = vmatprep.mubr.bf16.mxu0 0
    %420 = vmatmul.mubr.bf16.gmra.mrb[0].mxu0 %v385
    %v421 = vpop.f32.mrb[0].mxu0
    %v422 = vadd.f32 0.0, %v421
    %v423 = vpop.f32.mrb[0].mxu0
    %v424 = vpop.f32.mrb[0].mxu0
    %v425 = vadd.f32 0.0, %v424
    %v426 = vpop.f32.mrb[0].mxu0
    %427 = vdwg.mxu0
    %428 = vrot.lane.b32.xlu0 %v156, 112
    %v429 = vpop.permute.xlu0 %428
    %430 = vrot.lane.b32.xlu0 %v167, 80
    %v431 = vpop.permute.xlu0 %430
    %v433 = vsel %vm182, %v429, 0
    %v436 = vsel %vm182, %v431, 0
    %438 = vmatprep.subr.bf16.mxu0 0
    %439 = vmatpush1.bf16.xpose.msra.mxu0 %v436
    %440 = vmatprep.subr.bf16.mxu0 0
    %441 = vmatpush1.bf16.xpose.msra.mxu0 0
    %442 = vmatprep.subr.bf16.mxu0 0
    %443 = vmatpush1.bf16.xpose.msra.mxu0 0
    %444 = vmatprep.subr.bf16.mxu0 0
    %445 = vmatpush1.bf16.xpose.msra.mxu0 0
    %446 = vmatprep.subr.bf16.mxu0 0
    %447 = vmatpush1.bf16.xpose.msra.mxu0 0
    %448 = vmatprep.subr.bf16.mxu0 0
    %449 = vmatpush1.bf16.xpose.msra.mxu0 0
    %450 = vmatprep.subr.bf16.mxu0 0
    %451 = vmatpush1.bf16.xpose.msra.mxu0 0
    %452 = vmatprep.subr.bf16.mxu0 0
    %453 = vmatpush1.bf16.xpose.msra.mxu0 0
    %454 = vmatprep.subr.bf16.mxu0 0
    %455 = vmatpush1.bf16.xpose.msra.mxu0 0
    %456 = vmatprep.subr.bf16.mxu0 0
    %457 = vmatpush1.bf16.xpose.msra.mxu0 0
    %458 = vmatprep.subr.bf16.mxu0 0
    %459 = vmatpush1.bf16.xpose.msra.mxu0 0
    %460 = vmatprep.subr.bf16.mxu0 0
    %461 = vmatpush1.bf16.xpose.msra.mxu0 0
    %462 = vmatprep.subr.bf16.mxu0 0
    %463 = vmatpush1.bf16.xpose.msra.mxu0 0
    %464 = vmatprep.subr.bf16.mxu0 0
    %465 = vmatpush1.bf16.xpose.msra.mxu0 0
    %466 = vmatprep.subr.bf16.mxu0 0
    %467 = vmatpush1.bf16.xpose.msra.mxu0 0
    %468 = vmatprep.subr.bf16.mxu0 0
    %469 = vmatpush1.bf16.xpose.msra.mxu0 0
    %470 = vmatprep.mubr.bf16.mxu0 0
    %471 = vmatmul.mubr.bf16.gmra.mrb[0].mxu0 %v433
    %v472 = vpop.f32.mrb[0].mxu0
    %v473 = vadd.f32 %v65, %v472
    %v474 = vpop.f32.mrb[0].mxu0
    %v475 = vpop.f32.mrb[0].mxu0
    %v476 = vadd.f32 %v66, %v475
    %v477 = vpop.f32.mrb[0].mxu0
    %478 = vdwg.mxu0
    %v479 = vsel %vm230, %v473, -inf
    %480 = vmax.xlane.f32.xlu0 %v479
    %v481 = vpop.xlane.xlu0 %480
    %v482 = vsel %vm230, %v476, -inf
    %483 = vmax.xlane.f32.xlu0 %v482
    %v484 = vpop.xlane.xlu0 %483
    %v485 = vsub.f32 %v473, %v481
    %v486 = vsub.f32 %v476, %v484
    %v487 = vmul.f32 %v485, 1.442695
    %v488 = vpow.pop %v487
    %v489 = vmul.f32 %v486, 1.442695
    %v490 = vpow.pop %v489
    %v491 = vmul.f32 %v488, %v61
    %v492 = vmul.f32 %v490, %v62
    %v493 = vsel %vm230, %v491, 0.0
    %494 = vadd.xlane.f32.xlu0 %v493
    %v495 = vpop.xlane.xlu0 %494
    %v496 = vsel %vm230, %v492, 0.0
    %497 = vadd.xlane.f32.xlu0 %v496
    %v498 = vpop.xlane.xlu0 %497
    %v499 = vrcp.pop %v495
    %v500 = vrcp.pop %v498
    %v501 = vmul.f32 %v491, %v499
    %v502 = vmul.f32 %v492, %v500
    %v503 = vpack.c.bf16 %v502, %v501
    %504 = vrot.lane.b32.xlu0 %v178, 48
    %v505 = vpop.permute.xlu0 %504
    %v508 = vsel %vm230, %v503, 0
    %510 = vmatprep.subr.bf16.mxu0 0
    %511 = vmatpush1.bf16.msra.mxu0 %v505
    %512 = vmatprep.subr.bf16.mxu0 0
    %513 = vmatpush1.bf16.msra.mxu0 0
    %514 = vmatprep.subr.bf16.mxu0 0
    %515 = vmatpush1.bf16.msra.mxu0 0
    %516 = vmatprep.subr.bf16.mxu0 0
    %517 = vmatpush1.bf16.msra.mxu0 0
    %518 = vmatprep.subr.bf16.mxu0 0
    %519 = vmatpush1.bf16.msra.mxu0 0
    %520 = vmatprep.subr.bf16.mxu0 0
    %521 = vmatpush1.bf16.msra.mxu0 0
    %522 = vmatprep.subr.bf16.mxu0 0
    %523 = vmatpush1.bf16.msra.mxu0 0
    %524 = vmatprep.subr.bf16.mxu0 0
    %525 = vmatpush1.bf16.msra.mxu0 0
    %526 = vmatprep.subr.bf16.mxu0 0
    %527 = vmatpush1.bf16.msra.mxu0 0
    %528 = vmatprep.subr.bf16.mxu0 0
    %529 = vmatpush1.bf16.msra.mxu0 0
    %530 = vmatprep.subr.bf16.mxu0 0
    %531 = vmatpush1.bf16.msra.mxu0 0
    %532 = vmatprep.subr.bf16.mxu0 0
    %533 = vmatpush1.bf16.msra.mxu0 0
    %534 = vmatprep.subr.bf16.mxu0 0
    %535 = vmatpush1.bf16.msra.mxu0 0
    %536 = vmatprep.subr.bf16.mxu0 0
    %537 = vmatpush1.bf16.msra.mxu0 0
    %538 = vmatprep.subr.bf16.mxu0 0
    %539 = vmatpush1.bf16.msra.mxu0 0
    %540 = vmatprep.subr.bf16.mxu0 0
    %541 = vmatpush1.bf16.msra.mxu0 0
    %542 = vmatprep.mubr.bf16.mxu0 0
    %543 = vmatmul.mubr.bf16.gmra.mrb[0].mxu0 %v508
    %v544 = vpop.f32.mrb[0].mxu0
    %v545 = vadd.f32 0.0, %v544
    %v546 = vpop.f32.mrb[0].mxu0
    %v547 = vpop.f32.mrb[0].mxu0
    %v548 = vadd.f32 0.0, %v547
    %v549 = vpop.f32.mrb[0].mxu0
    %550 = vdwg.mxu0
    %551 = vrot.lane.b32.xlu0 %v156, 104
    %v552 = vpop.permute.xlu0 %551
    %553 = vrot.lane.b32.xlu0 %v167, 72
    %v554 = vpop.permute.xlu0 %553
    %v556 = vsel %vm182, %v552, 0
    %v559 = vsel %vm182, %v554, 0
    %561 = vmatprep.subr.bf16.mxu0 0
    %562 = vmatpush1.bf16.xpose.msra.mxu0 %v559
    %563 = vmatprep.subr.bf16.mxu0 0
    %564 = vmatpush1.bf16.xpose.msra.mxu0 0
    %565 = vmatprep.subr.bf16.mxu0 0
    %566 = vmatpush1.bf16.xpose.msra.mxu0 0
    %567 = vmatprep.subr.bf16.mxu0 0
    %568 = vmatpush1.bf16.xpose.msra.mxu0 0
    %569 = vmatprep.subr.bf16.mxu0 0
    %570 = vmatpush1.bf16.xpose.msra.mxu0 0
    %571 = vmatprep.subr.bf16.mxu0 0
    %572 = vmatpush1.bf16.xpose.msra.mxu0 0
    %573 = vmatprep.subr.bf16.mxu0 0
    %574 = vmatpush1.bf16.xpose.msra.mxu0 0
    %575 = vmatprep.subr.bf16.mxu0 0
    %576 = vmatpush1.bf16.xpose.msra.mxu0 0
    %577 = vmatprep.subr.bf16.mxu0 0
    %578 = vmatpush1.bf16.xpose.msra.mxu0 0
    %579 = vmatprep.subr.bf16.mxu0 0
    %580 = vmatpush1.bf16.xpose.msra.mxu0 0
    %581 = vmatprep.subr.bf16.mxu0 0
    %582 = vmatpush1.bf16.xpose.msra.mxu0 0
    %583 = vmatprep.subr.bf16.mxu0 0
    %584 = vmatpush1.bf16.xpose.msra.mxu0 0
    %585 = vmatprep.subr.bf16.mxu0 0
    %586 = vmatpush1.bf16.xpose.msra.mxu0 0
    %587 = vmatprep.subr.bf16.mxu0 0
    %588 = vmatpush1.bf16.xpose.msra.mxu0 0
    %589 = vmatprep.subr.bf16.mxu0 0
    %590 = vmatpush1.bf16.xpose.msra.mxu0 0
    %591 = vmatprep.subr.bf16.mxu0 0
    %592 = vmatpush1.bf16.xpose.msra.mxu0 0
    %593 = vmatprep.mubr.bf16.mxu0 0
    %594 = vmatmul.mubr.bf16.gmra.mrb[0].mxu0 %v556
    %v595 = vpop.f32.mrb[0].mxu0
    %v596 = vadd.f32 %v65, %v595
    %v597 = vpop.f32.mrb[0].mxu0
    %v598 = vpop.f32.mrb[0].mxu0
    %v599 = vadd.f32 %v66, %v598
    %v600 = vpop.f32.mrb[0].mxu0
    %601 = vdwg.mxu0
    %v602 = vsel %vm230, %v596, -inf
    %603 = vmax.xlane.f32.xlu0 %v602
    %v604 = vpop.xlane.xlu0 %603
    %v605 = vsel %vm230, %v599, -inf
    %606 = vmax.xlane.f32.xlu0 %v605
    %v607 = vpop.xlane.xlu0 %606
    %v608 = vsub.f32 %v596, %v604
    %v609 = vsub.f32 %v599, %v607
    %v610 = vmul.f32 %v608, 1.442695
    %v611 = vpow.pop %v610
    %v612 = vmul.f32 %v609, 1.442695
    %v613 = vpow.pop %v612
    %v614 = vmul.f32 %v611, %v61
    %v615 = vmul.f32 %v613, %v62
    %v616 = vsel %vm230, %v614, 0.0
    %617 = vadd.xlane.f32.xlu0 %v616
    %v618 = vpop.xlane.xlu0 %617
    %v619 = vsel %vm230, %v615, 0.0
    %620 = vadd.xlane.f32.xlu0 %v619
    %v621 = vpop.xlane.xlu0 %620
    %v622 = vrcp.pop %v618
    %v623 = vrcp.pop %v621
    %v624 = vmul.f32 %v614, %v622
    %v625 = vmul.f32 %v615, %v623
    %v626 = vpack.c.bf16 %v625, %v624
    %627 = vrot.lane.b32.xlu0 %v178, 40
    %v628 = vpop.permute.xlu0 %627
    %v631 = vsel %vm230, %v626, 0
    %633 = vmatprep.subr.bf16.mxu0 0
    %634 = vmatpush1.bf16.msra.mxu0 %v628
    %635 = vmatprep.subr.bf16.mxu0 0
    %636 = vmatpush1.bf16.msra.mxu0 0
    %637 = vmatprep.subr.bf16.mxu0 0
    %638 = vmatpush1.bf16.msra.mxu0 0
    %639 = vmatprep.subr.bf16.mxu0 0
    %640 = vmatpush1.bf16.msra.mxu0 0
    %641 = vmatprep.subr.bf16.mxu0 0
    %642 = vmatpush1.bf16.msra.mxu0 0
    %643 = vmatprep.subr.bf16.mxu0 0
    %644 = vmatpush1.bf16.msra.mxu0 0
    %645 = vmatprep.subr.bf16.mxu0 0
    %646 = vmatpush1.bf16.msra.mxu0 0
    %647 = vmatprep.subr.bf16.mxu0 0
    %648 = vmatpush1.bf16.msra.mxu0 0
    %649 = vmatprep.subr.bf16.mxu0 0
    %650 = vmatpush1.bf16.msra.mxu0 0
    %651 = vmatprep.subr.bf16.mxu0 0
    %652 = vmatpush1.bf16.msra.mxu0 0
    %653 = vmatprep.subr.bf16.mxu0 0
    %654 = vmatpush1.bf16.msra.mxu0 0
    %655 = vmatprep.subr.bf16.mxu0 0
    %656 = vmatpush1.bf16.msra.mxu0 0
    %657 = vmatprep.subr.bf16.mxu0 0
    %658 = vmatpush1.bf16.msra.mxu0 0
    %659 = vmatprep.subr.bf16.mxu0 0
    %660 = vmatpush1.bf16.msra.mxu0 0
    %661 = vmatprep.subr.bf16.mxu0 0
    %662 = vmatpush1.bf16.msra.mxu0 0
    %663 = vmatprep.subr.bf16.mxu0 0
    %664 = vmatpush1.bf16.msra.mxu0 0
    %665 = vmatprep.mubr.bf16.mxu0 0
    %666 = vmatmul.mubr.bf16.gmra.mrb[0].mxu0 %v631
    %v667 = vpop.f32.mrb[0].mxu0
    %v668 = vadd.f32 0.0, %v667
    %v669 = vpop.f32.mrb[0].mxu0
    %v670 = vpop.f32.mrb[0].mxu0
    %v671 = vadd.f32 0.0, %v670
    %v672 = vpop.f32.mrb[0].mxu0
    %673 = vdwg.mxu0
    %676 = vrot.lane.b32.xlu0 %v422, 8
    %v677 = vpop.permute.xlu0 %676
    %678 = vrot.lane.b32.xlu0 %v425, 8
    %v679 = vpop.permute.xlu0 %678
    %684 = vrot.lane.b32.xlu0 %v545, 16
    %v685 = vpop.permute.xlu0 %684
    %686 = vrot.lane.b32.xlu0 %v548, 16
    %v687 = vpop.permute.xlu0 %686
    %692 = vrot.lane.b32.xlu0 %v668, 24
    %v693 = vpop.permute.xlu0 %692
    %694 = vrot.lane.b32.xlu0 %v671, 24
    %v695 = vpop.permute.xlu0 %694
    %v698 = vsel %vm182, %v298, %v677
    %v699 = vsel %vm182, %v301, %v679
    %v700 = vsel %vm230, %v698, %v685
    %v701 = vsel %vm230, %v699, %v687
    %vm702 = vcmask 195584
    %v703 = vsel %vm702, %v700, %v693
    %v704 = vsel %vm702, %v701, %v695
    %v705 = vpack.c.bf16 %v704, %v703
    %v706 = vlaneseq
    %v707 = vshrl.u32 %v706, 7
    %v708 = vsub.s32 3, %v707
    %v709 = vrot.slane %v87, %v708
    %v714 = vunpack.c.l.b16 %v71
    %v715 = vunpack.c.l.b16 %v72
    %v716 = vunpack.c.l.b16 %v73
    %v717 = vunpack.c.l.b16 %v74
    %v718 = vpack.c.b16 %v715, %v714
    %v719 = vpack.c.b16 %v717, %v716
    %v723 = vsel %vm103, %v705, 0
    %725 = vmatprep.subr.bf16.mxu0 0
    %726 = vmatpush1.bf16.msra.mxu0 %v718
    %727 = vmatprep.subr.bf16.mxu0 0
    %728 = vmatpush1.bf16.msra.mxu0 %v719
    %729 = vmatprep.subr.bf16.mxu0 0
    %730 = vmatpush1.bf16.msra.mxu0 0
    %731 = vmatprep.subr.bf16.mxu0 0
    %732 = vmatpush1.bf16.msra.mxu0 0
    %733 = vmatprep.subr.bf16.mxu0 0
    %734 = vmatpush1.bf16.msra.mxu0 0
    %735 = vmatprep.subr.bf16.mxu0 0
    %736 = vmatpush1.bf16.msra.mxu0 0
    %737 = vmatprep.subr.bf16.mxu0 0
    %738 = vmatpush1.bf16.msra.mxu0 0
    %739 = vmatprep.subr.bf16.mxu0 0
    %740 = vmatpush1.bf16.msra.mxu0 0
    %741 = vmatprep.subr.bf16.mxu0 0
    %742 = vmatpush1.bf16.msra.mxu0 0
    %743 = vmatprep.subr.bf16.mxu0 0
    %744 = vmatpush1.bf16.msra.mxu0 0
    %745 = vmatprep.subr.bf16.mxu0 0
    %746 = vmatpush1.bf16.msra.mxu0 0
    %747 = vmatprep.subr.bf16.mxu0 0
    %748 = vmatpush1.bf16.msra.mxu0 0
    %749 = vmatprep.subr.bf16.mxu0 0
    %750 = vmatpush1.bf16.msra.mxu0 0
    %751 = vmatprep.subr.bf16.mxu0 0
    %752 = vmatpush1.bf16.msra.mxu0 0
    %753 = vmatprep.subr.bf16.mxu0 0
    %754 = vmatpush1.bf16.msra.mxu0 0
    %755 = vmatprep.subr.bf16.mxu0 0
    %756 = vmatpush1.bf16.msra.mxu0 0
    %757 = vmatprep.mubr.bf16.mxu0 0
    %758 = vmatmul.mubr.bf16.gmra.mrb[0].mxu0 %v723
    %v759 = vpop.f32.mrb[0].mxu0
    %v760 = vadd.f32 %v709, %v759
    %v761 = vpop.f32.mrb[0].mxu0
    %v762 = vpop.f32.mrb[0].mxu0
    %v763 = vadd.f32 %v709, %v762
    %v764 = vpop.f32.mrb[0].mxu0
    %765 = vdwg.mxu0
    %v766 = vadd.f32 %v59, %v760
    %v767 = vadd.f32 %v60, %v763
    %v768 = vsel %vm103, %v766, 0.0
    %769 = vadd.xlane.f32.xlu0 %v768
    %v770 = vpop.xlane.xlu0 %769
    %v771 = vsel %vm103, %v767, 0.0
    %772 = vadd.xlane.f32.xlu0 %v771
    %v773 = vpop.xlane.xlu0 %772
    %v774 = vrcp.pop 32.0
    %v775 = vmul.f32 %v770, %v774
    %v776 = vmul.f32 %v773, %v774
    %v777 = vmul.f32 %v766, %v766
    %v778 = vmul.f32 %v767, %v767
    %v779 = vsel %vm103, %v777, 0.0
    %780 = vadd.xlane.f32.xlu0 %v779
    %v781 = vpop.xlane.xlu0 %780
    %v782 = vsel %vm103, %v778, 0.0
    %783 = vadd.xlane.f32.xlu0 %v782
    %v784 = vpop.xlane.xlu0 %783
    %v785 = vmul.f32 %v781, %v774
    %v786 = vmul.f32 %v784, %v774
    %v787 = vmul.f32 %v775, %v775
    %v788 = vmul.f32 %v776, %v776
    %v789 = vsub.f32 %v785, %v787
    %v790 = vsub.f32 %v786, %v788
    %v791 = vsub.f32 %v766, %v775
    %v792 = vsub.f32 %v767, %v776
    %v793 = vadd.f32 %v789, 1e-05
    %v794 = vadd.f32 %v790, 1e-05
    %v795 = vrsqrt.pop %v793
    %v796 = vrsqrt.pop %v794
    %v797 = vmul.f32 %v791, %v795
    %v798 = vmul.f32 %v792, %v796
    %v799 = vlaneseq
    %v800 = vshrl.u32 %v799, 7
    %v801 = vsub.s32 4, %v800
    %v802 = vrot.slane %v87, %v801
    %v803 = vmul.f32 %v797, %v802
    %v804 = vmul.f32 %v798, %v802
    %v805 = vlaneseq
    %v806 = vshrl.u32 %v805, 7
    %v807 = vsub.s32 5, %v806
    %v808 = vrot.slane %v87, %v807
    %v809 = vadd.f32 %v803, %v808
    %v810 = vadd.f32 %v804, %v808
    %v811 = vpack.c.bf16 %v810, %v809
    %v813 = vlaneseq
    %v814 = vshrl.u32 %v813, 7
    %v815 = vsub.s32 0, %v814
    %v816 = vrot.slane %v89, %v815
    %v822 = vunpack.c.l.b16 %v75
    %v823 = vunpack.c.l.b16 %v76
    %v824 = vunpack.c.l.b16 %v77
    %v825 = vunpack.c.l.b16 %v78
    %v826 = vpack.c.b16 %v823, %v822
    %v827 = vpack.c.b16 %v825, %v824
    %v831 = vsel %vm103, %v811, 0
    %833 = vmatprep.subr.bf16.mxu0 0
    %834 = vmatpush1.bf16.msra.mxu0 %v826
    %835 = vmatprep.subr.bf16.mxu0 0
    %836 = vmatpush1.bf16.msra.mxu0 %v827
    %837 = vmatprep.subr.bf16.mxu0 0
    %838 = vmatpush1.bf16.msra.mxu0 0
    %839 = vmatprep.subr.bf16.mxu0 0
    %840 = vmatpush1.bf16.msra.mxu0 0
    %841 = vmatprep.subr.bf16.mxu0 0
    %842 = vmatpush1.bf16.msra.mxu0 0
    %843 = vmatprep.subr.bf16.mxu0 0
    %844 = vmatpush1.bf16.msra.mxu0 0
    %845 = vmatprep.subr.bf16.mxu0 0
    %846 = vmatpush1.bf16.msra.mxu0 0
    %847 = vmatprep.subr.bf16.mxu0 0
    %848 = vmatpush1.bf16.msra.mxu0 0
    %849 = vmatprep.subr.bf16.mxu0 0
    %850 = vmatpush1.bf16.msra.mxu0 0
    %851 = vmatprep.subr.bf16.mxu0 0
    %852 = vmatpush1.bf16.msra.mxu0 0
    %853 = vmatprep.subr.bf16.mxu0 0
    %854 = vmatpush1.bf16.msra.mxu0 0
    %855 = vmatprep.subr.bf16.mxu0 0
    %856 = vmatpush1.bf16.msra.mxu0 0
    %857 = vmatprep.subr.bf16.mxu0 0
    %858 = vmatpush1.bf16.msra.mxu0 0
    %859 = vmatprep.subr.bf16.mxu0 0
    %860 = vmatpush1.bf16.msra.mxu0 0
    %861 = vmatprep.subr.bf16.mxu0 0
    %862 = vmatpush1.bf16.msra.mxu0 0
    %863 = vmatprep.subr.bf16.mxu0 0
    %864 = vmatpush1.bf16.msra.mxu0 0
    %865 = vmatprep.mubr.bf16.mxu0 0
    %866 = vmatmul.mubr.bf16.gmra.mrb[0].mxu0 %v831
    %v867 = vpop.f32.mrb[0].mxu0
    %v868 = vadd.f32 %v816, %v867
    %v869 = vpop.f32.mrb[0].mxu0
    %v870 = vpop.f32.mrb[0].mxu0
    %v871 = vadd.f32 %v816, %v870
    %v872 = vpop.f32.mrb[0].mxu0
    %873 = vdwg.mxu0
    %v874 = vmax.f32 %v868, 0.0
    %v875 = vmax.f32 %v871, 0.0
    %v876 = vpack.c.bf16 %v875, %v874
    %v877 = vlaneseq
    %v878 = vshrl.u32 %v877, 7
    %v879 = vsub.s32 6, %v878
    %v880 = vrot.slane %v87, %v879
    %v889 = vunpack.c.l.b16 %v79
    %v890 = vunpack.c.l.b16 %v80
    %v891 = vunpack.c.l.b16 %v81
    %v892 = vunpack.c.l.b16 %v82
    %v893 = vunpack.c.l.b16 %v83
    %v894 = vunpack.c.l.b16 %v84
    %v895 = vunpack.c.l.b16 %v85
    %v896 = vunpack.c.l.b16 %v86
    %v897 = vpack.c.b16 %v890, %v889
    %v898 = vpack.c.b16 %v892, %v891
    %v899 = vpack.c.b16 %v894, %v893
    %v900 = vpack.c.b16 %v896, %v895
    %vm905 = vcmask 523264
    %v907 = vsel %vm905, %v876, 0
    %909 = vmatprep.subr.bf16.mxu0 0
    %910 = vmatpush1.bf16.msra.mxu0 %v897
    %911 = vmatprep.subr.bf16.mxu0 0
    %912 = vmatpush1.bf16.msra.mxu0 %v898
    %913 = vmatprep.subr.bf16.mxu0 0
    %914 = vmatpush1.bf16.msra.mxu0 %v899
    %915 = vmatprep.subr.bf16.mxu0 0
    %916 = vmatpush1.bf16.msra.mxu0 %v900
    %917 = vmatprep.subr.bf16.mxu0 0
    %918 = vmatpush1.bf16.msra.mxu0 0
    %919 = vmatprep.subr.bf16.mxu0 0
    %920 = vmatpush1.bf16.msra.mxu0 0
    %921 = vmatprep.subr.bf16.mxu0 0
    %922 = vmatpush1.bf16.msra.mxu0 0
    %923 = vmatprep.subr.bf16.mxu0 0
    %924 = vmatpush1.bf16.msra.mxu0 0
    %925 = vmatprep.subr.bf16.mxu0 0
    %926 = vmatpush1.bf16.msra.mxu0 0
    %927 = vmatprep.subr.bf16.mxu0 0
    %928 = vmatpush1.bf16.msra.mxu0 0
    %929 = vmatprep.subr.bf16.mxu0 0
    %930 = vmatpush1.bf16.msra.mxu0 0
    %931 = vmatprep.subr.bf16.mxu0 0
    %932 = vmatpush1.bf16.msra.mxu0 0
    %933 = vmatprep.subr.bf16.mxu0 0
    %934 = vmatpush1.bf16.msra.mxu0 0
    %935 = vmatprep.subr.bf16.mxu0 0
    %936 = vmatpush1.bf16.msra.mxu0 0
    %937 = vmatprep.subr.bf16.mxu0 0
    %938 = vmatpush1.bf16.msra.mxu0 0
    %939 = vmatprep.subr.bf16.mxu0 0
    %940 = vmatpush1.bf16.msra.mxu0 0
    %941 = vmatprep.mubr.bf16.mxu0 0
    %942 = vmatmul.mubr.bf16.gmra.mrb[0].mxu0 %v907
    %v943 = vpop.f32.mrb[0].mxu0
    %v944 = vadd.f32 %v880, %v943
    %v945 = vpop.f32.mrb[0].mxu0
    %v946 = vpop.f32.mrb[0].mxu0
    %v947 = vadd.f32 %v880, %v946
    %v948 = vpop.f32.mrb[0].mxu0
    %949 = vdwg.mxu0
    %v950 = vadd.f32 %v809, %v944
    %v951 = vadd.f32 %v810, %v947
    %v952 = vsel %vm103, %v950, 0.0
    %953 = vadd.xlane.f32.xlu0 %v952
    %v954 = vpop.xlane.xlu0 %953
    %v955 = vsel %vm103, %v951, 0.0
    %956 = vadd.xlane.f32.xlu0 %v955
    %v957 = vpop.xlane.xlu0 %956
    %v958 = vmul.f32 %v954, %v774
    %v959 = vmul.f32 %v957, %v774
    %v960 = vmul.f32 %v950, %v950
    %v961 = vmul.f32 %v951, %v951
    %v962 = vsel %vm103, %v960, 0.0
    %963 = vadd.xlane.f32.xlu0 %v962
    %v964 = vpop.xlane.xlu0 %963
    %v965 = vsel %vm103, %v961, 0.0
    %966 = vadd.xlane.f32.xlu0 %v965
    %v967 = vpop.xlane.xlu0 %966
    %v968 = vmul.f32 %v964, %v774
    %v969 = vmul.f32 %v967, %v774
    %v970 = vmul.f32 %v958, %v958
    %v971 = vmul.f32 %v959, %v959
    %v972 = vsub.f32 %v968, %v970
    %v973 = vsub.f32 %v969, %v971
    %v974 = vsub.f32 %v950, %v958
    %v975 = vsub.f32 %v951, %v959
    %v976 = vadd.f32 %v972, 1e-05
    %v977 = vadd.f32 %v973, 1e-05
    %v978 = vrsqrt.pop %v976
    %v979 = vrsqrt.pop %v977
    %v980 = vmul.f32 %v974, %v978
    %v981 = vmul.f32 %v975, %v979
    %v982 = vlaneseq
    %v983 = vshrl.u32 %v982, 7
    %v984 = vsub.s32 7, %v983
    %v985 = vrot.slane %v87, %v984
    %v986 = vmul.f32 %v980, %v985
    %v987 = vmul.f32 %v981, %v985
    %v988 = vlaneseq
    %v989 = vshrl.u32 %v988, 7
    %v990 = vsub.s32 0, %v989
    %v991 = vrot.slane %v88, %v990
    %v992 = vadd.f32 %v986, %v991
    %v993 = vadd.f32 %v987, %v991
    %s994 = scalar_lea.vmem %s2, 16
    %v995 = vld [vmem:[%s994] sm:$0xf]
    %v996 = vld [vmem:[%s994 + $0x4] sm:$0xf]
    %v997 = vld [vmem:[%s994 + $0x8] sm:$0xf]
    %v998 = vld [vmem:[%s994 + $0xc] sm:$0xf]
    %s999 = scalar_lea.vmem %s3, 16
    %v1000 = vld [vmem:[%s999] sm:$0xf]
    %v1001 = vld [vmem:[%s999 + $0x4] sm:$0xf]
    %v1002 = vld [vmem:[%s999 + $0x8] sm:$0xf]
    %v1003 = vld [vmem:[%s999 + $0xc] sm:$0xf]
    %s1004 = scalar_lea.vmem %s4, 16
    %v1005 = vld [vmem:[%s1004] sm:$0xf]
    %v1006 = vld [vmem:[%s1004 + $0x4] sm:$0xf]
    %v1007 = vld [vmem:[%s1004 + $0x8] sm:$0xf]
    %v1008 = vld [vmem:[%s1004 + $0xc] sm:$0xf]
    %s1009 = scalar_lea.vmem %s5, 32
    %v1010 = vld [vmem:[%s1009] sm:$0xf]
    %v1011 = vld [vmem:[%s1009 + $0x4] sm:$0xf]
    %v1012 = vld [vmem:[%s1009 + $0x8] sm:$0xf]
    %v1013 = vld [vmem:[%s1009 + $0xc] sm:$0xf]
    %v1014 = vld [vmem:[%s1009 + $0x10] sm:$0xf]
    %v1015 = vld [vmem:[%s1009 + $0x14] sm:$0xf]
    %v1016 = vld [vmem:[%s1009 + $0x18] sm:$0xf]
    %v1017 = vld [vmem:[%s1009 + $0x1c] sm:$0xf]
    %s1018 = scalar_lea.vmem %s6, 16
    %v1019 = vld [vmem:[%s1018] sm:$0xff]
    %v1020 = vld [vmem:[%s1018 + $0x8] sm:$0x1]
    %s1021 = scalar_lea.vmem [#allocation5], 1
    %v1022 = vld [vmem:[%s1021] sm:$0x1]
    %v1023 = vpack.c.bf16 %v993, %v992
    %v1028 = vunpack.c.l.b16 %v995
    %v1029 = vunpack.c.l.b16 %v996
    %v1030 = vunpack.c.l.b16 %v997
    %v1031 = vunpack.c.l.b16 %v998
    %v1032 = vpack.c.b16 %v1029, %v1028
    %v1033 = vpack.c.b16 %v1031, %v1030
    %v1037 = vsel %vm103, %v1023, 0
    %1039 = vmatprep.subr.bf16.mxu0 0
    %1040 = vmatpush1.bf16.msra.mxu0 %v1032
    %1041 = vmatprep.subr.bf16.mxu0 0
    %1042 = vmatpush1.bf16.msra.mxu0 %v1033
    %1043 = vmatprep.subr.bf16.mxu0 0
    %1044 = vmatpush1.bf16.msra.mxu0 0
    %1045 = vmatprep.subr.bf16.mxu0 0
    %1046 = vmatpush1.bf16.msra.mxu0 0
    %1047 = vmatprep.subr.bf16.mxu0 0
    %1048 = vmatpush1.bf16.msra.mxu0 0
    %1049 = vmatprep.subr.bf16.mxu0 0
    %1050 = vmatpush1.bf16.msra.mxu0 0
    %1051 = vmatprep.subr.bf16.mxu0 0
    %1052 = vmatpush1.bf16.msra.mxu0 0
    %1053 = vmatprep.subr.bf16.mxu0 0
    %1054 = vmatpush1.bf16.msra.mxu0 0
    %1055 = vmatprep.subr.bf16.mxu0 0
    %1056 = vmatpush1.bf16.msra.mxu0 0
    %1057 = vmatprep.subr.bf16.mxu0 0
    %1058 = vmatpush1.bf16.msra.mxu0 0
    %1059 = vmatprep.subr.bf16.mxu0 0
    %1060 = vmatpush1.bf16.msra.mxu0 0
    %1061 = vmatprep.subr.bf16.mxu0 0
    %1062 = vmatpush1.bf16.msra.mxu0 0
    %1063 = vmatprep.subr.bf16.mxu0 0
    %1064 = vmatpush1.bf16.msra.mxu0 0
    %1065 = vmatprep.subr.bf16.mxu0 0
    %1066 = vmatpush1.bf16.msra.mxu0 0
    %1067 = vmatprep.subr.bf16.mxu0 0
    %1068 = vmatpush1.bf16.msra.mxu0 0
    %1069 = vmatprep.subr.bf16.mxu0 0
    %1070 = vmatpush1.bf16.msra.mxu0 0
    %1071 = vmatprep.mubr.bf16.mxu0 0
    %1072 = vmatmul.mubr.bf16.gmra.mrb[0].mxu0 %v1037
    %v1073 = vpop.f32.mrb[0].mxu0
    %v1074 = vadd.f32 0.0, %v1073
    %v1075 = vpop.f32.mrb[0].mxu0
    %v1076 = vpop.f32.mrb[0].mxu0
    %v1077 = vadd.f32 0.0, %v1076
    %v1078 = vpop.f32.mrb[0].mxu0
    %1079 = vdwg.mxu0
    %v1080 = vlaneseq
    %v1081 = vshrl.u32 %v1080, 7
    %v1082 = vsub.s32 0, %v1081
    %v1083 = vrot.slane %v1019, %v1082
    %v1084 = vadd.f32 %v1074, %v1083
    %v1085 = vadd.f32 %v1077, %v1083
    %v1086 = vmul.f32 %v1084, 0.35355338
    %v1087 = vmul.f32 %v1085, 0.35355338
    %v1088 = vpack.c.bf16 %v1087, %v1086
    %v1089 = vlaneseq
    %v1090 = vshrl.u32 %v1089, 7
    %v1091 = vsub.s32 1, %v1090
    %v1092 = vrot.slane %v1019, %v1091
    %1094 = vrot.lane.b32.xlu0 %v1092, 32
    %v1095 = vpop.permute.xlu0 %1094
    %v1097 = vadd.f32 %v1074, %v1095
    %v1098 = vadd.f32 %v1077, %v1095
    %v1099 = vpack.c.bf16 %v1098, %v1097
    %v1100 = vlaneseq
    %v1101 = vshrl.u32 %v1100, 7
    %v1102 = vsub.s32 2, %v1101
    %v1103 = vrot.slane %v1019, %v1102
    %1105 = vrot.lane.b32.xlu0 %v1103, 64
    %v1106 = vpop.permute.xlu0 %1105
    %v1108 = vadd.f32 %v1074, %v1106
    %v1109 = vadd.f32 %v1077, %v1106
    %v1110 = vpack.c.bf16 %v1109, %v1108
    %1112 = vrot.lane.b32.xlu0 %v1099, 96
    %v1113 = vpop.permute.xlu0 %1112
    %v1115 = vsel %vm182, %v1088, 0
    %v1118 = vsel %vm182, %v1113, 0
    %1120 = vmatprep.subr.bf16.mxu0 0
    %1121 = vmatpush1.bf16.xpose.msra.mxu0 %v1118
    %1122 = vmatprep.subr.bf16.mxu0 0
    %1123 = vmatpush1.bf16.xpose.msra.mxu0 0
    %1124 = vmatprep.subr.bf16.mxu0 0
    %1125 = vmatpush1.bf16.xpose.msra.mxu0 0
    %1126 = vmatprep.subr.bf16.mxu0 0
    %1127 = vmatpush1.bf16.xpose.msra.mxu0 0
    %1128 = vmatprep.subr.bf16.mxu0 0
    %1129 = vmatpush1.bf16.xpose.msra.mxu0 0
    %1130 = vmatprep.subr.bf16.mxu0 0
    %1131 = vmatpush1.bf16.xpose.msra.mxu0 0
    %1132 = vmatprep.subr.bf16.mxu0 0
    %1133 = vmatpush1.bf16.xpose.msra.mxu0 0
    %1134 = vmatprep.subr.bf16.mxu0 0
    %1135 = vmatpush1.bf16.xpose.msra.mxu0 0
    %1136 = vmatprep.subr.bf16.mxu0 0
    %1137 = vmatpush1.bf16.xpose.msra.mxu0 0
    %1138 = vmatprep.subr.bf16.mxu0 0
    %1139 = vmatpush1.bf16.xpose.msra.mxu0 0
    %1140 = vmatprep.subr.bf16.mxu0 0
    %1141 = vmatpush1.bf16.xpose.msra.mxu0 0
    %1142 = vmatprep.subr.bf16.mxu0 0
    %1143 = vmatpush1.bf16.xpose.msra.mxu0 0
    %1144 = vmatprep.subr.bf16.mxu0 0
    %1145 = vmatpush1.bf16.xpose.msra.mxu0 0
    %1146 = vmatprep.subr.bf16.mxu0 0
    %1147 = vmatpush1.bf16.xpose.msra.mxu0 0
    %1148 = vmatprep.subr.bf16.mxu0 0
    %1149 = vmatpush1.bf16.xpose.msra.mxu0 0
    %1150 = vmatprep.subr.bf16.mxu0 0
    %1151 = vmatpush1.bf16.xpose.msra.mxu0 0
    %1152 = vmatprep.mubr.bf16.mxu0 0
    %1153 = vmatmul.mubr.bf16.gmra.mrb[0].mxu0 %v1115
    %v1154 = vpop.f32.mrb[0].mxu0
    %v1155 = vadd.f32 %v65, %v1154
    %v1156 = vpop.f32.mrb[0].mxu0
    %v1157 = vpop.f32.mrb[0].mxu0
    %v1158 = vadd.f32 %v66, %v1157
    %v1159 = vpop.f32.mrb[0].mxu0
    %1160 = vdwg.mxu0
    %v1161 = vsel %vm230, %v1155, -inf
    %1162 = vmax.xlane.f32.xlu0 %v1161
    %v1163 = vpop.xlane.xlu0 %1162
    %v1164 = vsel %vm230, %v1158, -inf
    %1165 = vmax.xlane.f32.xlu0 %v1164
    %v1166 = vpop.xlane.xlu0 %1165
    %v1167 = vsub.f32 %v1155, %v1163
    %v1168 = vsub.f32 %v1158, %v1166
    %v1169 = vmul.f32 %v1167, 1.442695
    %v1170 = vpow.pop %v1169
    %v1171 = vmul.f32 %v1168, 1.442695
    %v1172 = vpow.pop %v1171
    %v1173 = vmul.f32 %v1170, %v61
    %v1174 = vmul.f32 %v1172, %v62
    %v1175 = vsel %vm230, %v1173, 0.0
    %1176 = vadd.xlane.f32.xlu0 %v1175
    %v1177 = vpop.xlane.xlu0 %1176
    %v1178 = vsel %vm230, %v1174, 0.0
    %1179 = vadd.xlane.f32.xlu0 %v1178
    %v1180 = vpop.xlane.xlu0 %1179
    %v1181 = vrcp.pop %v1177
    %v1182 = vrcp.pop %v1180
    %v1183 = vmul.f32 %v1173, %v1181
    %v1184 = vmul.f32 %v1174, %v1182
    %v1185 = vpack.c.bf16 %v1184, %v1183
    %1187 = vrot.lane.b32.xlu0 %v1110, 64
    %v1188 = vpop.permute.xlu0 %1187
    %v1191 = vsel %vm230, %v1185, 0
    %1193 = vmatprep.subr.bf16.mxu0 0
    %1194 = vmatpush1.bf16.msra.mxu0 %v1188
    %1195 = vmatprep.subr.bf16.mxu0 0
    %1196 = vmatpush1.bf16.msra.mxu0 0
    %1197 = vmatprep.subr.bf16.mxu0 0
    %1198 = vmatpush1.bf16.msra.mxu0 0
    %1199 = vmatprep.subr.bf16.mxu0 0
    %1200 = vmatpush1.bf16.msra.mxu0 0
    %1201 = vmatprep.subr.bf16.mxu0 0
    %1202 = vmatpush1.bf16.msra.mxu0 0
    %1203 = vmatprep.subr.bf16.mxu0 0
    %1204 = vmatpush1.bf16.msra.mxu0 0
    %1205 = vmatprep.subr.bf16.mxu0 0
    %1206 = vmatpush1.bf16.msra.mxu0 0
    %1207 = vmatprep.subr.bf16.mxu0 0
    %1208 = vmatpush1.bf16.msra.mxu0 0
    %1209 = vmatprep.subr.bf16.mxu0 0
    %1210 = vmatpush1.bf16.msra.mxu0 0
    %1211 = vmatprep.subr.bf16.mxu0 0
    %1212 = vmatpush1.bf16.msra.mxu0 0
    %1213 = vmatprep.subr.bf16.mxu0 0
    %1214 = vmatpush1.bf16.msra.mxu0 0
    %1215 = vmatprep.subr.bf16.mxu0 0
    %1216 = vmatpush1.bf16.msra.mxu0 0
    %1217 = vmatprep.subr.bf16.mxu0 0
    %1218 = vmatpush1.bf16.msra.mxu0 0
    %1219 = vmatprep.subr.bf16.mxu0 0
    %1220 = vmatpush1.bf16.msra.mxu0 0
    %1221 = vmatprep.subr.bf16.mxu0 0
    %1222 = vmatpush1.bf16.msra.mxu0 0
    %1223 = vmatprep.subr.bf16.mxu0 0
    %1224 = vmatpush1.bf16.msra.mxu0 0
    %1225 = vmatprep.mubr.bf16.mxu0 0
    %1226 = vmatmul.mubr.bf16.gmra.mrb[0].mxu0 %v1191
    %v1227 = vpop.f32.mrb[0].mxu0
    %v1228 = vadd.f32 0.0, %v1227
    %v1229 = vpop.f32.mrb[0].mxu0
    %v1230 = vpop.f32.mrb[0].mxu0
    %v1231 = vadd.f32 0.0, %v1230
    %v1232 = vpop.f32.mrb[0].mxu0
    %1233 = vdwg.mxu0
    %1235 = vrot.lane.b32.xlu0 %v1088, 120
    %v1236 = vpop.permute.xlu0 %1235
    %1237 = vrot.lane.b32.xlu0 %v1099, 88
    %v1238 = vpop.permute.xlu0 %1237
    %v1240 = vsel %vm182, %v1236, 0
    %v1243 = vsel %vm182, %v1238, 0
    %1245 = vmatprep.subr.bf16.mxu0 0
    %1246 = vmatpush1.bf16.xpose.msra.mxu0 %v1243
    %1247 = vmatprep.subr.bf16.mxu0 0
    %1248 = vmatpush1.bf16.xpose.msra.mxu0 0
    %1249 = vmatprep.subr.bf16.mxu0 0
    %1250 = vmatpush1.bf16.xpose.msra.mxu0 0
    %1251 = vmatprep.subr.bf16.mxu0 0
    %1252 = vmatpush1.bf16.xpose.msra.mxu0 0
    %1253 = vmatprep.subr.bf16.mxu0 0
    %1254 = vmatpush1.bf16.xpose.msra.mxu0 0
    %1255 = vmatprep.subr.bf16.mxu0 0
    %1256 = vmatpush1.bf16.xpose.msra.mxu0 0
    %1257 = vmatprep.subr.bf16.mxu0 0
    %1258 = vmatpush1.bf16.xpose.msra.mxu0 0
    %1259 = vmatprep.subr.bf16.mxu0 0
    %1260 = vmatpush1.bf16.xpose.msra.mxu0 0
    %1261 = vmatprep.subr.bf16.mxu0 0
    %1262 = vmatpush1.bf16.xpose.msra.mxu0 0
    %1263 = vmatprep.subr.bf16.mxu0 0
    %1264 = vmatpush1.bf16.xpose.msra.mxu0 0
    %1265 = vmatprep.subr.bf16.mxu0 0
    %1266 = vmatpush1.bf16.xpose.msra.mxu0 0
    %1267 = vmatprep.subr.bf16.mxu0 0
    %1268 = vmatpush1.bf16.xpose.msra.mxu0 0
    %1269 = vmatprep.subr.bf16.mxu0 0
    %1270 = vmatpush1.bf16.xpose.msra.mxu0 0
    %1271 = vmatprep.subr.bf16.mxu0 0
    %1272 = vmatpush1.bf16.xpose.msra.mxu0 0
    %1273 = vmatprep.subr.bf16.mxu0 0
    %1274 = vmatpush1.bf16.xpose.msra.mxu0 0
    %1275 = vmatprep.subr.bf16.mxu0 0
    %1276 = vmatpush1.bf16.xpose.msra.mxu0 0
    %1277 = vmatprep.mubr.bf16.mxu0 0
    %1278 = vmatmul.mubr.bf16.gmra.mrb[0].mxu0 %v1240
    %v1279 = vpop.f32.mrb[0].mxu0
    %v1280 = vadd.f32 %v65, %v1279
    %v1281 = vpop.f32.mrb[0].mxu0
    %v1282 = vpop.f32.mrb[0].mxu0
    %v1283 = vadd.f32 %v66, %v1282
    %v1284 = vpop.f32.mrb[0].mxu0
    %1285 = vdwg.mxu0
    %v1286 = vsel %vm230, %v1280, -inf
    %1287 = vmax.xlane.f32.xlu0 %v1286
    %v1288 = vpop.xlane.xlu0 %1287
    %v1289 = vsel %vm230, %v1283, -inf
    %1290 = vmax.xlane.f32.xlu0 %v1289
    %v1291 = vpop.xlane.xlu0 %1290
    %v1292 = vsub.f32 %v1280, %v1288
    %v1293 = vsub.f32 %v1283, %v1291
    %v1294 = vmul.f32 %v1292, 1.442695
    %v1295 = vpow.pop %v1294
    %v1296 = vmul.f32 %v1293, 1.442695
    %v1297 = vpow.pop %v1296
    %v1298 = vmul.f32 %v1295, %v61
    %v1299 = vmul.f32 %v1297, %v62
    %v1300 = vsel %vm230, %v1298, 0.0
    %1301 = vadd.xlane.f32.xlu0 %v1300
    %v1302 = vpop.xlane.xlu0 %1301
    %v1303 = vsel %vm230, %v1299, 0.0
    %1304 = vadd.xlane.f32.xlu0 %v1303
    %v1305 = vpop.xlane.xlu0 %1304
    %v1306 = vrcp.pop %v1302
    %v1307 = vrcp.pop %v1305
    %v1308 = vmul.f32 %v1298, %v1306
    %v1309 = vmul.f32 %v1299, %v1307
    %v1310 = vpack.c.bf16 %v1309, %v1308
    %1311 = vrot.lane.b32.xlu0 %v1110, 56
    %v1312 = vpop.permute.xlu0 %1311
    %v1315 = vsel %vm230, %v1310, 0
    %1317 = vmatprep.subr.bf16.mxu0 0
    %1318 = vmatpush1.bf16.msra.mxu0 %v1312
    %1319 = vmatprep.subr.bf16.mxu0 0
    %1320 = vmatpush1.bf16.msra.mxu0 0
    %1321 = vmatprep.subr.bf16.mxu0 0
    %1322 = vmatpush1.bf16.msra.mxu0 0
    %1323 = vmatprep.subr.bf16.mxu0 0
    %1324 = vmatpush1.bf16.msra.mxu0 0
    %1325 = vmatprep.subr.bf16.mxu0 0
    %1326 = vmatpush1.bf16.msra.mxu0 0
    %1327 = vmatprep.subr.bf16.mxu0 0
    %1328 = vmatpush1.bf16.msra.mxu0 0
    %1329 = vmatprep.subr.bf16.mxu0 0
    %1330 = vmatpush1.bf16.msra.mxu0 0
    %1331 = vmatprep.subr.bf16.mxu0 0
    %1332 = vmatpush1.bf16.msra.mxu0 0
    %1333 = vmatprep.subr.bf16.mxu0 0
    %1334 = vmatpush1.bf16.msra.mxu0 0
    %1335 = vmatprep.subr.bf16.mxu0 0
    %1336 = vmatpush1.bf16.msra.mxu0 0
    %1337 = vmatprep.subr.bf16.mxu0 0
    %1338 = vmatpush1.bf16.msra.mxu0 0
    %1339 = vmatprep.subr.bf16.mxu0 0
    %1340 = vmatpush1.bf16.msra.mxu0 0
    %1341 = vmatprep.subr.bf16.mxu0 0
    %1342 = vmatpush1.bf16.msra.mxu0 0
    %1343 = vmatprep.subr.bf16.mxu0 0
    %1344 = vmatpush1.bf16.msra.mxu0 0
    %1345 = vmatprep.subr.bf16.mxu0 0
    %1346 = vmatpush1.bf16.msra.mxu0 0
    %1347 = vmatprep.subr.bf16.mxu0 0
    %1348 = vmatpush1.bf16.msra.mxu0 0
    %1349 = vmatprep.mubr.bf16.mxu0 0
    %1350 = vmatmul.mubr.bf16.gmra.mrb[0].mxu0 %v1315
    %v1351 = vpop.f32.mrb[0].mxu0
    %v1352 = vadd.f32 0.0, %v1351
    %v1353 = vpop.f32.mrb[0].mxu0
    %v1354 = vpop.f32.mrb[0].mxu0
    %v1355 = vadd.f32 0.0, %v1354
    %v1356 = vpop.f32.mrb[0].mxu0
    %1357 = vdwg.mxu0
    %1358 = vrot.lane.b32.xlu0 %v1088, 112
    %v1359 = vpop.permute.xlu0 %1358
    %1360 = vrot.lane.b32.xlu0 %v1099, 80
    %v1361 = vpop.permute.xlu0 %1360
    %v1363 = vsel %vm182, %v1359, 0
    %v1366 = vsel %vm182, %v1361, 0
    %1368 = vmatprep.subr.bf16.mxu0 0
    %1369 = vmatpush1.bf16.xpose.msra.mxu0 %v1366
    %1370 = vmatprep.subr.bf16.mxu0 0
    %1371 = vmatpush1.bf16.xpose.msra.mxu0 0
    %1372 = vmatprep.subr.bf16.mxu0 0
    %1373 = vmatpush1.bf16.xpose.msra.mxu0 0
    %1374 = vmatprep.subr.bf16.mxu0 0
    %1375 = vmatpush1.bf16.xpose.msra.mxu0 0
    %1376 = vmatprep.subr.bf16.mxu0 0
    %1377 = vmatpush1.bf16.xpose.msra.mxu0 0
    %1378 = vmatprep.subr.bf16.mxu0 0
    %1379 = vmatpush1.bf16.xpose.msra.mxu0 0
    %1380 = vmatprep.subr.bf16.mxu0 0
    %1381 = vmatpush1.bf16.xpose.msra.mxu0 0
    %1382 = vmatprep.subr.bf16.mxu0 0
    %1383 = vmatpush1.bf16.xpose.msra.mxu0 0
    %1384 = vmatprep.subr.bf16.mxu0 0
    %1385 = vmatpush1.bf16.xpose.msra.mxu0 0
    %1386 = vmatprep.subr.bf16.mxu0 0
    %1387 = vmatpush1.bf16.xpose.msra.mxu0 0
    %1388 = vmatprep.subr.bf16.mxu0 0
    %1389 = vmatpush1.bf16.xpose.msra.mxu0 0
    %1390 = vmatprep.subr.bf16.mxu0 0
    %1391 = vmatpush1.bf16.xpose.msra.mxu0 0
    %1392 = vmatprep.subr.bf16.mxu0 0
    %1393 = vmatpush1.bf16.xpose.msra.mxu0 0
    %1394 = vmatprep.subr.bf16.mxu0 0
    %1395 = vmatpush1.bf16.xpose.msra.mxu0 0
    %1396 = vmatprep.subr.bf16.mxu0 0
    %1397 = vmatpush1.bf16.xpose.msra.mxu0 0
    %1398 = vmatprep.subr.bf16.mxu0 0
    %1399 = vmatpush1.bf16.xpose.msra.mxu0 0
    %1400 = vmatprep.mubr.bf16.mxu0 0
    %1401 = vmatmul.mubr.bf16.gmra.mrb[0].mxu0 %v1363
    %v1402 = vpop.f32.mrb[0].mxu0
    %v1403 = vadd.f32 %v65, %v1402
    %v1404 = vpop.f32.mrb[0].mxu0
    %v1405 = vpop.f32.mrb[0].mxu0
    %v1406 = vadd.f32 %v66, %v1405
    %v1407 = vpop.f32.mrb[0].mxu0
    %1408 = vdwg.mxu0
    %v1409 = vsel %vm230, %v1403, -inf
    %1410 = vmax.xlane.f32.xlu0 %v1409
    %v1411 = vpop.xlane.xlu0 %1410
    %v1412 = vsel %vm230, %v1406, -inf
    %1413 = vmax.xlane.f32.xlu0 %v1412
    %v1414 = vpop.xlane.xlu0 %1413
    %v1415 = vsub.f32 %v1403, %v1411
    %v1416 = vsub.f32 %v1406, %v1414
    %v1417 = vmul.f32 %v1415, 1.442695
    %v1418 = vpow.pop %v1417
    %v1419 = vmul.f32 %v1416, 1.442695
    %v1420 = vpow.pop %v1419
    %v1421 = vmul.f32 %v1418, %v61
    %v1422 = vmul.f32 %v1420, %v62
    %v1423 = vsel %vm230, %v1421, 0.0
    %1424 = vadd.xlane.f32.xlu0 %v1423
    %v1425 = vpop.xlane.xlu0 %1424
    %v1426 = vsel %vm230, %v1422, 0.0
    %1427 = vadd.xlane.f32.xlu0 %v1426
    %v1428 = vpop.xlane.xlu0 %1427
    %v1429 = vrcp.pop %v1425
    %v1430 = vrcp.pop %v1428
    %v1431 = vmul.f32 %v1421, %v1429
    %v1432 = vmul.f32 %v1422, %v1430
    %v1433 = vpack.c.bf16 %v1432, %v1431
    %1434 = vrot.lane.b32.xlu0 %v1110, 48
    %v1435 = vpop.permute.xlu0 %1434
    %v1438 = vsel %vm230, %v1433, 0
    %1440 = vmatprep.subr.bf16.mxu0 0
    %1441 = vmatpush1.bf16.msra.mxu0 %v1435
    %1442 = vmatprep.subr.bf16.mxu0 0
    %1443 = vmatpush1.bf16.msra.mxu0 0
    %1444 = vmatprep.subr.bf16.mxu0 0
    %1445 = vmatpush1.bf16.msra.mxu0 0
    %1446 = vmatprep.subr.bf16.mxu0 0
    %1447 = vmatpush1.bf16.msra.mxu0 0
    %1448 = vmatprep.subr.bf16.mxu0 0
    %1449 = vmatpush1.bf16.msra.mxu0 0
    %1450 = vmatprep.subr.bf16.mxu0 0
    %1451 = vmatpush1.bf16.msra.mxu0 0
    %1452 = vmatprep.subr.bf16.mxu0 0
    %1453 = vmatpush1.bf16.msra.mxu0 0
    %1454 = vmatprep.subr.bf16.mxu0 0
    %1455 = vmatpush1.bf16.msra.mxu0 0
    %1456 = vmatprep.subr.bf16.mxu0 0
    %1457 = vmatpush1.bf16.msra.mxu0 0
    %1458 = vmatprep.subr.bf16.mxu0 0
    %1459 = vmatpush1.bf16.msra.mxu0 0
    %1460 = vmatprep.subr.bf16.mxu0 0
    %1461 = vmatpush1.bf16.msra.mxu0 0
    %1462 = vmatprep.subr.bf16.mxu0 0
    %1463 = vmatpush1.bf16.msra.mxu0 0
    %1464 = vmatprep.subr.bf16.mxu0 0
    %1465 = vmatpush1.bf16.msra.mxu0 0
    %1466 = vmatprep.subr.bf16.mxu0 0
    %1467 = vmatpush1.bf16.msra.mxu0 0
    %1468 = vmatprep.subr.bf16.mxu0 0
    %1469 = vmatpush1.bf16.msra.mxu0 0
    %1470 = vmatprep.subr.bf16.mxu0 0
    %1471 = vmatpush1.bf16.msra.mxu0 0
    %1472 = vmatprep.mubr.bf16.mxu0 0
    %1473 = vmatmul.mubr.bf16.gmra.mrb[0].mxu0 %v1438
    %v1474 = vpop.f32.mrb[0].mxu0
    %v1475 = vadd.f32 0.0, %v1474
    %v1476 = vpop.f32.mrb[0].mxu0
    %v1477 = vpop.f32.mrb[0].mxu0
    %v1478 = vadd.f32 0.0, %v1477
    %v1479 = vpop.f32.mrb[0].mxu0
    %1480 = vdwg.mxu0
    %1481 = vrot.lane.b32.xlu0 %v1088, 104
    %v1482 = vpop.permute.xlu0 %1481
    %1483 = vrot.lane.b32.xlu0 %v1099, 72
    %v1484 = vpop.permute.xlu0 %1483
    %v1486 = vsel %vm182, %v1482, 0
    %v1489 = vsel %vm182, %v1484, 0
    %1491 = vmatprep.subr.bf16.mxu0 0
    %1492 = vmatpush1.bf16.xpose.msra.mxu0 %v1489
    %1493 = vmatprep.subr.bf16.mxu0 0
    %1494 = vmatpush1.bf16.xpose.msra.mxu0 0
    %1495 = vmatprep.subr.bf16.mxu0 0
    %1496 = vmatpush1.bf16.xpose.msra.mxu0 0
    %1497 = vmatprep.subr.bf16.mxu0 0
    %1498 = vmatpush1.bf16.xpose.msra.mxu0 0
    %1499 = vmatprep.subr.bf16.mxu0 0
    %1500 = vmatpush1.bf16.xpose.msra.mxu0 0
    %1501 = vmatprep.subr.bf16.mxu0 0
    %1502 = vmatpush1.bf16.xpose.msra.mxu0 0
    %1503 = vmatprep.subr.bf16.mxu0 0
    %1504 = vmatpush1.bf16.xpose.msra.mxu0 0
    %1505 = vmatprep.subr.bf16.mxu0 0
    %1506 = vmatpush1.bf16.xpose.msra.mxu0 0
    %1507 = vmatprep.subr.bf16.mxu0 0
    %1508 = vmatpush1.bf16.xpose.msra.mxu0 0
    %1509 = vmatprep.subr.bf16.mxu0 0
    %1510 = vmatpush1.bf16.xpose.msra.mxu0 0
    %1511 = vmatprep.subr.bf16.mxu0 0
    %1512 = vmatpush1.bf16.xpose.msra.mxu0 0
    %1513 = vmatprep.subr.bf16.mxu0 0
    %1514 = vmatpush1.bf16.xpose.msra.mxu0 0
    %1515 = vmatprep.subr.bf16.mxu0 0
    %1516 = vmatpush1.bf16.xpose.msra.mxu0 0
    %1517 = vmatprep.subr.bf16.mxu0 0
    %1518 = vmatpush1.bf16.xpose.msra.mxu0 0
    %1519 = vmatprep.subr.bf16.mxu0 0
    %1520 = vmatpush1.bf16.xpose.msra.mxu0 0
    %1521 = vmatprep.subr.bf16.mxu0 0
    %1522 = vmatpush1.bf16.xpose.msra.mxu0 0
    %1523 = vmatprep.mubr.bf16.mxu0 0
    %1524 = vmatmul.mubr.bf16.gmra.mrb[0].mxu0 %v1486
    %v1525 = vpop.f32.mrb[0].mxu0
    %v1526 = vadd.f32 %v65, %v1525
    %v1527 = vpop.f32.mrb[0].mxu0
    %v1528 = vpop.f32.mrb[0].mxu0
    %v1529 = vadd.f32 %v66, %v1528
    %v1530 = vpop.f32.mrb[0].mxu0
    %1531 = vdwg.mxu0
    %v1532 = vsel %vm230, %v1526, -inf
    %1533 = vmax.xlane.f32.xlu0 %v1532
    %v1534 = vpop.xlane.xlu0 %1533
    %v1535 = vsel %vm230, %v1529, -inf
    %1536 = vmax.xlane.f32.xlu0 %v1535
    %v1537 = vpop.xlane.xlu0 %1536
    %v1538 = vsub.f32 %v1526, %v1534
    %v1539 = vsub.f32 %v1529, %v1537
    %v1540 = vmul.f32 %v1538, 1.442695
    %v1541 = vpow.pop %v1540
    %v1542 = vmul.f32 %v1539, 1.442695
    %v1543 = vpow.pop %v1542
    %v1544 = vmul.f32 %v1541, %v61
    %v1545 = vmul.f32 %v1543, %v62
    %v1546 = vsel %vm230, %v1544, 0.0
    %1547 = vadd.xlane.f32.xlu0 %v1546
    %v1548 = vpop.xlane.xlu0 %1547
    %v1549 = vsel %vm230, %v1545, 0.0
    %1550 = vadd.xlane.f32.xlu0 %v1549
    %v1551 = vpop.xlane.xlu0 %1550
    %v1552 = vrcp.pop %v1548
    %v1553 = vrcp.pop %v1551
    %v1554 = vmul.f32 %v1544, %v1552
    %v1555 = vmul.f32 %v1545, %v1553
    %v1556 = vpack.c.bf16 %v1555, %v1554
    %1557 = vrot.lane.b32.xlu0 %v1110, 40
    %v1558 = vpop.permute.xlu0 %1557
    %v1561 = vsel %vm230, %v1556, 0
    %1563 = vmatprep.subr.bf16.mxu0 0
    %1564 = vmatpush1.bf16.msra.mxu0 %v1558
    %1565 = vmatprep.subr.bf16.mxu0 0
    %1566 = vmatpush1.bf16.msra.mxu0 0
    %1567 = vmatprep.subr.bf16.mxu0 0
    %1568 = vmatpush1.bf16.msra.mxu0 0
    %1569 = vmatprep.subr.bf16.mxu0 0
    %1570 = vmatpush1.bf16.msra.mxu0 0
    %1571 = vmatprep.subr.bf16.mxu0 0
    %1572 = vmatpush1.bf16.msra.mxu0 0
    %1573 = vmatprep.subr.bf16.mxu0 0
    %1574 = vmatpush1.bf16.msra.mxu0 0
    %1575 = vmatprep.subr.bf16.mxu0 0
    %1576 = vmatpush1.bf16.msra.mxu0 0
    %1577 = vmatprep.subr.bf16.mxu0 0
    %1578 = vmatpush1.bf16.msra.mxu0 0
    %1579 = vmatprep.subr.bf16.mxu0 0
    %1580 = vmatpush1.bf16.msra.mxu0 0
    %1581 = vmatprep.subr.bf16.mxu0 0
    %1582 = vmatpush1.bf16.msra.mxu0 0
    %1583 = vmatprep.subr.bf16.mxu0 0
    %1584 = vmatpush1.bf16.msra.mxu0 0
    %1585 = vmatprep.subr.bf16.mxu0 0
    %1586 = vmatpush1.bf16.msra.mxu0 0
    %1587 = vmatprep.subr.bf16.mxu0 0
    %1588 = vmatpush1.bf16.msra.mxu0 0
    %1589 = vmatprep.subr.bf16.mxu0 0
    %1590 = vmatpush1.bf16.msra.mxu0 0
    %1591 = vmatprep.subr.bf16.mxu0 0
    %1592 = vmatpush1.bf16.msra.mxu0 0
    %1593 = vmatprep.subr.bf16.mxu0 0
    %1594 = vmatpush1.bf16.msra.mxu0 0
    %1595 = vmatprep.mubr.bf16.mxu0 0
    %1596 = vmatmul.mubr.bf16.gmra.mrb[0].mxu0 %v1561
    %v1597 = vpop.f32.mrb[0].mxu0
    %v1598 = vadd.f32 0.0, %v1597
    %v1599 = vpop.f32.mrb[0].mxu0
    %v1600 = vpop.f32.mrb[0].mxu0
    %v1601 = vadd.f32 0.0, %v1600
    %v1602 = vpop.f32.mrb[0].mxu0
    %1603 = vdwg.mxu0
    %1606 = vrot.lane.b32.xlu0 %v1352, 8
    %v1607 = vpop.permute.xlu0 %1606
    %1608 = vrot.lane.b32.xlu0 %v1355, 8
    %v1609 = vpop.permute.xlu0 %1608
    %1614 = vrot.lane.b32.xlu0 %v1475, 16
    %v1615 = vpop.permute.xlu0 %1614
    %1616 = vrot.lane.b32.xlu0 %v1478, 16
    %v1617 = vpop.permute.xlu0 %1616
    %1622 = vrot.lane.b32.xlu0 %v1598, 24
    %v1623 = vpop.permute.xlu0 %1622
    %1624 = vrot.lane.b32.xlu0 %v1601, 24
    %v1625 = vpop.permute.xlu0 %1624
    %v1628 = vsel %vm182, %v1228, %v1607
    %v1629 = vsel %vm182, %v1231, %v1609
    %v1630 = vsel %vm230, %v1628, %v1615
    %v1631 = vsel %vm230, %v1629, %v1617
    %v1632 = vsel %vm702, %v1630, %v1623
    %v1633 = vsel %vm702, %v1631, %v1625
    %v1634 = vpack.c.bf16 %v1633, %v1632
    %v1635 = vlaneseq
    %v1636 = vshrl.u32 %v1635, 7
    %v1637 = vsub.s32 3, %v1636
    %v1638 = vrot.slane %v1019, %v1637
    %v1643 = vunpack.c.l.b16 %v1000
    %v1644 = vunpack.c.l.b16 %v1001
    %v1645 = vunpack.c.l.b16 %v1002
    %v1646 = vunpack.c.l.b16 %v1003
    %v1647 = vpack.c.b16 %v1644, %v1643
    %v1648 = vpack.c.b16 %v1646, %v1645
    %v1652 = vsel %vm103, %v1634, 0
    %1654 = vmatprep.subr.bf16.mxu0 0
    %1655 = vmatpush1.bf16.msra.mxu0 %v1647
    %1656 = vmatprep.subr.bf16.mxu0 0
    %1657 = vmatpush1.bf16.msra.mxu0 %v1648
    %1658 = vmatprep.subr.bf16.mxu0 0
    %1659 = vmatpush1.bf16.msra.mxu0 0
    %1660 = vmatprep.subr.bf16.mxu0 0
    %1661 = vmatpush1.bf16.msra.mxu0 0
    %1662 = vmatprep.subr.bf16.mxu0 0
    %1663 = vmatpush1.bf16.msra.mxu0 0
    %1664 = vmatprep.subr.bf16.mxu0 0
    %1665 = vmatpush1.bf16.msra.mxu0 0
    %1666 = vmatprep.subr.bf16.mxu0 0
    %1667 = vmatpush1.bf16.msra.mxu0 0
    %1668 = vmatprep.subr.bf16.mxu0 0
    %1669 = vmatpush1.bf16.msra.mxu0 0
    %1670 = vmatprep.subr.bf16.mxu0 0
    %1671 = vmatpush1.bf16.msra.mxu0 0
    %1672 = vmatprep.subr.bf16.mxu0 0
    %1673 = vmatpush1.bf16.msra.mxu0 0
    %1674 = vmatprep.subr.bf16.mxu0 0
    %1675 = vmatpush1.bf16.msra.mxu0 0
    %1676 = vmatprep.subr.bf16.mxu0 0
    %1677 = vmatpush1.bf16.msra.mxu0 0
    %1678 = vmatprep.subr.bf16.mxu0 0
    %1679 = vmatpush1.bf16.msra.mxu0 0
    %1680 = vmatprep.subr.bf16.mxu0 0
    %1681 = vmatpush1.bf16.msra.mxu0 0
    %1682 = vmatprep.subr.bf16.mxu0 0
    %1683 = vmatpush1.bf16.msra.mxu0 0
    %1684 = vmatprep.subr.bf16.mxu0 0
    %1685 = vmatpush1.bf16.msra.mxu0 0
    %1686 = vmatprep.mubr.bf16.mxu0 0
    %1687 = vmatmul.mubr.bf16.gmra.mrb[0].mxu0 %v1652
    %v1688 = vpop.f32.mrb[0].mxu0
    %v1689 = vadd.f32 %v1638, %v1688
    %v1690 = vpop.f32.mrb[0].mxu0
    %v1691 = vpop.f32.mrb[0].mxu0
    %v1692 = vadd.f32 %v1638, %v1691
    %v1693 = vpop.f32.mrb[0].mxu0
    %1694 = vdwg.mxu0
    %v1695 = vadd.f32 %v992, %v1689
    %v1696 = vadd.f32 %v993, %v1692
    %v1697 = vsel %vm103, %v1695, 0.0
    %1698 = vadd.xlane.f32.xlu0 %v1697
    %v1699 = vpop.xlane.xlu0 %1698
    %v1700 = vsel %vm103, %v1696, 0.0
    %1701 = vadd.xlane.f32.xlu0 %v1700
    %v1702 = vpop.xlane.xlu0 %1701
    %v1703 = vmul.f32 %v1699, %v774
    %v1704 = vmul.f32 %v1702, %v774
    %v1705 = vmul.f32 %v1695, %v1695
    %v1706 = vmul.f32 %v1696, %v1696
    %v1707 = vsel %vm103, %v1705, 0.0
    %1708 = vadd.xlane.f32.xlu0 %v1707
    %v1709 = vpop.xlane.xlu0 %1708
    %v1710 = vsel %vm103, %v1706, 0.0
    %1711 = vadd.xlane.f32.xlu0 %v1710
    %v1712 = vpop.xlane.xlu0 %1711
    %v1713 = vmul.f32 %v1709, %v774
    %v1714 = vmul.f32 %v1712, %v774
    %v1715 = vmul.f32 %v1703, %v1703
    %v1716 = vmul.f32 %v1704, %v1704
    %v1717 = vsub.f32 %v1713, %v1715
    %v1718 = vsub.f32 %v1714, %v1716
    %v1719 = vsub.f32 %v1695, %v1703
    %v1720 = vsub.f32 %v1696, %v1704
    %v1721 = vadd.f32 %v1717, 1e-05
    %v1722 = vadd.f32 %v1718, 1e-05
    %v1723 = vrsqrt.pop %v1721
    %v1724 = vrsqrt.pop %v1722
    %v1725 = vmul.f32 %v1719, %v1723
    %v1726 = vmul.f32 %v1720, %v1724
    %v1727 = vlaneseq
    %v1728 = vshrl.u32 %v1727, 7
    %v1729 = vsub.s32 4, %v1728
    %v1730 = vrot.slane %v1019, %v1729
    %v1731 = vmul.f32 %v1725, %v1730
    %v1732 = vmul.f32 %v1726, %v1730
    %v1733 = vlaneseq
    %v1734 = vshrl.u32 %v1733, 7
    %v1735 = vsub.s32 5, %v1734
    %v1736 = vrot.slane %v1019, %v1735
    %v1737 = vadd.f32 %v1731, %v1736
    %v1738 = vadd.f32 %v1732, %v1736
    %v1739 = vpack.c.bf16 %v1738, %v1737
    %v1741 = vlaneseq
    %v1742 = vshrl.u32 %v1741, 7
    %v1743 = vsub.s32 0, %v1742
    %v1744 = vrot.slane %v1022, %v1743
    %v1750 = vunpack.c.l.b16 %v1005
    %v1751 = vunpack.c.l.b16 %v1006
    %v1752 = vunpack.c.l.b16 %v1007
    %v1753 = vunpack.c.l.b16 %v1008
    %v1754 = vpack.c.b16 %v1751, %v1750
    %v1755 = vpack.c.b16 %v1753, %v1752
    %v1759 = vsel %vm103, %v1739, 0
    %1761 = vmatprep.subr.bf16.mxu0 0
    %1762 = vmatpush1.bf16.msra.mxu0 %v1754
    %1763 = vmatprep.subr.bf16.mxu0 0
    %1764 = vmatpush1.bf16.msra.mxu0 %v1755
    %1765 = vmatprep.subr.bf16.mxu0 0
    %1766 = vmatpush1.bf16.msra.mxu0 0
    %1767 = vmatprep.subr.bf16.mxu0 0
    %1768 = vmatpush1.bf16.msra.mxu0 0
    %1769 = vmatprep.subr.bf16.mxu0 0
    %1770 = vmatpush1.bf16.msra.mxu0 0
    %1771 = vmatprep.subr.bf16.mxu0 0
    %1772 = vmatpush1.bf16.msra.mxu0 0
    %1773 = vmatprep.subr.bf16.mxu0 0
    %1774 = vmatpush1.bf16.msra.mxu0 0
    %1775 = vmatprep.subr.bf16.mxu0 0
    %1776 = vmatpush1.bf16.msra.mxu0 0
    %1777 = vmatprep.subr.bf16.mxu0 0
    %1778 = vmatpush1.bf16.msra.mxu0 0
    %1779 = vmatprep.subr.bf16.mxu0 0
    %1780 = vmatpush1.bf16.msra.mxu0 0
    %1781 = vmatprep.subr.bf16.mxu0 0
    %1782 = vmatpush1.bf16.msra.mxu0 0
    %1783 = vmatprep.subr.bf16.mxu0 0
    %1784 = vmatpush1.bf16.msra.mxu0 0
    %1785 = vmatprep.subr.bf16.mxu0 0
    %1786 = vmatpush1.bf16.msra.mxu0 0
    %1787 = vmatprep.subr.bf16.mxu0 0
    %1788 = vmatpush1.bf16.msra.mxu0 0
    %1789 = vmatprep.subr.bf16.mxu0 0
    %1790 = vmatpush1.bf16.msra.mxu0 0
    %1791 = vmatprep.subr.bf16.mxu0 0
    %1792 = vmatpush1.bf16.msra.mxu0 0
    %1793 = vmatprep.mubr.bf16.mxu0 0
    %1794 = vmatmul.mubr.bf16.gmra.mrb[0].mxu0 %v1759
    %v1795 = vpop.f32.mrb[0].mxu0
    %v1796 = vadd.f32 %v1744, %v1795
    %v1797 = vpop.f32.mrb[0].mxu0
    %v1798 = vpop.f32.mrb[0].mxu0
    %v1799 = vadd.f32 %v1744, %v1798
    %v1800 = vpop.f32.mrb[0].mxu0
    %1801 = vdwg.mxu0
    %v1802 = vmax.f32 %v1796, 0.0
    %v1803 = vmax.f32 %v1799, 0.0
    %v1804 = vpack.c.bf16 %v1803, %v1802
    %v1805 = vlaneseq
    %v1806 = vshrl.u32 %v1805, 7
    %v1807 = vsub.s32 6, %v1806
    %v1808 = vrot.slane %v1019, %v1807
    %v1817 = vunpack.c.l.b16 %v1010
    %v1818 = vunpack.c.l.b16 %v1011
    %v1819 = vunpack.c.l.b16 %v1012
    %v1820 = vunpack.c.l.b16 %v1013
    %v1821 = vunpack.c.l.b16 %v1014
    %v1822 = vunpack.c.l.b16 %v1015
    %v1823 = vunpack.c.l.b16 %v1016
    %v1824 = vunpack.c.l.b16 %v1017
    %v1825 = vpack.c.b16 %v1818, %v1817
    %v1826 = vpack.c.b16 %v1820, %v1819
    %v1827 = vpack.c.b16 %v1822, %v1821
    %v1828 = vpack.c.b16 %v1824, %v1823
    %v1834 = vsel %vm905, %v1804, 0
    %1836 = vmatprep.subr.bf16.mxu0 0
    %1837 = vmatpush1.bf16.msra.mxu0 %v1825
    %1838 = vmatprep.subr.bf16.mxu0 0
    %1839 = vmatpush1.bf16.msra.mxu0 %v1826
    %1840 = vmatprep.subr.bf16.mxu0 0
    %1841 = vmatpush1.bf16.msra.mxu0 %v1827
    %1842 = vmatprep.subr.bf16.mxu0 0
    %1843 = vmatpush1.bf16.msra.mxu0 %v1828
    %1844 = vmatprep.subr.bf16.mxu0 0
    %1845 = vmatpush1.bf16.msra.mxu0 0
    %1846 = vmatprep.subr.bf16.mxu0 0
    %1847 = vmatpush1.bf16.msra.mxu0 0
    %1848 = vmatprep.subr.bf16.mxu0 0
    %1849 = vmatpush1.bf16.msra.mxu0 0
    %1850 = vmatprep.subr.bf16.mxu0 0
    %1851 = vmatpush1.bf16.msra.mxu0 0
    %1852 = vmatprep.subr.bf16.mxu0 0
    %1853 = vmatpush1.bf16.msra.mxu0 0
    %1854 = vmatprep.subr.bf16.mxu0 0
    %1855 = vmatpush1.bf16.msra.mxu0 0
    %1856 = vmatprep.subr.bf16.mxu0 0
    %1857 = vmatpush1.bf16.msra.mxu0 0
    %1858 = vmatprep.subr.bf16.mxu0 0
    %1859 = vmatpush1.bf16.msra.mxu0 0
    %1860 = vmatprep.subr.bf16.mxu0 0
    %1861 = vmatpush1.bf16.msra.mxu0 0
    %1862 = vmatprep.subr.bf16.mxu0 0
    %1863 = vmatpush1.bf16.msra.mxu0 0
    %1864 = vmatprep.subr.bf16.mxu0 0
    %1865 = vmatpush1.bf16.msra.mxu0 0
    %1866 = vmatprep.subr.bf16.mxu0 0
    %1867 = vmatpush1.bf16.msra.mxu0 0
    %1868 = vmatprep.mubr.bf16.mxu0 0
    %1869 = vmatmul.mubr.bf16.gmra.mrb[0].mxu0 %v1834
    %v1870 = vpop.f32.mrb[0].mxu0
    %v1871 = vadd.f32 %v1808, %v1870
    %v1872 = vpop.f32.mrb[0].mxu0
    %v1873 = vpop.f32.mrb[0].mxu0
    %v1874 = vadd.f32 %v1808, %v1873
    %v1875 = vpop.f32.mrb[0].mxu0
    %1876 = vdwg.mxu0
    %v1877 = vadd.f32 %v1737, %v1871
    %v1878 = vadd.f32 %v1738, %v1874
    %v1879 = vsel %vm103, %v1877, 0.0
    %1880 = vadd.xlane.f32.xlu0 %v1879
    %v1881 = vpop.xlane.xlu0 %1880
    %v1882 = vsel %vm103, %v1878, 0.0
    %1883 = vadd.xlane.f32.xlu0 %v1882
    %v1884 = vpop.xlane.xlu0 %1883
    %v1885 = vmul.f32 %v1881, %v774
    %v1886 = vmul.f32 %v1884, %v774
    %v1887 = vmul.f32 %v1877, %v1877
    %v1888 = vmul.f32 %v1878, %v1878
    %v1889 = vsel %vm103, %v1887, 0.0
    %1890 = vadd.xlane.f32.xlu0 %v1889
    %v1891 = vpop.xlane.xlu0 %1890
    %v1892 = vsel %vm103, %v1888, 0.0
    %1893 = vadd.xlane.f32.xlu0 %v1892
    %v1894 = vpop.xlane.xlu0 %1893
    %v1895 = vmul.f32 %v1891, %v774
    %v1896 = vmul.f32 %v1894, %v774
    %v1897 = vmul.f32 %v1885, %v1885
    %v1898 = vmul.f32 %v1886, %v1886
    %v1899 = vsub.f32 %v1895, %v1897
    %v1900 = vsub.f32 %v1896, %v1898
    %v1901 = vsub.f32 %v1877, %v1885
    %v1902 = vsub.f32 %v1878, %v1886
    %v1903 = vadd.f32 %v1899, 1e-05
    %v1904 = vadd.f32 %v1900, 1e-05
    %v1905 = vrsqrt.pop %v1903
    %v1906 = vrsqrt.pop %v1904
    %v1907 = vmul.f32 %v1901, %v1905
    %v1908 = vmul.f32 %v1902, %v1906
    %v1909 = vlaneseq
    %v1910 = vshrl.u32 %v1909, 7
    %v1911 = vsub.s32 7, %v1910
    %v1912 = vrot.slane %v1019, %v1911
    %v1913 = vmul.f32 %v1907, %v1912
    %v1914 = vmul.f32 %v1908, %v1912
    %v1915 = vlaneseq
    %v1916 = vshrl.u32 %v1915, 7
    %v1917 = vsub.s32 0, %v1916
    %v1918 = vrot.slane %v1020, %v1917
    %v1919 = vadd.f32 %v1913, %v1918
    %v1920 = vadd.f32 %v1914, %v1918
    %s1921 = scalar_lea.vmem %s1, 16
    %v1922 = vld [vmem:[%s1921] sm:$0xff]
    %v1923 = vld [vmem:[%s1921 + $0x8] sm:$0xff]
    %v1924 = vsub.f32 %v1922, 1.0
    %v1925 = vsub.f32 %v1923, 1.0
    %v1926 = vmul.f32 %v1924, 1e+30
    %v1927 = vmul.f32 %v1925, 1e+30
    %v1928 = vpack.c.bf16 %v1920, %v1919
    %v1930 = vsel %vm103, %v1928, 0
    %1932 = vmatprep.subr.bf16.mxu0 0
    %1933 = vmatpush1.bf16.msra.mxu0 %v99
    %1934 = vmatprep.subr.bf16.mxu0 0
    %1935 = vmatpush1.bf16.msra.mxu0 %v100
    %1936 = vmatprep.subr.bf16.mxu0 0
    %1937 = vmatpush1.bf16.msra.mxu0 0
    %1938 = vmatprep.subr.bf16.mxu0 0
    %1939 = vmatpush1.bf16.msra.mxu0 0
    %1940 = vmatprep.subr.bf16.mxu0 0
    %1941 = vmatpush1.bf16.msra.mxu0 0
    %1942 = vmatprep.subr.bf16.mxu0 0
    %1943 = vmatpush1.bf16.msra.mxu0 0
    %1944 = vmatprep.subr.bf16.mxu0 0
    %1945 = vmatpush1.bf16.msra.mxu0 0
    %1946 = vmatprep.subr.bf16.mxu0 0
    %1947 = vmatpush1.bf16.msra.mxu0 0
    %1948 = vmatprep.subr.bf16.mxu0 0
    %1949 = vmatpush1.bf16.msra.mxu0 0
    %1950 = vmatprep.subr.bf16.mxu0 0
    %1951 = vmatpush1.bf16.msra.mxu0 0
    %1952 = vmatprep.subr.bf16.mxu0 0
    %1953 = vmatpush1.bf16.msra.mxu0 0
    %1954 = vmatprep.subr.bf16.mxu0 0
    %1955 = vmatpush1.bf16.msra.mxu0 0
    %1956 = vmatprep.subr.bf16.mxu0 0
    %1957 = vmatpush1.bf16.msra.mxu0 0
    %1958 = vmatprep.subr.bf16.mxu0 0
    %1959 = vmatpush1.bf16.msra.mxu0 0
    %1960 = vmatprep.subr.bf16.mxu0 0
    %1961 = vmatpush1.bf16.msra.mxu0 0
    %1962 = vmatprep.subr.bf16.mxu0 0
    %1963 = vmatpush1.bf16.msra.mxu0 0
    %1964 = vmatprep.mubr.bf16.mxu0 0
    %1965 = vmatmul.mubr.bf16.gmra.mrb[0].mxu0 %v1930
    %v1966 = vpop.f32.mrb[0].mxu0
    %v1967 = vadd.f32 0.0, %v1966
    %v1968 = vpop.f32.mrb[0].mxu0
    %v1969 = vpop.f32.mrb[0].mxu0
    %v1970 = vadd.f32 0.0, %v1969
    %v1971 = vpop.f32.mrb[0].mxu0
    %1972 = vdwg.mxu0
    %v1973 = vadd.f32 %v1967, %v151
    %v1974 = vadd.f32 %v1970, %v151
    %v1975 = vmul.f32 %v1973, 0.35355338
    %v1976 = vmul.f32 %v1974, 0.35355338
    %v1977 = vpack.c.bf16 %v1976, %v1975
    %v1978 = vadd.f32 %v1967, %v163
    %v1979 = vadd.f32 %v1970, %v163
    %v1980 = vpack.c.bf16 %v1979, %v1978
    %v1981 = vadd.f32 %v1967, %v174
    %v1982 = vadd.f32 %v1970, %v174
    %v1983 = vpack.c.bf16 %v1982, %v1981
    %1985 = vrot.lane.b32.xlu0 %v1980, 96
    %v1986 = vpop.permute.xlu0 %1985
    %v1988 = vsel %vm182, %v1977, 0
    %v1991 = vsel %vm182, %v1986, 0
    %1993 = vmatprep.subr.bf16.mxu0 0
    %1994 = vmatpush1.bf16.xpose.msra.mxu0 %v1991
    %1995 = vmatprep.subr.bf16.mxu0 0
    %1996 = vmatpush1.bf16.xpose.msra.mxu0 0
    %1997 = vmatprep.subr.bf16.mxu0 0
    %1998 = vmatpush1.bf16.xpose.msra.mxu0 0
    %1999 = vmatprep.subr.bf16.mxu0 0
    %2000 = vmatpush1.bf16.xpose.msra.mxu0 0
    %2001 = vmatprep.subr.bf16.mxu0 0
    %2002 = vmatpush1.bf16.xpose.msra.mxu0 0
    %2003 = vmatprep.subr.bf16.mxu0 0
    %2004 = vmatpush1.bf16.xpose.msra.mxu0 0
    %2005 = vmatprep.subr.bf16.mxu0 0
    %2006 = vmatpush1.bf16.xpose.msra.mxu0 0
    %2007 = vmatprep.subr.bf16.mxu0 0
    %2008 = vmatpush1.bf16.xpose.msra.mxu0 0
    %2009 = vmatprep.subr.bf16.mxu0 0
    %2010 = vmatpush1.bf16.xpose.msra.mxu0 0
    %2011 = vmatprep.subr.bf16.mxu0 0
    %2012 = vmatpush1.bf16.xpose.msra.mxu0 0
    %2013 = vmatprep.subr.bf16.mxu0 0
    %2014 = vmatpush1.bf16.xpose.msra.mxu0 0
    %2015 = vmatprep.subr.bf16.mxu0 0
    %2016 = vmatpush1.bf16.xpose.msra.mxu0 0
    %2017 = vmatprep.subr.bf16.mxu0 0
    %2018 = vmatpush1.bf16.xpose.msra.mxu0 0
    %2019 = vmatprep.subr.bf16.mxu0 0
    %2020 = vmatpush1.bf16.xpose.msra.mxu0 0
    %2021 = vmatprep.subr.bf16.mxu0 0
    %2022 = vmatpush1.bf16.xpose.msra.mxu0 0
    %2023 = vmatprep.subr.bf16.mxu0 0
    %2024 = vmatpush1.bf16.xpose.msra.mxu0 0
    %2025 = vmatprep.mubr.bf16.mxu0 0
    %2026 = vmatmul.mubr.bf16.gmra.mrb[0].mxu0 %v1988
    %v2027 = vpop.f32.mrb[0].mxu0
    %v2028 = vadd.f32 %v1926, %v2027
    %v2029 = vpop.f32.mrb[0].mxu0
    %v2030 = vpop.f32.mrb[0].mxu0
    %v2031 = vadd.f32 %v1927, %v2030
    %v2032 = vpop.f32.mrb[0].mxu0
    %2033 = vdwg.mxu0
    %v2034 = vsel %vm230, %v2028, -inf
    %2035 = vmax.xlane.f32.xlu0 %v2034
    %v2036 = vpop.xlane.xlu0 %2035
    %v2037 = vsel %vm230, %v2031, -inf
    %2038 = vmax.xlane.f32.xlu0 %v2037
    %v2039 = vpop.xlane.xlu0 %2038
    %v2040 = vsub.f32 %v2028, %v2036
    %v2041 = vsub.f32 %v2031, %v2039
    %v2042 = vmul.f32 %v2040, 1.442695
    %v2043 = vpow.pop %v2042
    %v2044 = vmul.f32 %v2041, 1.442695
    %v2045 = vpow.pop %v2044
    %v2046 = vmul.f32 %v2043, %v1922
    %v2047 = vmul.f32 %v2045, %v1923
    %v2048 = vsel %vm230, %v2046, 0.0
    %2049 = vadd.xlane.f32.xlu0 %v2048
    %v2050 = vpop.xlane.xlu0 %2049
    %v2051 = vsel %vm230, %v2047, 0.0
    %2052 = vadd.xlane.f32.xlu0 %v2051
    %v2053 = vpop.xlane.xlu0 %2052
    %v2054 = vrcp.pop %v2050
    %v2055 = vrcp.pop %v2053
    %v2056 = vmul.f32 %v2046, %v2054
    %v2057 = vmul.f32 %v2047, %v2055
    %v2058 = vpack.c.bf16 %v2057, %v2056
    %2060 = vrot.lane.b32.xlu0 %v1983, 64
    %v2061 = vpop.permute.xlu0 %2060
    %v2064 = vsel %vm230, %v2058, 0
    %2066 = vmatprep.subr.bf16.mxu0 0
    %2067 = vmatpush1.bf16.msra.mxu0 %v2061
    %2068 = vmatprep.subr.bf16.mxu0 0
    %2069 = vmatpush1.bf16.msra.mxu0 0
    %2070 = vmatprep.subr.bf16.mxu0 0
    %2071 = vmatpush1.bf16.msra.mxu0 0
    %2072 = vmatprep.subr.bf16.mxu0 0
    %2073 = vmatpush1.bf16.msra.mxu0 0
    %2074 = vmatprep.subr.bf16.mxu0 0
    %2075 = vmatpush1.bf16.msra.mxu0 0
    %2076 = vmatprep.subr.bf16.mxu0 0
    %2077 = vmatpush1.bf16.msra.mxu0 0
    %2078 = vmatprep.subr.bf16.mxu0 0
    %2079 = vmatpush1.bf16.msra.mxu0 0
    %2080 = vmatprep.subr.bf16.mxu0 0
    %2081 = vmatpush1.bf16.msra.mxu0 0
    %2082 = vmatprep.subr.bf16.mxu0 0
    %2083 = vmatpush1.bf16.msra.mxu0 0
    %2084 = vmatprep.subr.bf16.mxu0 0
    %2085 = vmatpush1.bf16.msra.mxu0 0
    %2086 = vmatprep.subr.bf16.mxu0 0
    %2087 = vmatpush1.bf16.msra.mxu0 0
    %2088 = vmatprep.subr.bf16.mxu0 0
    %2089 = vmatpush1.bf16.msra.mxu0 0
    %2090 = vmatprep.subr.bf16.mxu0 0
    %2091 = vmatpush1.bf16.msra.mxu0 0
    %2092 = vmatprep.subr.bf16.mxu0 0
    %2093 = vmatpush1.bf16.msra.mxu0 0
    %2094 = vmatprep.subr.bf16.mxu0 0
    %2095 = vmatpush1.bf16.msra.mxu0 0
    %2096 = vmatprep.subr.bf16.mxu0 0
    %2097 = vmatpush1.bf16.msra.mxu0 0
    %2098 = vmatprep.mubr.bf16.mxu0 0
    %2099 = vmatmul.mubr.bf16.gmra.mrb[0].mxu0 %v2064
    %v2100 = vpop.f32.mrb[0].mxu0
    %v2101 = vadd.f32 0.0, %v2100
    %v2102 = vpop.f32.mrb[0].mxu0
    %v2103 = vpop.f32.mrb[0].mxu0
    %v2104 = vadd.f32 0.0, %v2103
    %v2105 = vpop.f32.mrb[0].mxu0
    %2106 = vdwg.mxu0
    %2108 = vrot.lane.b32.xlu0 %v1977, 120
    %v2109 = vpop.permute.xlu0 %2108
    %2110 = vrot.lane.b32.xlu0 %v1980, 88
    %v2111 = vpop.permute.xlu0 %2110
    %v2113 = vsel %vm182, %v2109, 0
    %v2116 = vsel %vm182, %v2111, 0
    %2118 = vmatprep.subr.bf16.mxu0 0
    %2119 = vmatpush1.bf16.xpose.msra.mxu0 %v2116
    %2120 = vmatprep.subr.bf16.mxu0 0
    %2121 = vmatpush1.bf16.xpose.msra.mxu0 0
    %2122 = vmatprep.subr.bf16.mxu0 0
    %2123 = vmatpush1.bf16.xpose.msra.mxu0 0
    %2124 = vmatprep.subr.bf16.mxu0 0
    %2125 = vmatpush1.bf16.xpose.msra.mxu0 0
    %2126 = vmatprep.subr.bf16.mxu0 0
    %2127 = vmatpush1.bf16.xpose.msra.mxu0 0
    %2128 = vmatprep.subr.bf16.mxu0 0
    %2129 = vmatpush1.bf16.xpose.msra.mxu0 0
    %2130 = vmatprep.subr.bf16.mxu0 0
    %2131 = vmatpush1.bf16.xpose.msra.mxu0 0
    %2132 = vmatprep.subr.bf16.mxu0 0
    %2133 = vmatpush1.bf16.xpose.msra.mxu0 0
    %2134 = vmatprep.subr.bf16.mxu0 0
    %2135 = vmatpush1.bf16.xpose.msra.mxu0 0
    %2136 = vmatprep.subr.bf16.mxu0 0
    %2137 = vmatpush1.bf16.xpose.msra.mxu0 0
    %2138 = vmatprep.subr.bf16.mxu0 0
    %2139 = vmatpush1.bf16.xpose.msra.mxu0 0
    %2140 = vmatprep.subr.bf16.mxu0 0
    %2141 = vmatpush1.bf16.xpose.msra.mxu0 0
    %2142 = vmatprep.subr.bf16.mxu0 0
    %2143 = vmatpush1.bf16.xpose.msra.mxu0 0
    %2144 = vmatprep.subr.bf16.mxu0 0
    %2145 = vmatpush1.bf16.xpose.msra.mxu0 0
    %2146 = vmatprep.subr.bf16.mxu0 0
    %2147 = vmatpush1.bf16.xpose.msra.mxu0 0
    %2148 = vmatprep.subr.bf16.mxu0 0
    %2149 = vmatpush1.bf16.xpose.msra.mxu0 0
    %2150 = vmatprep.mubr.bf16.mxu0 0
    %2151 = vmatmul.mubr.bf16.gmra.mrb[0].mxu0 %v2113
    %v2152 = vpop.f32.mrb[0].mxu0
    %v2153 = vadd.f32 %v1926, %v2152
    %v2154 = vpop.f32.mrb[0].mxu0
    %v2155 = vpop.f32.mrb[0].mxu0
    %v2156 = vadd.f32 %v1927, %v2155
    %v2157 = vpop.f32.mrb[0].mxu0
    %2158 = vdwg.mxu0
    %v2159 = vsel %vm230, %v2153, -inf
    %2160 = vmax.xlane.f32.xlu0 %v2159
    %v2161 = vpop.xlane.xlu0 %2160
    %v2162 = vsel %vm230, %v2156, -inf
    %2163 = vmax.xlane.f32.xlu0 %v2162
    %v2164 = vpop.xlane.xlu0 %2163
    %v2165 = vsub.f32 %v2153, %v2161
    %v2166 = vsub.f32 %v2156, %v2164
    %v2167 = vmul.f32 %v2165, 1.442695
    %v2168 = vpow.pop %v2167
    %v2169 = vmul.f32 %v2166, 1.442695
    %v2170 = vpow.pop %v2169
    %v2171 = vmul.f32 %v2168, %v1922
    %v2172 = vmul.f32 %v2170, %v1923
    %v2173 = vsel %vm230, %v2171, 0.0
    %2174 = vadd.xlane.f32.xlu0 %v2173
    %v2175 = vpop.xlane.xlu0 %2174
    %v2176 = vsel %vm230, %v2172, 0.0
    %2177 = vadd.xlane.f32.xlu0 %v2176
    %v2178 = vpop.xlane.xlu0 %2177
    %v2179 = vrcp.pop %v2175
    %v2180 = vrcp.pop %v2178
    %v2181 = vmul.f32 %v2171, %v2179
    %v2182 = vmul.f32 %v2172, %v2180
    %v2183 = vpack.c.bf16 %v2182, %v2181
    %2184 = vrot.lane.b32.xlu0 %v1983, 56
    %v2185 = vpop.permute.xlu0 %2184
    %v2188 = vsel %vm230, %v2183, 0
    %2190 = vmatprep.subr.bf16.mxu0 0
    %2191 = vmatpush1.bf16.msra.mxu0 %v2185
    %2192 = vmatprep.subr.bf16.mxu0 0
    %2193 = vmatpush1.bf16.msra.mxu0 0
    %2194 = vmatprep.subr.bf16.mxu0 0
    %2195 = vmatpush1.bf16.msra.mxu0 0
    %2196 = vmatprep.subr.bf16.mxu0 0
    %2197 = vmatpush1.bf16.msra.mxu0 0
    %2198 = vmatprep.subr.bf16.mxu0 0
    %2199 = vmatpush1.bf16.msra.mxu0 0
    %2200 = vmatprep.subr.bf16.mxu0 0
    %2201 = vmatpush1.bf16.msra.mxu0 0
    %2202 = vmatprep.subr.bf16.mxu0 0
    %2203 = vmatpush1.bf16.msra.mxu0 0
    %2204 = vmatprep.subr.bf16.mxu0 0
    %2205 = vmatpush1.bf16.msra.mxu0 0
    %2206 = vmatprep.subr.bf16.mxu0 0
    %2207 = vmatpush1.bf16.msra.mxu0 0
    %2208 = vmatprep.subr.bf16.mxu0 0
    %2209 = vmatpush1.bf16.msra.mxu0 0
    %2210 = vmatprep.subr.bf16.mxu0 0
    %2211 = vmatpush1.bf16.msra.mxu0 0
    %2212 = vmatprep.subr.bf16.mxu0 0
    %2213 = vmatpush1.bf16.msra.mxu0 0
    %2214 = vmatprep.subr.bf16.mxu0 0
    %2215 = vmatpush1.bf16.msra.mxu0 0
    %2216 = vmatprep.subr.bf16.mxu0 0
    %2217 = vmatpush1.bf16.msra.mxu0 0
    %2218 = vmatprep.subr.bf16.mxu0 0
    %2219 = vmatpush1.bf16.msra.mxu0 0
    %2220 = vmatprep.subr.bf16.mxu0 0
    %2221 = vmatpush1.bf16.msra.mxu0 0
    %2222 = vmatprep.mubr.bf16.mxu0 0
    %2223 = vmatmul.mubr.bf16.gmra.mrb[0].mxu0 %v2188
    %v2224 = vpop.f32.mrb[0].mxu0
    %v2225 = vadd.f32 0.0, %v2224
    %v2226 = vpop.f32.mrb[0].mxu0
    %v2227 = vpop.f32.mrb[0].mxu0
    %v2228 = vadd.f32 0.0, %v2227
    %v2229 = vpop.f32.mrb[0].mxu0
    %2230 = vdwg.mxu0
    %2231 = vrot.lane.b32.xlu0 %v1977, 112
    %v2232 = vpop.permute.xlu0 %2231
    %2233 = vrot.lane.b32.xlu0 %v1980, 80
    %v2234 = vpop.permute.xlu0 %2233
    %v2236 = vsel %vm182, %v2232, 0
    %v2239 = vsel %vm182, %v2234, 0
    %2241 = vmatprep.subr.bf16.mxu0 0
    %2242 = vmatpush1.bf16.xpose.msra.mxu0 %v2239
    %2243 = vmatprep.subr.bf16.mxu0 0
    %2244 = vmatpush1.bf16.xpose.msra.mxu0 0
    %2245 = vmatprep.subr.bf16.mxu0 0
    %2246 = vmatpush1.bf16.xpose.msra.mxu0 0
    %2247 = vmatprep.subr.bf16.mxu0 0
    %2248 = vmatpush1.bf16.xpose.msra.mxu0 0
    %2249 = vmatprep.subr.bf16.mxu0 0
    %2250 = vmatpush1.bf16.xpose.msra.mxu0 0
    %2251 = vmatprep.subr.bf16.mxu0 0
    %2252 = vmatpush1.bf16.xpose.msra.mxu0 0
    %2253 = vmatprep.subr.bf16.mxu0 0
    %2254 = vmatpush1.bf16.xpose.msra.mxu0 0
    %2255 = vmatprep.subr.bf16.mxu0 0
    %2256 = vmatpush1.bf16.xpose.msra.mxu0 0
    %2257 = vmatprep.subr.bf16.mxu0 0
    %2258 = vmatpush1.bf16.xpose.msra.mxu0 0
    %2259 = vmatprep.subr.bf16.mxu0 0
    %2260 = vmatpush1.bf16.xpose.msra.mxu0 0
    %2261 = vmatprep.subr.bf16.mxu0 0
    %2262 = vmatpush1.bf16.xpose.msra.mxu0 0
    %2263 = vmatprep.subr.bf16.mxu0 0
    %2264 = vmatpush1.bf16.xpose.msra.mxu0 0
    %2265 = vmatprep.subr.bf16.mxu0 0
    %2266 = vmatpush1.bf16.xpose.msra.mxu0 0
    %2267 = vmatprep.subr.bf16.mxu0 0
    %2268 = vmatpush1.bf16.xpose.msra.mxu0 0
    %2269 = vmatprep.subr.bf16.mxu0 0
    %2270 = vmatpush1.bf16.xpose.msra.mxu0 0
    %2271 = vmatprep.subr.bf16.mxu0 0
    %2272 = vmatpush1.bf16.xpose.msra.mxu0 0
    %2273 = vmatprep.mubr.bf16.mxu0 0
    %2274 = vmatmul.mubr.bf16.gmra.mrb[0].mxu0 %v2236
    %v2275 = vpop.f32.mrb[0].mxu0
    %v2276 = vadd.f32 %v1926, %v2275
    %v2277 = vpop.f32.mrb[0].mxu0
    %v2278 = vpop.f32.mrb[0].mxu0
    %v2279 = vadd.f32 %v1927, %v2278
    %v2280 = vpop.f32.mrb[0].mxu0
    %2281 = vdwg.mxu0
    %v2282 = vsel %vm230, %v2276, -inf
    %2283 = vmax.xlane.f32.xlu0 %v2282
    %v2284 = vpop.xlane.xlu0 %2283
    %v2285 = vsel %vm230, %v2279, -inf
    %2286 = vmax.xlane.f32.xlu0 %v2285
    %v2287 = vpop.xlane.xlu0 %2286
    %v2288 = vsub.f32 %v2276, %v2284
    %v2289 = vsub.f32 %v2279, %v2287
    %v2290 = vmul.f32 %v2288, 1.442695
    %v2291 = vpow.pop %v2290
    %v2292 = vmul.f32 %v2289, 1.442695
    %v2293 = vpow.pop %v2292
    %v2294 = vmul.f32 %v2291, %v1922
    %v2295 = vmul.f32 %v2293, %v1923
    %v2296 = vsel %vm230, %v2294, 0.0
    %2297 = vadd.xlane.f32.xlu0 %v2296
    %v2298 = vpop.xlane.xlu0 %2297
    %v2299 = vsel %vm230, %v2295, 0.0
    %2300 = vadd.xlane.f32.xlu0 %v2299
    %v2301 = vpop.xlane.xlu0 %2300
    %v2302 = vrcp.pop %v2298
    %v2303 = vrcp.pop %v2301
    %v2304 = vmul.f32 %v2294, %v2302
    %v2305 = vmul.f32 %v2295, %v2303
    %v2306 = vpack.c.bf16 %v2305, %v2304
    %2307 = vrot.lane.b32.xlu0 %v1983, 48
    %v2308 = vpop.permute.xlu0 %2307
    %v2311 = vsel %vm230, %v2306, 0
    %2313 = vmatprep.subr.bf16.mxu0 0
    %2314 = vmatpush1.bf16.msra.mxu0 %v2308
    %2315 = vmatprep.subr.bf16.mxu0 0
    %2316 = vmatpush1.bf16.msra.mxu0 0
    %2317 = vmatprep.subr.bf16.mxu0 0
    %2318 = vmatpush1.bf16.msra.mxu0 0
    %2319 = vmatprep.subr.bf16.mxu0 0
    %2320 = vmatpush1.bf16.msra.mxu0 0
    %2321 = vmatprep.subr.bf16.mxu0 0
    %2322 = vmatpush1.bf16.msra.mxu0 0
    %2323 = vmatprep.subr.bf16.mxu0 0
    %2324 = vmatpush1.bf16.msra.mxu0 0
    %2325 = vmatprep.subr.bf16.mxu0 0
    %2326 = vmatpush1.bf16.msra.mxu0 0
    %2327 = vmatprep.subr.bf16.mxu0 0
    %2328 = vmatpush1.bf16.msra.mxu0 0
    %2329 = vmatprep.subr.bf16.mxu0 0
    %2330 = vmatpush1.bf16.msra.mxu0 0
    %2331 = vmatprep.subr.bf16.mxu0 0
    %2332 = vmatpush1.bf16.msra.mxu0 0
    %2333 = vmatprep.subr.bf16.mxu0 0
    %2334 = vmatpush1.bf16.msra.mxu0 0
    %2335 = vmatprep.subr.bf16.mxu0 0
    %2336 = vmatpush1.bf16.msra.mxu0 0
    %2337 = vmatprep.subr.bf16.mxu0 0
    %2338 = vmatpush1.bf16.msra.mxu0 0
    %2339 = vmatprep.subr.bf16.mxu0 0
    %2340 = vmatpush1.bf16.msra.mxu0 0
    %2341 = vmatprep.subr.bf16.mxu0 0
    %2342 = vmatpush1.bf16.msra.mxu0 0
    %2343 = vmatprep.subr.bf16.mxu0 0
    %2344 = vmatpush1.bf16.msra.mxu0 0
    %2345 = vmatprep.mubr.bf16.mxu0 0
    %2346 = vmatmul.mubr.bf16.gmra.mrb[0].mxu0 %v2311
    %v2347 = vpop.f32.mrb[0].mxu0
    %v2348 = vadd.f32 0.0, %v2347
    %v2349 = vpop.f32.mrb[0].mxu0
    %v2350 = vpop.f32.mrb[0].mxu0
    %v2351 = vadd.f32 0.0, %v2350
    %v2352 = vpop.f32.mrb[0].mxu0
    %2353 = vdwg.mxu0
    %2354 = vrot.lane.b32.xlu0 %v1977, 104
    %v2355 = vpop.permute.xlu0 %2354
    %2356 = vrot.lane.b32.xlu0 %v1980, 72
    %v2357 = vpop.permute.xlu0 %2356
    %v2359 = vsel %vm182, %v2355, 0
    %v2362 = vsel %vm182, %v2357, 0
    %2364 = vmatprep.subr.bf16.mxu0 0
    %2365 = vmatpush1.bf16.xpose.msra.mxu0 %v2362
    %2366 = vmatprep.subr.bf16.mxu0 0
    %2367 = vmatpush1.bf16.xpose.msra.mxu0 0
    %2368 = vmatprep.subr.bf16.mxu0 0
    %2369 = vmatpush1.bf16.xpose.msra.mxu0 0
    %2370 = vmatprep.subr.bf16.mxu0 0
    %2371 = vmatpush1.bf16.xpose.msra.mxu0 0
    %2372 = vmatprep.subr.bf16.mxu0 0
    %2373 = vmatpush1.bf16.xpose.msra.mxu0 0
    %2374 = vmatprep.subr.bf16.mxu0 0
    %2375 = vmatpush1.bf16.xpose.msra.mxu0 0
    %2376 = vmatprep.subr.bf16.mxu0 0
    %2377 = vmatpush1.bf16.xpose.msra.mxu0 0
    %2378 = vmatprep.subr.bf16.mxu0 0
    %2379 = vmatpush1.bf16.xpose.msra.mxu0 0
    %2380 = vmatprep.subr.bf16.mxu0 0
    %2381 = vmatpush1.bf16.xpose.msra.mxu0 0
    %2382 = vmatprep.subr.bf16.mxu0 0
    %2383 = vmatpush1.bf16.xpose.msra.mxu0 0
    %2384 = vmatprep.subr.bf16.mxu0 0
    %2385 = vmatpush1.bf16.xpose.msra.mxu0 0
    %2386 = vmatprep.subr.bf16.mxu0 0
    %2387 = vmatpush1.bf16.xpose.msra.mxu0 0
    %2388 = vmatprep.subr.bf16.mxu0 0
    %2389 = vmatpush1.bf16.xpose.msra.mxu0 0
    %2390 = vmatprep.subr.bf16.mxu0 0
    %2391 = vmatpush1.bf16.xpose.msra.mxu0 0
    %2392 = vmatprep.subr.bf16.mxu0 0
    %2393 = vmatpush1.bf16.xpose.msra.mxu0 0
    %2394 = vmatprep.subr.bf16.mxu0 0
    %2395 = vmatpush1.bf16.xpose.msra.mxu0 0
    %2396 = vmatprep.mubr.bf16.mxu0 0
    %2397 = vmatmul.mubr.bf16.gmra.mrb[0].mxu0 %v2359
    %v2398 = vpop.f32.mrb[0].mxu0
    %v2399 = vadd.f32 %v1926, %v2398
    %v2400 = vpop.f32.mrb[0].mxu0
    %v2401 = vpop.f32.mrb[0].mxu0
    %v2402 = vadd.f32 %v1927, %v2401
    %v2403 = vpop.f32.mrb[0].mxu0
    %2404 = vdwg.mxu0
    %v2405 = vsel %vm230, %v2399, -inf
    %2406 = vmax.xlane.f32.xlu0 %v2405
    %v2407 = vpop.xlane.xlu0 %2406
    %v2408 = vsel %vm230, %v2402, -inf
    %2409 = vmax.xlane.f32.xlu0 %v2408
    %v2410 = vpop.xlane.xlu0 %2409
    %v2411 = vsub.f32 %v2399, %v2407
    %v2412 = vsub.f32 %v2402, %v2410
    %v2413 = vmul.f32 %v2411, 1.442695
    %v2414 = vpow.pop %v2413
    %v2415 = vmul.f32 %v2412, 1.442695
    %v2416 = vpow.pop %v2415
    %v2417 = vmul.f32 %v2414, %v1922
    %v2418 = vmul.f32 %v2416, %v1923
    %v2419 = vsel %vm230, %v2417, 0.0
    %2420 = vadd.xlane.f32.xlu0 %v2419
    %v2421 = vpop.xlane.xlu0 %2420
    %v2422 = vsel %vm230, %v2418, 0.0
    %2423 = vadd.xlane.f32.xlu0 %v2422
    %v2424 = vpop.xlane.xlu0 %2423
    %v2425 = vrcp.pop %v2421
    %v2426 = vrcp.pop %v2424
    %v2427 = vmul.f32 %v2417, %v2425
    %v2428 = vmul.f32 %v2418, %v2426
    %v2429 = vpack.c.bf16 %v2428, %v2427
    %2430 = vrot.lane.b32.xlu0 %v1983, 40
    %v2431 = vpop.permute.xlu0 %2430
    %v2434 = vsel %vm230, %v2429, 0
    %2436 = vmatprep.subr.bf16.mxu0 0
    %2437 = vmatpush1.bf16.msra.mxu0 %v2431
    %2438 = vmatprep.subr.bf16.mxu0 0
    %2439 = vmatpush1.bf16.msra.mxu0 0
    %2440 = vmatprep.subr.bf16.mxu0 0
    %2441 = vmatpush1.bf16.msra.mxu0 0
    %2442 = vmatprep.subr.bf16.mxu0 0
    %2443 = vmatpush1.bf16.msra.mxu0 0
    %2444 = vmatprep.subr.bf16.mxu0 0
    %2445 = vmatpush1.bf16.msra.mxu0 0
    %2446 = vmatprep.subr.bf16.mxu0 0
    %2447 = vmatpush1.bf16.msra.mxu0 0
    %2448 = vmatprep.subr.bf16.mxu0 0
    %2449 = vmatpush1.bf16.msra.mxu0 0
    %2450 = vmatprep.subr.bf16.mxu0 0
    %2451 = vmatpush1.bf16.msra.mxu0 0
    %2452 = vmatprep.subr.bf16.mxu0 0
    %2453 = vmatpush1.bf16.msra.mxu0 0
    %2454 = vmatprep.subr.bf16.mxu0 0
    %2455 = vmatpush1.bf16.msra.mxu0 0
    %2456 = vmatprep.subr.bf16.mxu0 0
    %2457 = vmatpush1.bf16.msra.mxu0 0
    %2458 = vmatprep.subr.bf16.mxu0 0
    %2459 = vmatpush1.bf16.msra.mxu0 0
    %2460 = vmatprep.subr.bf16.mxu0 0
    %2461 = vmatpush1.bf16.msra.mxu0 0
    %2462 = vmatprep.subr.bf16.mxu0 0
    %2463 = vmatpush1.bf16.msra.mxu0 0
    %2464 = vmatprep.subr.bf16.mxu0 0
    %2465 = vmatpush1.bf16.msra.mxu0 0
    %2466 = vmatprep.subr.bf16.mxu0 0
    %2467 = vmatpush1.bf16.msra.mxu0 0
    %2468 = vmatprep.mubr.bf16.mxu0 0
    %2469 = vmatmul.mubr.bf16.gmra.mrb[0].mxu0 %v2434
    %v2470 = vpop.f32.mrb[0].mxu0
    %v2471 = vadd.f32 0.0, %v2470
    %v2472 = vpop.f32.mrb[0].mxu0
    %v2473 = vpop.f32.mrb[0].mxu0
    %v2474 = vadd.f32 0.0, %v2473
    %v2475 = vpop.f32.mrb[0].mxu0
    %2476 = vdwg.mxu0
    %2479 = vrot.lane.b32.xlu0 %v2225, 8
    %v2480 = vpop.permute.xlu0 %2479
    %2481 = vrot.lane.b32.xlu0 %v2228, 8
    %v2482 = vpop.permute.xlu0 %2481
    %2487 = vrot.lane.b32.xlu0 %v2348, 16
    %v2488 = vpop.permute.xlu0 %2487
    %2489 = vrot.lane.b32.xlu0 %v2351, 16
    %v2490 = vpop.permute.xlu0 %2489
    %2495 = vrot.lane.b32.xlu0 %v2471, 24
    %v2496 = vpop.permute.xlu0 %2495
    %2497 = vrot.lane.b32.xlu0 %v2474, 24
    %v2498 = vpop.permute.xlu0 %2497
    %v2501 = vsel %vm182, %v2101, %v2480
    %v2502 = vsel %vm182, %v2104, %v2482
    %v2503 = vsel %vm230, %v2501, %v2488
    %v2504 = vsel %vm230, %v2502, %v2490
    %v2505 = vsel %vm702, %v2503, %v2496
    %v2506 = vsel %vm702, %v2504, %v2498
    %v2507 = vpack.c.bf16 %v2506, %v2505
    %v2509 = vsel %vm103, %v2507, 0
    %2511 = vmatprep.subr.bf16.mxu0 0
    %2512 = vmatpush1.bf16.msra.mxu0 %v718
    %2513 = vmatprep.subr.bf16.mxu0 0
    %2514 = vmatpush1.bf16.msra.mxu0 %v719
    %2515 = vmatprep.subr.bf16.mxu0 0
    %2516 = vmatpush1.bf16.msra.mxu0 0
    %2517 = vmatprep.subr.bf16.mxu0 0
    %2518 = vmatpush1.bf16.msra.mxu0 0
    %2519 = vmatprep.subr.bf16.mxu0 0
    %2520 = vmatpush1.bf16.msra.mxu0 0
    %2521 = vmatprep.subr.bf16.mxu0 0
    %2522 = vmatpush1.bf16.msra.mxu0 0
    %2523 = vmatprep.subr.bf16.mxu0 0
    %2524 = vmatpush1.bf16.msra.mxu0 0
    %2525 = vmatprep.subr.bf16.mxu0 0
    %2526 = vmatpush1.bf16.msra.mxu0 0
    %2527 = vmatprep.subr.bf16.mxu0 0
    %2528 = vmatpush1.bf16.msra.mxu0 0
    %2529 = vmatprep.subr.bf16.mxu0 0
    %2530 = vmatpush1.bf16.msra.mxu0 0
    %2531 = vmatprep.subr.bf16.mxu0 0
    %2532 = vmatpush1.bf16.msra.mxu0 0
    %2533 = vmatprep.subr.bf16.mxu0 0
    %2534 = vmatpush1.bf16.msra.mxu0 0
    %2535 = vmatprep.subr.bf16.mxu0 0
    %2536 = vmatpush1.bf16.msra.mxu0 0
    %2537 = vmatprep.subr.bf16.mxu0 0
    %2538 = vmatpush1.bf16.msra.mxu0 0
    %2539 = vmatprep.subr.bf16.mxu0 0
    %2540 = vmatpush1.bf16.msra.mxu0 0
    %2541 = vmatprep.subr.bf16.mxu0 0
    %2542 = vmatpush1.bf16.msra.mxu0 0
    %2543 = vmatprep.mubr.bf16.mxu0 0
    %2544 = vmatmul.mubr.bf16.gmra.mrb[0].mxu0 %v2509
    %v2545 = vpop.f32.mrb[0].mxu0
    %v2546 = vadd.f32 %v709, %v2545
    %v2547 = vpop.f32.mrb[0].mxu0
    %v2548 = vpop.f32.mrb[0].mxu0
    %v2549 = vadd.f32 %v709, %v2548
    %v2550 = vpop.f32.mrb[0].mxu0
    %2551 = vdwg.mxu0
    %v2552 = vadd.f32 %v1919, %v2546
    %v2553 = vadd.f32 %v1920, %v2549
    %v2554 = vsel %vm103, %v2552, 0.0
    %2555 = vadd.xlane.f32.xlu0 %v2554
    %v2556 = vpop.xlane.xlu0 %2555
    %v2557 = vsel %vm103, %v2553, 0.0
    %2558 = vadd.xlane.f32.xlu0 %v2557
    %v2559 = vpop.xlane.xlu0 %2558
    %v2560 = vmul.f32 %v2556, %v774
    %v2561 = vmul.f32 %v2559, %v774
    %v2562 = vmul.f32 %v2552, %v2552
    %v2563 = vmul.f32 %v2553, %v2553
    %v2564 = vsel %vm103, %v2562, 0.0
    %2565 = vadd.xlane.f32.xlu0 %v2564
    %v2566 = vpop.xlane.xlu0 %2565
    %v2567 = vsel %vm103, %v2563, 0.0
    %2568 = vadd.xlane.f32.xlu0 %v2567
    %v2569 = vpop.xlane.xlu0 %2568
    %v2570 = vmul.f32 %v2566, %v774
    %v2571 = vmul.f32 %v2569, %v774
    %v2572 = vmul.f32 %v2560, %v2560
    %v2573 = vmul.f32 %v2561, %v2561
    %v2574 = vsub.f32 %v2570, %v2572
    %v2575 = vsub.f32 %v2571, %v2573
    %v2576 = vsub.f32 %v2552, %v2560
    %v2577 = vsub.f32 %v2553, %v2561
    %v2578 = vadd.f32 %v2574, 1e-05
    %v2579 = vadd.f32 %v2575, 1e-05
    %v2580 = vrsqrt.pop %v2578
    %v2581 = vrsqrt.pop %v2579
    %v2582 = vmul.f32 %v2576, %v2580
    %v2583 = vmul.f32 %v2577, %v2581
    %v2584 = vmul.f32 %v2582, %v802
    %v2585 = vmul.f32 %v2583, %v802
    %v2586 = vadd.f32 %v2584, %v808
    %v2587 = vadd.f32 %v2585, %v808
    %v2588 = vpack.c.bf16 %v2587, %v2586
    %v2590 = vsel %vm103, %v2588, 0
    %2592 = vmatprep.subr.bf16.mxu0 0
    %2593 = vmatpush1.bf16.msra.mxu0 %v826
    %2594 = vmatprep.subr.bf16.mxu0 0
    %2595 = vmatpush1.bf16.msra.mxu0 %v827
    %2596 = vmatprep.subr.bf16.mxu0 0
    %2597 = vmatpush1.bf16.msra.mxu0 0
    %2598 = vmatprep.subr.bf16.mxu0 0
    %2599 = vmatpush1.bf16.msra.mxu0 0
    %2600 = vmatprep.subr.bf16.mxu0 0
    %2601 = vmatpush1.bf16.msra.mxu0 0
    %2602 = vmatprep.subr.bf16.mxu0 0
    %2603 = vmatpush1.bf16.msra.mxu0 0
    %2604 = vmatprep.subr.bf16.mxu0 0
    %2605 = vmatpush1.bf16.msra.mxu0 0
    %2606 = vmatprep.subr.bf16.mxu0 0
    %2607 = vmatpush1.bf16.msra.mxu0 0
    %2608 = vmatprep.subr.bf16.mxu0 0
    %2609 = vmatpush1.bf16.msra.mxu0 0
    %2610 = vmatprep.subr.bf16.mxu0 0
    %2611 = vmatpush1.bf16.msra.mxu0 0
    %2612 = vmatprep.subr.bf16.mxu0 0
    %2613 = vmatpush1.bf16.msra.mxu0 0
    %2614 = vmatprep.subr.bf16.mxu0 0
    %2615 = vmatpush1.bf16.msra.mxu0 0
    %2616 = vmatprep.subr.bf16.mxu0 0
    %2617 = vmatpush1.bf16.msra.mxu0 0
    %2618 = vmatprep.subr.bf16.mxu0 0
    %2619 = vmatpush1.bf16.msra.mxu0 0
    %2620 = vmatprep.subr.bf16.mxu0 0
    %2621 = vmatpush1.bf16.msra.mxu0 0
    %2622 = vmatprep.subr.bf16.mxu0 0
    %2623 = vmatpush1.bf16.msra.mxu0 0
    %2624 = vmatprep.mubr.bf16.mxu0 0
    %2625 = vmatmul.mubr.bf16.gmra.mrb[0].mxu0 %v2590
    %v2626 = vpop.f32.mrb[0].mxu0
    %v2627 = vadd.f32 %v816, %v2626
    %v2628 = vpop.f32.mrb[0].mxu0
    %v2629 = vpop.f32.mrb[0].mxu0
    %v2630 = vadd.f32 %v816, %v2629
    %v2631 = vpop.f32.mrb[0].mxu0
    %2632 = vdwg.mxu0
    %v2633 = vmax.f32 %v2627, 0.0
    %v2634 = vmax.f32 %v2630, 0.0
    %v2635 = vpack.c.bf16 %v2634, %v2633
    %v2637 = vsel %vm905, %v2635, 0
    %2639 = vmatprep.subr.bf16.mxu0 0
    %2640 = vmatpush1.bf16.msra.mxu0 %v897
    %2641 = vmatprep.subr.bf16.mxu0 0
    %2642 = vmatpush1.bf16.msra.mxu0 %v898
    %2643 = vmatprep.subr.bf16.mxu0 0
    %2644 = vmatpush1.bf16.msra.mxu0 %v899
    %2645 = vmatprep.subr.bf16.mxu0 0
    %2646 = vmatpush1.bf16.msra.mxu0 %v900
    %2647 = vmatprep.subr.bf16.mxu0 0
    %2648 = vmatpush1.bf16.msra.mxu0 0
    %2649 = vmatprep.subr.bf16.mxu0 0
    %2650 = vmatpush1.bf16.msra.mxu0 0
    %2651 = vmatprep.subr.bf16.mxu0 0
    %2652 = vmatpush1.bf16.msra.mxu0 0
    %2653 = vmatprep.subr.bf16.mxu0 0
    %2654 = vmatpush1.bf16.msra.mxu0 0
    %2655 = vmatprep.subr.bf16.mxu0 0
    %2656 = vmatpush1.bf16.msra.mxu0 0
    %2657 = vmatprep.subr.bf16.mxu0 0
    %2658 = vmatpush1.bf16.msra.mxu0 0
    %2659 = vmatprep.subr.bf16.mxu0 0
    %2660 = vmatpush1.bf16.msra.mxu0 0
    %2661 = vmatprep.subr.bf16.mxu0 0
    %2662 = vmatpush1.bf16.msra.mxu0 0
    %2663 = vmatprep.subr.bf16.mxu0 0
    %2664 = vmatpush1.bf16.msra.mxu0 0
    %2665 = vmatprep.subr.bf16.mxu0 0
    %2666 = vmatpush1.bf16.msra.mxu0 0
    %2667 = vmatprep.subr.bf16.mxu0 0
    %2668 = vmatpush1.bf16.msra.mxu0 0
    %2669 = vmatprep.subr.bf16.mxu0 0
    %2670 = vmatpush1.bf16.msra.mxu0 0
    %2671 = vmatprep.mubr.bf16.mxu0 0
    %2672 = vmatmul.mubr.bf16.gmra.mrb[0].mxu0 %v2637
    %v2673 = vpop.f32.mrb[0].mxu0
    %v2674 = vadd.f32 %v880, %v2673
    %v2675 = vpop.f32.mrb[0].mxu0
    %v2676 = vpop.f32.mrb[0].mxu0
    %v2677 = vadd.f32 %v880, %v2676
    %v2678 = vpop.f32.mrb[0].mxu0
    %2679 = vdwg.mxu0
    %v2680 = vadd.f32 %v2586, %v2674
    %v2681 = vadd.f32 %v2587, %v2677
    %v2682 = vsel %vm103, %v2680, 0.0
    %2683 = vadd.xlane.f32.xlu0 %v2682
    %v2684 = vpop.xlane.xlu0 %2683
    %v2685 = vsel %vm103, %v2681, 0.0
    %2686 = vadd.xlane.f32.xlu0 %v2685
    %v2687 = vpop.xlane.xlu0 %2686
    %v2688 = vmul.f32 %v2684, %v774
    %v2689 = vmul.f32 %v2687, %v774
    %v2690 = vmul.f32 %v2680, %v2680
    %v2691 = vmul.f32 %v2681, %v2681
    %v2692 = vsel %vm103, %v2690, 0.0
    %2693 = vadd.xlane.f32.xlu0 %v2692
    %v2694 = vpop.xlane.xlu0 %2693
    %v2695 = vsel %vm103, %v2691, 0.0
    %2696 = vadd.xlane.f32.xlu0 %v2695
    %v2697 = vpop.xlane.xlu0 %2696
    %v2698 = vmul.f32 %v2694, %v774
    %v2699 = vmul.f32 %v2697, %v774
    %v2700 = vmul.f32 %v2688, %v2688
    %v2701 = vmul.f32 %v2689, %v2689
    %v2702 = vsub.f32 %v2698, %v2700
    %v2703 = vsub.f32 %v2699, %v2701
    %v2704 = vsub.f32 %v2680, %v2688
    %v2705 = vsub.f32 %v2681, %v2689
    %v2706 = vadd.f32 %v2702, 1e-05
    %v2707 = vadd.f32 %v2703, 1e-05
    %v2708 = vrsqrt.pop %v2706
    %v2709 = vrsqrt.pop %v2707
    %v2710 = vmul.f32 %v2704, %v2708
    %v2711 = vmul.f32 %v2705, %v2709
    %v2712 = vmul.f32 %v2710, %v985
    %v2713 = vmul.f32 %v2711, %v985
    %v2714 = vadd.f32 %v2712, %v991
    %v2715 = vadd.f32 %v2713, %v991
    %v2716 = vpack.c.bf16 %v2715, %v2714
    %v2718 = vsel %vm103, %v2716, 0
    %2720 = vmatprep.subr.bf16.mxu0 0
    %2721 = vmatpush1.bf16.msra.mxu0 %v1032
    %2722 = vmatprep.subr.bf16.mxu0 0
    %2723 = vmatpush1.bf16.msra.mxu0 %v1033
    %2724 = vmatprep.subr.bf16.mxu0 0
    %2725 = vmatpush1.bf16.msra.mxu0 0
    %2726 = vmatprep.subr.bf16.mxu0 0
    %2727 = vmatpush1.bf16.msra.mxu0 0
    %2728 = vmatprep.subr.bf16.mxu0 0
    %2729 = vmatpush1.bf16.msra.mxu0 0
    %2730 = vmatprep.subr.bf16.mxu0 0
    %2731 = vmatpush1.bf16.msra.mxu0 0
    %2732 = vmatprep.subr.bf16.mxu0 0
    %2733 = vmatpush1.bf16.msra.mxu0 0
    %2734 = vmatprep.subr.bf16.mxu0 0
    %2735 = vmatpush1.bf16.msra.mxu0 0
    %2736 = vmatprep.subr.bf16.mxu0 0
    %2737 = vmatpush1.bf16.msra.mxu0 0
    %2738 = vmatprep.subr.bf16.mxu0 0
    %2739 = vmatpush1.bf16.msra.mxu0 0
    %2740 = vmatprep.subr.bf16.mxu0 0
    %2741 = vmatpush1.bf16.msra.mxu0 0
    %2742 = vmatprep.subr.bf16.mxu0 0
    %2743 = vmatpush1.bf16.msra.mxu0 0
    %2744 = vmatprep.subr.bf16.mxu0 0
    %2745 = vmatpush1.bf16.msra.mxu0 0
    %2746 = vmatprep.subr.bf16.mxu0 0
    %2747 = vmatpush1.bf16.msra.mxu0 0
    %2748 = vmatprep.subr.bf16.mxu0 0
    %2749 = vmatpush1.bf16.msra.mxu0 0
    %2750 = vmatprep.subr.bf16.mxu0 0
    %2751 = vmatpush1.bf16.msra.mxu0 0
    %2752 = vmatprep.mubr.bf16.mxu0 0
    %2753 = vmatmul.mubr.bf16.gmra.mrb[0].mxu0 %v2718
    %v2754 = vpop.f32.mrb[0].mxu0
    %v2755 = vadd.f32 0.0, %v2754
    %v2756 = vpop.f32.mrb[0].mxu0
    %v2757 = vpop.f32.mrb[0].mxu0
    %v2758 = vadd.f32 0.0, %v2757
    %v2759 = vpop.f32.mrb[0].mxu0
    %2760 = vdwg.mxu0
    %v2761 = vadd.f32 %v2755, %v1083
    %v2762 = vadd.f32 %v2758, %v1083
    %v2763 = vmul.f32 %v2761, 0.35355338
    %v2764 = vmul.f32 %v2762, 0.35355338
    %v2765 = vpack.c.bf16 %v2764, %v2763
    %v2766 = vadd.f32 %v2755, %v1095
    %v2767 = vadd.f32 %v2758, %v1095
    %v2768 = vpack.c.bf16 %v2767, %v2766
    %v2769 = vadd.f32 %v2755, %v1106
    %v2770 = vadd.f32 %v2758, %v1106
    %v2771 = vpack.c.bf16 %v2770, %v2769
    %2773 = vrot.lane.b32.xlu0 %v2768, 96
    %v2774 = vpop.permute.xlu0 %2773
    %v2776 = vsel %vm182, %v2765, 0
    %v2779 = vsel %vm182, %v2774, 0
    %2781 = vmatprep.subr.bf16.mxu0 0
    %2782 = vmatpush1.bf16.xpose.msra.mxu0 %v2779
    %2783 = vmatprep.subr.bf16.mxu0 0
    %2784 = vmatpush1.bf16.xpose.msra.mxu0 0
    %2785 = vmatprep.subr.bf16.mxu0 0
    %2786 = vmatpush1.bf16.xpose.msra.mxu0 0
    %2787 = vmatprep.subr.bf16.mxu0 0
    %2788 = vmatpush1.bf16.xpose.msra.mxu0 0
    %2789 = vmatprep.subr.bf16.mxu0 0
    %2790 = vmatpush1.bf16.xpose.msra.mxu0 0
    %2791 = vmatprep.subr.bf16.mxu0 0
    %2792 = vmatpush1.bf16.xpose.msra.mxu0 0
    %2793 = vmatprep.subr.bf16.mxu0 0
    %2794 = vmatpush1.bf16.xpose.msra.mxu0 0
    %2795 = vmatprep.subr.bf16.mxu0 0
    %2796 = vmatpush1.bf16.xpose.msra.mxu0 0
    %2797 = vmatprep.subr.bf16.mxu0 0
    %2798 = vmatpush1.bf16.xpose.msra.mxu0 0
    %2799 = vmatprep.subr.bf16.mxu0 0
    %2800 = vmatpush1.bf16.xpose.msra.mxu0 0
    %2801 = vmatprep.subr.bf16.mxu0 0
    %2802 = vmatpush1.bf16.xpose.msra.mxu0 0
    %2803 = vmatprep.subr.bf16.mxu0 0
    %2804 = vmatpush1.bf16.xpose.msra.mxu0 0
    %2805 = vmatprep.subr.bf16.mxu0 0
    %2806 = vmatpush1.bf16.xpose.msra.mxu0 0
    %2807 = vmatprep.subr.bf16.mxu0 0
    %2808 = vmatpush1.bf16.xpose.msra.mxu0 0
    %2809 = vmatprep.subr.bf16.mxu0 0
    %2810 = vmatpush1.bf16.xpose.msra.mxu0 0
    %2811 = vmatprep.subr.bf16.mxu0 0
    %2812 = vmatpush1.bf16.xpose.msra.mxu0 0
    %2813 = vmatprep.mubr.bf16.mxu0 0
    %2814 = vmatmul.mubr.bf16.gmra.mrb[0].mxu0 %v2776
    %v2815 = vpop.f32.mrb[0].mxu0
    %v2816 = vadd.f32 %v1926, %v2815
    %v2817 = vpop.f32.mrb[0].mxu0
    %v2818 = vpop.f32.mrb[0].mxu0
    %v2819 = vadd.f32 %v1927, %v2818
    %v2820 = vpop.f32.mrb[0].mxu0
    %2821 = vdwg.mxu0
    %v2822 = vsel %vm230, %v2816, -inf
    %2823 = vmax.xlane.f32.xlu0 %v2822
    %v2824 = vpop.xlane.xlu0 %2823
    %v2825 = vsel %vm230, %v2819, -inf
    %2826 = vmax.xlane.f32.xlu0 %v2825
    %v2827 = vpop.xlane.xlu0 %2826
    %v2828 = vsub.f32 %v2816, %v2824
    %v2829 = vsub.f32 %v2819, %v2827
    %v2830 = vmul.f32 %v2828, 1.442695
    %v2831 = vpow.pop %v2830
    %v2832 = vmul.f32 %v2829, 1.442695
    %v2833 = vpow.pop %v2832
    %v2834 = vmul.f32 %v2831, %v1922
    %v2835 = vmul.f32 %v2833, %v1923
    %v2836 = vsel %vm230, %v2834, 0.0
    %2837 = vadd.xlane.f32.xlu0 %v2836
    %v2838 = vpop.xlane.xlu0 %2837
    %v2839 = vsel %vm230, %v2835, 0.0
    %2840 = vadd.xlane.f32.xlu0 %v2839
    %v2841 = vpop.xlane.xlu0 %2840
    %v2842 = vrcp.pop %v2838
    %v2843 = vrcp.pop %v2841
    %v2844 = vmul.f32 %v2834, %v2842
    %v2845 = vmul.f32 %v2835, %v2843
    %v2846 = vpack.c.bf16 %v2845, %v2844
    %2848 = vrot.lane.b32.xlu0 %v2771, 64
    %v2849 = vpop.permute.xlu0 %2848
    %v2852 = vsel %vm230, %v2846, 0
    %2854 = vmatprep.subr.bf16.mxu0 0
    %2855 = vmatpush1.bf16.msra.mxu0 %v2849
    %2856 = vmatprep.subr.bf16.mxu0 0
    %2857 = vmatpush1.bf16.msra.mxu0 0
    %2858 = vmatprep.subr.bf16.mxu0 0
    %2859 = vmatpush1.bf16.msra.mxu0 0
    %2860 = vmatprep.subr.bf16.mxu0 0
    %2861 = vmatpush1.bf16.msra.mxu0 0
    %2862 = vmatprep.subr.bf16.mxu0 0
    %2863 = vmatpush1.bf16.msra.mxu0 0
    %2864 = vmatprep.subr.bf16.mxu0 0
    %2865 = vmatpush1.bf16.msra.mxu0 0
    %2866 = vmatprep.subr.bf16.mxu0 0
    %2867 = vmatpush1.bf16.msra.mxu0 0
    %2868 = vmatprep.subr.bf16.mxu0 0
    %2869 = vmatpush1.bf16.msra.mxu0 0
    %2870 = vmatprep.subr.bf16.mxu0 0
    %2871 = vmatpush1.bf16.msra.mxu0 0
    %2872 = vmatprep.subr.bf16.mxu0 0
    %2873 = vmatpush1.bf16.msra.mxu0 0
    %2874 = vmatprep.subr.bf16.mxu0 0
    %2875 = vmatpush1.bf16.msra.mxu0 0
    %2876 = vmatprep.subr.bf16.mxu0 0
    %2877 = vmatpush1.bf16.msra.mxu0 0
    %2878 = vmatprep.subr.bf16.mxu0 0
    %2879 = vmatpush1.bf16.msra.mxu0 0
    %2880 = vmatprep.subr.bf16.mxu0 0
    %2881 = vmatpush1.bf16.msra.mxu0 0
    %2882 = vmatprep.subr.bf16.mxu0 0
    %2883 = vmatpush1.bf16.msra.mxu0 0
    %2884 = vmatprep.subr.bf16.mxu0 0
    %2885 = vmatpush1.bf16.msra.mxu0 0
    %2886 = vmatprep.mubr.bf16.mxu0 0
    %2887 = vmatmul.mubr.bf16.gmra.mrb[0].mxu0 %v2852
    %v2888 = vpop.f32.mrb[0].mxu0
    %v2889 = vadd.f32 0.0, %v2888
    %v2890 = vpop.f32.mrb[0].mxu0
    %v2891 = vpop.f32.mrb[0].mxu0
    %v2892 = vadd.f32 0.0, %v2891
    %v2893 = vpop.f32.mrb[0].mxu0
    %2894 = vdwg.mxu0
    %2896 = vrot.lane.b32.xlu0 %v2765, 120
    %v2897 = vpop.permute.xlu0 %2896
    %2898 = vrot.lane.b32.xlu0 %v2768, 88
    %v2899 = vpop.permute.xlu0 %2898
    %v2901 = vsel %vm182, %v2897, 0
    %v2904 = vsel %vm182, %v2899, 0
    %2906 = vmatprep.subr.bf16.mxu0 0
    %2907 = vmatpush1.bf16.xpose.msra.mxu0 %v2904
    %2908 = vmatprep.subr.bf16.mxu0 0
    %2909 = vmatpush1.bf16.xpose.msra.mxu0 0
    %2910 = vmatprep.subr.bf16.mxu0 0
    %2911 = vmatpush1.bf16.xpose.msra.mxu0 0
    %2912 = vmatprep.subr.bf16.mxu0 0
    %2913 = vmatpush1.bf16.xpose.msra.mxu0 0
    %2914 = vmatprep.subr.bf16.mxu0 0
    %2915 = vmatpush1.bf16.xpose.msra.mxu0 0
    %2916 = vmatprep.subr.bf16.mxu0 0
    %2917 = vmatpush1.bf16.xpose.msra.mxu0 0
    %2918 = vmatprep.subr.bf16.mxu0 0
    %2919 = vmatpush1.bf16.xpose.msra.mxu0 0
    %2920 = vmatprep.subr.bf16.mxu0 0
    %2921 = vmatpush1.bf16.xpose.msra.mxu0 0
    %2922 = vmatprep.subr.bf16.mxu0 0
    %2923 = vmatpush1.bf16.xpose.msra.mxu0 0
    %2924 = vmatprep.subr.bf16.mxu0 0
    %2925 = vmatpush1.bf16.xpose.msra.mxu0 0
    %2926 = vmatprep.subr.bf16.mxu0 0
    %2927 = vmatpush1.bf16.xpose.msra.mxu0 0
    %2928 = vmatprep.subr.bf16.mxu0 0
    %2929 = vmatpush1.bf16.xpose.msra.mxu0 0
    %2930 = vmatprep.subr.bf16.mxu0 0
    %2931 = vmatpush1.bf16.xpose.msra.mxu0 0
    %2932 = vmatprep.subr.bf16.mxu0 0
    %2933 = vmatpush1.bf16.xpose.msra.mxu0 0
    %2934 = vmatprep.subr.bf16.mxu0 0
    %2935 = vmatpush1.bf16.xpose.msra.mxu0 0
    %2936 = vmatprep.subr.bf16.mxu0 0
    %2937 = vmatpush1.bf16.xpose.msra.mxu0 0
    %2938 = vmatprep.mubr.bf16.mxu0 0
    %2939 = vmatmul.mubr.bf16.gmra.mrb[0].mxu0 %v2901
    %v2940 = vpop.f32.mrb[0].mxu0
    %v2941 = vadd.f32 %v1926, %v2940
    %v2942 = vpop.f32.mrb[0].mxu0
    %v2943 = vpop.f32.mrb[0].mxu0
    %v2944 = vadd.f32 %v1927, %v2943
    %v2945 = vpop.f32.mrb[0].mxu0
    %2946 = vdwg.mxu0
    %v2947 = vsel %vm230, %v2941, -inf
    %2948 = vmax.xlane.f32.xlu0 %v2947
    %v2949 = vpop.xlane.xlu0 %2948
    %v2950 = vsel %vm230, %v2944, -inf
    %2951 = vmax.xlane.f32.xlu0 %v2950
    %v2952 = vpop.xlane.xlu0 %2951
    %v2953 = vsub.f32 %v2941, %v2949
    %v2954 = vsub.f32 %v2944, %v2952
    %v2955 = vmul.f32 %v2953, 1.442695
    %v2956 = vpow.pop %v2955
    %v2957 = vmul.f32 %v2954, 1.442695
    %v2958 = vpow.pop %v2957
    %v2959 = vmul.f32 %v2956, %v1922
    %v2960 = vmul.f32 %v2958, %v1923
    %v2961 = vsel %vm230, %v2959, 0.0
    %2962 = vadd.xlane.f32.xlu0 %v2961
    %v2963 = vpop.xlane.xlu0 %2962
    %v2964 = vsel %vm230, %v2960, 0.0
    %2965 = vadd.xlane.f32.xlu0 %v2964
    %v2966 = vpop.xlane.xlu0 %2965
    %v2967 = vrcp.pop %v2963
    %v2968 = vrcp.pop %v2966
    %v2969 = vmul.f32 %v2959, %v2967
    %v2970 = vmul.f32 %v2960, %v2968
    %v2971 = vpack.c.bf16 %v2970, %v2969
    %2972 = vrot.lane.b32.xlu0 %v2771, 56
    %v2973 = vpop.permute.xlu0 %2972
    %v2976 = vsel %vm230, %v2971, 0
    %2978 = vmatprep.subr.bf16.mxu0 0
    %2979 = vmatpush1.bf16.msra.mxu0 %v2973
    %2980 = vmatprep.subr.bf16.mxu0 0
    %2981 = vmatpush1.bf16.msra.mxu0 0
    %2982 = vmatprep.subr.bf16.mxu0 0
    %2983 = vmatpush1.bf16.msra.mxu0 0
    %2984 = vmatprep.subr.bf16.mxu0 0
    %2985 = vmatpush1.bf16.msra.mxu0 0
    %2986 = vmatprep.subr.bf16.mxu0 0
    %2987 = vmatpush1.bf16.msra.mxu0 0
    %2988 = vmatprep.subr.bf16.mxu0 0
    %2989 = vmatpush1.bf16.msra.mxu0 0
    %2990 = vmatprep.subr.bf16.mxu0 0
    %2991 = vmatpush1.bf16.msra.mxu0 0
    %2992 = vmatprep.subr.bf16.mxu0 0
    %2993 = vmatpush1.bf16.msra.mxu0 0
    %2994 = vmatprep.subr.bf16.mxu0 0
    %2995 = vmatpush1.bf16.msra.mxu0 0
    %2996 = vmatprep.subr.bf16.mxu0 0
    %2997 = vmatpush1.bf16.msra.mxu0 0
    %2998 = vmatprep.subr.bf16.mxu0 0
    %2999 = vmatpush1.bf16.msra.mxu0 0
    %3000 = vmatprep.subr.bf16.mxu0 0
    %3001 = vmatpush1.bf16.msra.mxu0 0
    %3002 = vmatprep.subr.bf16.mxu0 0
    %3003 = vmatpush1.bf16.msra.mxu0 0
    %3004 = vmatprep.subr.bf16.mxu0 0
    %3005 = vmatpush1.bf16.msra.mxu0 0
    %3006 = vmatprep.subr.bf16.mxu0 0
    %3007 = vmatpush1.bf16.msra.mxu0 0
    %3008 = vmatprep.subr.bf16.mxu0 0
    %3009 = vmatpush1.bf16.msra.mxu0 0
    %3010 = vmatprep.mubr.bf16.mxu0 0
    %3011 = vmatmul.mubr.bf16.gmra.mrb[0].mxu0 %v2976
    %v3012 = vpop.f32.mrb[0].mxu0
    %v3013 = vadd.f32 0.0, %v3012
    %v3014 = vpop.f32.mrb[0].mxu0
    %v3015 = vpop.f32.mrb[0].mxu0
    %v3016 = vadd.f32 0.0, %v3015
    %v3017 = vpop.f32.mrb[0].mxu0
    %3018 = vdwg.mxu0
    %3019 = vrot.lane.b32.xlu0 %v2765, 112
    %v3020 = vpop.permute.xlu0 %3019
    %3021 = vrot.lane.b32.xlu0 %v2768, 80
    %v3022 = vpop.permute.xlu0 %3021
    %v3024 = vsel %vm182, %v3020, 0
    %v3027 = vsel %vm182, %v3022, 0
    %3029 = vmatprep.subr.bf16.mxu0 0
    %3030 = vmatpush1.bf16.xpose.msra.mxu0 %v3027
    %3031 = vmatprep.subr.bf16.mxu0 0
    %3032 = vmatpush1.bf16.xpose.msra.mxu0 0
    %3033 = vmatprep.subr.bf16.mxu0 0
    %3034 = vmatpush1.bf16.xpose.msra.mxu0 0
    %3035 = vmatprep.subr.bf16.mxu0 0
    %3036 = vmatpush1.bf16.xpose.msra.mxu0 0
    %3037 = vmatprep.subr.bf16.mxu0 0
    %3038 = vmatpush1.bf16.xpose.msra.mxu0 0
    %3039 = vmatprep.subr.bf16.mxu0 0
    %3040 = vmatpush1.bf16.xpose.msra.mxu0 0
    %3041 = vmatprep.subr.bf16.mxu0 0
    %3042 = vmatpush1.bf16.xpose.msra.mxu0 0
    %3043 = vmatprep.subr.bf16.mxu0 0
    %3044 = vmatpush1.bf16.xpose.msra.mxu0 0
    %3045 = vmatprep.subr.bf16.mxu0 0
    %3046 = vmatpush1.bf16.xpose.msra.mxu0 0
    %3047 = vmatprep.subr.bf16.mxu0 0
    %3048 = vmatpush1.bf16.xpose.msra.mxu0 0
    %3049 = vmatprep.subr.bf16.mxu0 0
    %3050 = vmatpush1.bf16.xpose.msra.mxu0 0
    %3051 = vmatprep.subr.bf16.mxu0 0
    %3052 = vmatpush1.bf16.xpose.msra.mxu0 0
    %3053 = vmatprep.subr.bf16.mxu0 0
    %3054 = vmatpush1.bf16.xpose.msra.mxu0 0
    %3055 = vmatprep.subr.bf16.mxu0 0
    %3056 = vmatpush1.bf16.xpose.msra.mxu0 0
    %3057 = vmatprep.subr.bf16.mxu0 0
    %3058 = vmatpush1.bf16.xpose.msra.mxu0 0
    %3059 = vmatprep.subr.bf16.mxu0 0
    %3060 = vmatpush1.bf16.xpose.msra.mxu0 0
    %3061 = vmatprep.mubr.bf16.mxu0 0
    %3062 = vmatmul.mubr.bf16.gmra.mrb[0].mxu0 %v3024
    %v3063 = vpop.f32.mrb[0].mxu0
    %v3064 = vadd.f32 %v1926, %v3063
    %v3065 = vpop.f32.mrb[0].mxu0
    %v3066 = vpop.f32.mrb[0].mxu0
    %v3067 = vadd.f32 %v1927, %v3066
    %v3068 = vpop.f32.mrb[0].mxu0
    %3069 = vdwg.mxu0
    %v3070 = vsel %vm230, %v3064, -inf
    %3071 = vmax.xlane.f32.xlu0 %v3070
    %v3072 = vpop.xlane.xlu0 %3071
    %v3073 = vsel %vm230, %v3067, -inf
    %3074 = vmax.xlane.f32.xlu0 %v3073
    %v3075 = vpop.xlane.xlu0 %3074
    %v3076 = vsub.f32 %v3064, %v3072
    %v3077 = vsub.f32 %v3067, %v3075
    %v3078 = vmul.f32 %v3076, 1.442695
    %v3079 = vpow.pop %v3078
    %v3080 = vmul.f32 %v3077, 1.442695
    %v3081 = vpow.pop %v3080
    %v3082 = vmul.f32 %v3079, %v1922
    %v3083 = vmul.f32 %v3081, %v1923
    %v3084 = vsel %vm230, %v3082, 0.0
    %3085 = vadd.xlane.f32.xlu0 %v3084
    %v3086 = vpop.xlane.xlu0 %3085
    %v3087 = vsel %vm230, %v3083, 0.0
    %3088 = vadd.xlane.f32.xlu0 %v3087
    %v3089 = vpop.xlane.xlu0 %3088
    %v3090 = vrcp.pop %v3086
    %v3091 = vrcp.pop %v3089
    %v3092 = vmul.f32 %v3082, %v3090
    %v3093 = vmul.f32 %v3083, %v3091
    %v3094 = vpack.c.bf16 %v3093, %v3092
    %3095 = vrot.lane.b32.xlu0 %v2771, 48
    %v3096 = vpop.permute.xlu0 %3095
    %v3099 = vsel %vm230, %v3094, 0
    %3101 = vmatprep.subr.bf16.mxu0 0
    %3102 = vmatpush1.bf16.msra.mxu0 %v3096
    %3103 = vmatprep.subr.bf16.mxu0 0
    %3104 = vmatpush1.bf16.msra.mxu0 0
    %3105 = vmatprep.subr.bf16.mxu0 0
    %3106 = vmatpush1.bf16.msra.mxu0 0
    %3107 = vmatprep.subr.bf16.mxu0 0
    %3108 = vmatpush1.bf16.msra.mxu0 0
    %3109 = vmatprep.subr.bf16.mxu0 0
    %3110 = vmatpush1.bf16.msra.mxu0 0
    %3111 = vmatprep.subr.bf16.mxu0 0
    %3112 = vmatpush1.bf16.msra.mxu0 0
    %3113 = vmatprep.subr.bf16.mxu0 0
    %3114 = vmatpush1.bf16.msra.mxu0 0
    %3115 = vmatprep.subr.bf16.mxu0 0
    %3116 = vmatpush1.bf16.msra.mxu0 0
    %3117 = vmatprep.subr.bf16.mxu0 0
    %3118 = vmatpush1.bf16.msra.mxu0 0
    %3119 = vmatprep.subr.bf16.mxu0 0
    %3120 = vmatpush1.bf16.msra.mxu0 0
    %3121 = vmatprep.subr.bf16.mxu0 0
    %3122 = vmatpush1.bf16.msra.mxu0 0
    %3123 = vmatprep.subr.bf16.mxu0 0
    %3124 = vmatpush1.bf16.msra.mxu0 0
    %3125 = vmatprep.subr.bf16.mxu0 0
    %3126 = vmatpush1.bf16.msra.mxu0 0
    %3127 = vmatprep.subr.bf16.mxu0 0
    %3128 = vmatpush1.bf16.msra.mxu0 0
    %3129 = vmatprep.subr.bf16.mxu0 0
    %3130 = vmatpush1.bf16.msra.mxu0 0
    %3131 = vmatprep.subr.bf16.mxu0 0
    %3132 = vmatpush1.bf16.msra.mxu0 0
    %3133 = vmatprep.mubr.bf16.mxu0 0
    %3134 = vmatmul.mubr.bf16.gmra.mrb[0].mxu0 %v3099
    %v3135 = vpop.f32.mrb[0].mxu0
    %v3136 = vadd.f32 0.0, %v3135
    %v3137 = vpop.f32.mrb[0].mxu0
    %v3138 = vpop.f32.mrb[0].mxu0
    %v3139 = vadd.f32 0.0, %v3138
    %v3140 = vpop.f32.mrb[0].mxu0
    %3141 = vdwg.mxu0
    %3142 = vrot.lane.b32.xlu0 %v2765, 104
    %v3143 = vpop.permute.xlu0 %3142
    %3144 = vrot.lane.b32.xlu0 %v2768, 72
    %v3145 = vpop.permute.xlu0 %3144
    %v3147 = vsel %vm182, %v3143, 0
    %v3150 = vsel %vm182, %v3145, 0
    %3152 = vmatprep.subr.bf16.mxu0 0
    %3153 = vmatpush1.bf16.xpose.msra.mxu0 %v3150
    %3154 = vmatprep.subr.bf16.mxu0 0
    %3155 = vmatpush1.bf16.xpose.msra.mxu0 0
    %3156 = vmatprep.subr.bf16.mxu0 0
    %3157 = vmatpush1.bf16.xpose.msra.mxu0 0
    %3158 = vmatprep.subr.bf16.mxu0 0
    %3159 = vmatpush1.bf16.xpose.msra.mxu0 0
    %3160 = vmatprep.subr.bf16.mxu0 0
    %3161 = vmatpush1.bf16.xpose.msra.mxu0 0
    %3162 = vmatprep.subr.bf16.mxu0 0
    %3163 = vmatpush1.bf16.xpose.msra.mxu0 0
    %3164 = vmatprep.subr.bf16.mxu0 0
    %3165 = vmatpush1.bf16.xpose.msra.mxu0 0
    %3166 = vmatprep.subr.bf16.mxu0 0
    %3167 = vmatpush1.bf16.xpose.msra.mxu0 0
    %3168 = vmatprep.subr.bf16.mxu0 0
    %3169 = vmatpush1.bf16.xpose.msra.mxu0 0
    %3170 = vmatprep.subr.bf16.mxu0 0
    %3171 = vmatpush1.bf16.xpose.msra.mxu0 0
    %3172 = vmatprep.subr.bf16.mxu0 0
    %3173 = vmatpush1.bf16.xpose.msra.mxu0 0
    %3174 = vmatprep.subr.bf16.mxu0 0
    %3175 = vmatpush1.bf16.xpose.msra.mxu0 0
    %3176 = vmatprep.subr.bf16.mxu0 0
    %3177 = vmatpush1.bf16.xpose.msra.mxu0 0
    %3178 = vmatprep.subr.bf16.mxu0 0
    %3179 = vmatpush1.bf16.xpose.msra.mxu0 0
    %3180 = vmatprep.subr.bf16.mxu0 0
    %3181 = vmatpush1.bf16.xpose.msra.mxu0 0
    %3182 = vmatprep.subr.bf16.mxu0 0
    %3183 = vmatpush1.bf16.xpose.msra.mxu0 0
    %3184 = vmatprep.mubr.bf16.mxu0 0
    %3185 = vmatmul.mubr.bf16.gmra.mrb[0].mxu0 %v3147
    %v3186 = vpop.f32.mrb[0].mxu0
    %v3187 = vadd.f32 %v1926, %v3186
    %v3188 = vpop.f32.mrb[0].mxu0
    %v3189 = vpop.f32.mrb[0].mxu0
    %v3190 = vadd.f32 %v1927, %v3189
    %v3191 = vpop.f32.mrb[0].mxu0
    %3192 = vdwg.mxu0
    %v3193 = vsel %vm230, %v3187, -inf
    %3194 = vmax.xlane.f32.xlu0 %v3193
    %v3195 = vpop.xlane.xlu0 %3194
    %v3196 = vsel %vm230, %v3190, -inf
    %3197 = vmax.xlane.f32.xlu0 %v3196
    %v3198 = vpop.xlane.xlu0 %3197
    %v3199 = vsub.f32 %v3187, %v3195
    %v3200 = vsub.f32 %v3190, %v3198
    %v3201 = vmul.f32 %v3199, 1.442695
    %v3202 = vpow.pop %v3201
    %v3203 = vmul.f32 %v3200, 1.442695
    %v3204 = vpow.pop %v3203
    %v3205 = vmul.f32 %v3202, %v1922
    %v3206 = vmul.f32 %v3204, %v1923
    %v3207 = vsel %vm230, %v3205, 0.0
    %3208 = vadd.xlane.f32.xlu0 %v3207
    %v3209 = vpop.xlane.xlu0 %3208
    %v3210 = vsel %vm230, %v3206, 0.0
    %3211 = vadd.xlane.f32.xlu0 %v3210
    %v3212 = vpop.xlane.xlu0 %3211
    %v3213 = vrcp.pop %v3209
    %v3214 = vrcp.pop %v3212
    %v3215 = vmul.f32 %v3205, %v3213
    %v3216 = vmul.f32 %v3206, %v3214
    %v3217 = vpack.c.bf16 %v3216, %v3215
    %3218 = vrot.lane.b32.xlu0 %v2771, 40
    %v3219 = vpop.permute.xlu0 %3218
    %v3222 = vsel %vm230, %v3217, 0
    %3224 = vmatprep.subr.bf16.mxu0 0
    %3225 = vmatpush1.bf16.msra.mxu0 %v3219
    %3226 = vmatprep.subr.bf16.mxu0 0
    %3227 = vmatpush1.bf16.msra.mxu0 0
    %3228 = vmatprep.subr.bf16.mxu0 0
    %3229 = vmatpush1.bf16.msra.mxu0 0
    %3230 = vmatprep.subr.bf16.mxu0 0
    %3231 = vmatpush1.bf16.msra.mxu0 0
    %3232 = vmatprep.subr.bf16.mxu0 0
    %3233 = vmatpush1.bf16.msra.mxu0 0
    %3234 = vmatprep.subr.bf16.mxu0 0
    %3235 = vmatpush1.bf16.msra.mxu0 0
    %3236 = vmatprep.subr.bf16.mxu0 0
    %3237 = vmatpush1.bf16.msra.mxu0 0
    %3238 = vmatprep.subr.bf16.mxu0 0
    %3239 = vmatpush1.bf16.msra.mxu0 0
    %3240 = vmatprep.subr.bf16.mxu0 0
    %3241 = vmatpush1.bf16.msra.mxu0 0
    %3242 = vmatprep.subr.bf16.mxu0 0
    %3243 = vmatpush1.bf16.msra.mxu0 0
    %3244 = vmatprep.subr.bf16.mxu0 0
    %3245 = vmatpush1.bf16.msra.mxu0 0
    %3246 = vmatprep.subr.bf16.mxu0 0
    %3247 = vmatpush1.bf16.msra.mxu0 0
    %3248 = vmatprep.subr.bf16.mxu0 0
    %3249 = vmatpush1.bf16.msra.mxu0 0
    %3250 = vmatprep.subr.bf16.mxu0 0
    %3251 = vmatpush1.bf16.msra.mxu0 0
    %3252 = vmatprep.subr.bf16.mxu0 0
    %3253 = vmatpush1.bf16.msra.mxu0 0
    %3254 = vmatprep.subr.bf16.mxu0 0
    %3255 = vmatpush1.bf16.msra.mxu0 0
    %3256 = vmatprep.mubr.bf16.mxu0 0
    %3257 = vmatmul.mubr.bf16.gmra.mrb[0].mxu0 %v3222
    %v3258 = vpop.f32.mrb[0].mxu0
    %v3259 = vadd.f32 0.0, %v3258
    %v3260 = vpop.f32.mrb[0].mxu0
    %v3261 = vpop.f32.mrb[0].mxu0
    %v3262 = vadd.f32 0.0, %v3261
    %v3263 = vpop.f32.mrb[0].mxu0
    %3264 = vdwg.mxu0
    %3267 = vrot.lane.b32.xlu0 %v3013, 8
    %v3268 = vpop.permute.xlu0 %3267
    %3269 = vrot.lane.b32.xlu0 %v3016, 8
    %v3270 = vpop.permute.xlu0 %3269
    %3275 = vrot.lane.b32.xlu0 %v3136, 16
    %v3276 = vpop.permute.xlu0 %3275
    %3277 = vrot.lane.b32.xlu0 %v3139, 16
    %v3278 = vpop.permute.xlu0 %3277
    %3283 = vrot.lane.b32.xlu0 %v3259, 24
    %v3284 = vpop.permute.xlu0 %3283
    %3285 = vrot.lane.b32.xlu0 %v3262, 24
    %v3286 = vpop.permute.xlu0 %3285
    %v3289 = vsel %vm182, %v2889, %v3268
    %v3290 = vsel %vm182, %v2892, %v3270
    %v3291 = vsel %vm230, %v3289, %v3276
    %v3292 = vsel %vm230, %v3290, %v3278
    %v3293 = vsel %vm702, %v3291, %v3284
    %v3294 = vsel %vm702, %v3292, %v3286
    %v3295 = vpack.c.bf16 %v3294, %v3293
    %v3297 = vsel %vm103, %v3295, 0
    %3299 = vmatprep.subr.bf16.mxu0 0
    %3300 = vmatpush1.bf16.msra.mxu0 %v1647
    %3301 = vmatprep.subr.bf16.mxu0 0
    %3302 = vmatpush1.bf16.msra.mxu0 %v1648
    %3303 = vmatprep.subr.bf16.mxu0 0
    %3304 = vmatpush1.bf16.msra.mxu0 0
    %3305 = vmatprep.subr.bf16.mxu0 0
    %3306 = vmatpush1.bf16.msra.mxu0 0
    %3307 = vmatprep.subr.bf16.mxu0 0
    %3308 = vmatpush1.bf16.msra.mxu0 0
    %3309 = vmatprep.subr.bf16.mxu0 0
    %3310 = vmatpush1.bf16.msra.mxu0 0
    %3311 = vmatprep.subr.bf16.mxu0 0
    %3312 = vmatpush1.bf16.msra.mxu0 0
    %3313 = vmatprep.subr.bf16.mxu0 0
    %3314 = vmatpush1.bf16.msra.mxu0 0
    %3315 = vmatprep.subr.bf16.mxu0 0
    %3316 = vmatpush1.bf16.msra.mxu0 0
    %3317 = vmatprep.subr.bf16.mxu0 0
    %3318 = vmatpush1.bf16.msra.mxu0 0
    %3319 = vmatprep.subr.bf16.mxu0 0
    %3320 = vmatpush1.bf16.msra.mxu0 0
    %3321 = vmatprep.subr.bf16.mxu0 0
    %3322 = vmatpush1.bf16.msra.mxu0 0
    %3323 = vmatprep.subr.bf16.mxu0 0
    %3324 = vmatpush1.bf16.msra.mxu0 0
    %3325 = vmatprep.subr.bf16.mxu0 0
    %3326 = vmatpush1.bf16.msra.mxu0 0
    %3327 = vmatprep.subr.bf16.mxu0 0
    %3328 = vmatpush1.bf16.msra.mxu0 0
    %3329 = vmatprep.subr.bf16.mxu0 0
    %3330 = vmatpush1.bf16.msra.mxu0 0
    %3331 = vmatprep.mubr.bf16.mxu0 0
    %3332 = vmatmul.mubr.bf16.gmra.mrb[0].mxu0 %v3297
    %v3333 = vpop.f32.mrb[0].mxu0
    %v3334 = vadd.f32 %v1638, %v3333
    %v3335 = vpop.f32.mrb[0].mxu0
    %v3336 = vpop.f32.mrb[0].mxu0
    %v3337 = vadd.f32 %v1638, %v3336
    %v3338 = vpop.f32.mrb[0].mxu0
    %3339 = vdwg.mxu0
    %v3340 = vadd.f32 %v2714, %v3334
    %v3341 = vadd.f32 %v2715, %v3337
    %v3342 = vsel %vm103, %v3340, 0.0
    %3343 = vadd.xlane.f32.xlu0 %v3342
    %v3344 = vpop.xlane.xlu0 %3343
    %v3345 = vsel %vm103, %v3341, 0.0
    %3346 = vadd.xlane.f32.xlu0 %v3345
    %v3347 = vpop.xlane.xlu0 %3346
    %v3348 = vmul.f32 %v3344, %v774
    %v3349 = vmul.f32 %v3347, %v774
    %v3350 = vmul.f32 %v3340, %v3340
    %v3351 = vmul.f32 %v3341, %v3341
    %v3352 = vsel %vm103, %v3350, 0.0
    %3353 = vadd.xlane.f32.xlu0 %v3352
    %v3354 = vpop.xlane.xlu0 %3353
    %v3355 = vsel %vm103, %v3351, 0.0
    %3356 = vadd.xlane.f32.xlu0 %v3355
    %v3357 = vpop.xlane.xlu0 %3356
    %v3358 = vmul.f32 %v3354, %v774
    %v3359 = vmul.f32 %v3357, %v774
    %v3360 = vmul.f32 %v3348, %v3348
    %v3361 = vmul.f32 %v3349, %v3349
    %v3362 = vsub.f32 %v3358, %v3360
    %v3363 = vsub.f32 %v3359, %v3361
    %v3364 = vsub.f32 %v3340, %v3348
    %v3365 = vsub.f32 %v3341, %v3349
    %v3366 = vadd.f32 %v3362, 1e-05
    %v3367 = vadd.f32 %v3363, 1e-05
    %v3368 = vrsqrt.pop %v3366
    %v3369 = vrsqrt.pop %v3367
    %v3370 = vmul.f32 %v3364, %v3368
    %v3371 = vmul.f32 %v3365, %v3369
    %v3372 = vmul.f32 %v3370, %v1730
    %v3373 = vmul.f32 %v3371, %v1730
    %v3374 = vadd.f32 %v3372, %v1736
    %v3375 = vadd.f32 %v3373, %v1736
    %v3376 = vpack.c.bf16 %v3375, %v3374
    %v3378 = vsel %vm103, %v3376, 0
    %3380 = vmatprep.subr.bf16.mxu0 0
    %3381 = vmatpush1.bf16.msra.mxu0 %v1754
    %3382 = vmatprep.subr.bf16.mxu0 0
    %3383 = vmatpush1.bf16.msra.mxu0 %v1755
    %3384 = vmatprep.subr.bf16.mxu0 0
    %3385 = vmatpush1.bf16.msra.mxu0 0
    %3386 = vmatprep.subr.bf16.mxu0 0
    %3387 = vmatpush1.bf16.msra.mxu0 0
    %3388 = vmatprep.subr.bf16.mxu0 0
    %3389 = vmatpush1.bf16.msra.mxu0 0
    %3390 = vmatprep.subr.bf16.mxu0 0
    %3391 = vmatpush1.bf16.msra.mxu0 0
    %3392 = vmatprep.subr.bf16.mxu0 0
    %3393 = vmatpush1.bf16.msra.mxu0 0
    %3394 = vmatprep.subr.bf16.mxu0 0
    %3395 = vmatpush1.bf16.msra.mxu0 0
    %3396 = vmatprep.subr.bf16.mxu0 0
    %3397 = vmatpush1.bf16.msra.mxu0 0
    %3398 = vmatprep.subr.bf16.mxu0 0
    %3399 = vmatpush1.bf16.msra.mxu0 0
    %3400 = vmatprep.subr.bf16.mxu0 0
    %3401 = vmatpush1.bf16.msra.mxu0 0
    %3402 = vmatprep.subr.bf16.mxu0 0
    %3403 = vmatpush1.bf16.msra.mxu0 0
    %3404 = vmatprep.subr.bf16.mxu0 0
    %3405 = vmatpush1.bf16.msra.mxu0 0
    %3406 = vmatprep.subr.bf16.mxu0 0
    %3407 = vmatpush1.bf16.msra.mxu0 0
    %3408 = vmatprep.subr.bf16.mxu0 0
    %3409 = vmatpush1.bf16.msra.mxu0 0
    %3410 = vmatprep.subr.bf16.mxu0 0
    %3411 = vmatpush1.bf16.msra.mxu0 0
    %3412 = vmatprep.mubr.bf16.mxu0 0
    %3413 = vmatmul.mubr.bf16.gmra.mrb[0].mxu0 %v3378
    %v3414 = vpop.f32.mrb[0].mxu0
    %v3415 = vadd.f32 %v1744, %v3414
    %v3416 = vpop.f32.mrb[0].mxu0
    %v3417 = vpop.f32.mrb[0].mxu0
    %v3418 = vadd.f32 %v1744, %v3417
    %v3419 = vpop.f32.mrb[0].mxu0
    %3420 = vdwg.mxu0
    %v3421 = vmax.f32 %v3415, 0.0
    %v3422 = vmax.f32 %v3418, 0.0
    %v3423 = vpack.c.bf16 %v3422, %v3421
    %v3425 = vsel %vm905, %v3423, 0
    %3427 = vmatprep.subr.bf16.mxu0 0
    %3428 = vmatpush1.bf16.msra.mxu0 %v1825
    %3429 = vmatprep.subr.bf16.mxu0 0
    %3430 = vmatpush1.bf16.msra.mxu0 %v1826
    %3431 = vmatprep.subr.bf16.mxu0 0
    %3432 = vmatpush1.bf16.msra.mxu0 %v1827
    %3433 = vmatprep.subr.bf16.mxu0 0
    %3434 = vmatpush1.bf16.msra.mxu0 %v1828
    %3435 = vmatprep.subr.bf16.mxu0 0
    %3436 = vmatpush1.bf16.msra.mxu0 0
    %3437 = vmatprep.subr.bf16.mxu0 0
    %3438 = vmatpush1.bf16.msra.mxu0 0
    %3439 = vmatprep.subr.bf16.mxu0 0
    %3440 = vmatpush1.bf16.msra.mxu0 0
    %3441 = vmatprep.subr.bf16.mxu0 0
    %3442 = vmatpush1.bf16.msra.mxu0 0
    %3443 = vmatprep.subr.bf16.mxu0 0
    %3444 = vmatpush1.bf16.msra.mxu0 0
    %3445 = vmatprep.subr.bf16.mxu0 0
    %3446 = vmatpush1.bf16.msra.mxu0 0
    %3447 = vmatprep.subr.bf16.mxu0 0
    %3448 = vmatpush1.bf16.msra.mxu0 0
    %3449 = vmatprep.subr.bf16.mxu0 0
    %3450 = vmatpush1.bf16.msra.mxu0 0
    %3451 = vmatprep.subr.bf16.mxu0 0
    %3452 = vmatpush1.bf16.msra.mxu0 0
    %3453 = vmatprep.subr.bf16.mxu0 0
    %3454 = vmatpush1.bf16.msra.mxu0 0
    %3455 = vmatprep.subr.bf16.mxu0 0
    %3456 = vmatpush1.bf16.msra.mxu0 0
    %3457 = vmatprep.subr.bf16.mxu0 0
    %3458 = vmatpush1.bf16.msra.mxu0 0
    %3459 = vmatprep.mubr.bf16.mxu0 0
    %3460 = vmatmul.mubr.bf16.gmra.mrb[0].mxu0 %v3425
    %v3461 = vpop.f32.mrb[0].mxu0
    %v3462 = vadd.f32 %v1808, %v3461
    %v3463 = vpop.f32.mrb[0].mxu0
    %v3464 = vpop.f32.mrb[0].mxu0
    %v3465 = vadd.f32 %v1808, %v3464
    %v3466 = vpop.f32.mrb[0].mxu0
    %3467 = vdwg.mxu0
    %v3468 = vadd.f32 %v3374, %v3462
    %v3469 = vadd.f32 %v3375, %v3465
    %v3470 = vsel %vm103, %v3468, 0.0
    %3471 = vadd.xlane.f32.xlu0 %v3470
    %v3472 = vpop.xlane.xlu0 %3471
    %v3473 = vsel %vm103, %v3469, 0.0
    %3474 = vadd.xlane.f32.xlu0 %v3473
    %v3475 = vpop.xlane.xlu0 %3474
    %v3476 = vmul.f32 %v3472, %v774
    %v3477 = vmul.f32 %v3475, %v774
    %v3478 = vmul.f32 %v3468, %v3468
    %v3479 = vmul.f32 %v3469, %v3469
    %v3480 = vsel %vm103, %v3478, 0.0
    %3481 = vadd.xlane.f32.xlu0 %v3480
    %v3482 = vpop.xlane.xlu0 %3481
    %v3483 = vsel %vm103, %v3479, 0.0
    %3484 = vadd.xlane.f32.xlu0 %v3483
    %v3485 = vpop.xlane.xlu0 %3484
    %v3486 = vmul.f32 %v3482, %v774
    %v3487 = vmul.f32 %v3485, %v774
    %v3488 = vmul.f32 %v3476, %v3476
    %v3489 = vmul.f32 %v3477, %v3477
    %v3490 = vsub.f32 %v3486, %v3488
    %v3491 = vsub.f32 %v3487, %v3489
    %v3492 = vsub.f32 %v3468, %v3476
    %v3493 = vsub.f32 %v3469, %v3477
    %v3494 = vadd.f32 %v3490, 1e-05
    %v3495 = vadd.f32 %v3491, 1e-05
    %v3496 = vrsqrt.pop %v3494
    %v3497 = vrsqrt.pop %v3495
    %v3498 = vmul.f32 %v3492, %v3496
    %v3499 = vmul.f32 %v3493, %v3497
    %v3500 = vmul.f32 %v3498, %v1912
    %v3501 = vmul.f32 %v3499, %v1912
    %v3502 = vadd.f32 %v3500, %v1918
    %v3503 = vadd.f32 %v3501, %v1918
    %3504 = vst.msk [vmem:[#allocation7] sm:$0xff] %vm103, %v3502
    %3505 = vst.msk [vmem:[#allocation7 + $0x8] sm:$0xff] %vm103, %v3503
    // Predicated region
    $region42: #{common_transformer_forward.1} parent=1 // pred_check
      _
    $region43: #{common_transformer_forward.1} parent=1 // pred_check_branch
      %3507 = sbr.rel (0) target = $region45
    $region44: #{common_transformer_forward.1} parent=1 // pred_region
      %s3509 = ssub.s32 256, 256
      %3510 = vsyncadd [#allocation4], %s3509
      %s3511 = sshll.u32 [#allocation7], 4
      %s3512 = int_to_ptr.vmem [resolvable:$true] %s3511
      %3517 = dma.vmem_to_hbm [thread:$0]  %s3512, 256, %s8, [#allocation4], 128, 128, 8
    $region45: #{common_transformer_forward.1} parent=1 // pred_fallthru
      _
    // Predicated region
    $region46: #{common_transformer_forward.1} parent=1 // pred_check
      _
    $region47: #{common_transformer_forward.1} parent=1 // pred_check_branch
      %3519 = sbr.rel (0) target = $region49
    $region48: #{common_transformer_forward.1} parent=1 // pred_region
      %3520 = dma.done [#allocation4], 256
    $region49: #{common_transformer_forward.1} parent=1 // pred_fallthru
      _
    %3521 = vsyncpa [#allocation3], 1
    %3522 = vsyncpa [#allocation6], 1
    %3523 = vsyncpa [#allocation4], 1

</llo_original>
